<compile_context>
chip_gen: v5e
topology: v5e:2x2
jax: 0.10.0
libtpu: 0.0.40
codegen_flags: <defaults>
</compile_context>

<pallas_src>
import jax
import jax.numpy as jnp
from jax.experimental import pallas as pl
from jax.experimental.pallas import tpu as pltpu

# --- configuration mirroring EncDec(input_size=4, hidden_size=32,
#     middle_dim=16, number_of_layers=2, dropout_value=0.0) ------------------
INPUT_SIZE = 4            # forced to 4 by `.view(1, -1, 4)` in the reference
HIDDEN = 32
NUM_LAYERS = 2
MIDDLE_DIM = 16           # lin_in1 is created but never used in forward()
TARGET_LENGTH = 8         # the global `target_length` in the reference code
BATCH = 2

# 1 on single-TC v5e/v6e (whole batch in one pass); 2 on v7x to split the
# batch across the two TensorCores via the "parallel" grid axis.
NUM_BATCH_BLOCKS = 1


# ---------------------------------------------------------------------------
# Pallas kernel. Gate order is PyTorch's [i, f, g, o]; all weights arrive
# transposed ((in_dim, 4H) / (H, 4H)) with the g-columns pre-scaled by 2.
#   x_ref     : (T*bb, 4)   time-major within the batch block
#   ew_ih0    : (4, 4H)     encoder layer-0 input weight
#   ew_hh0/ew_ih1/ew_hh1 : (H, 4H)
#   eb        : (2, 4H)     [eb0, eb1]  (b_ih + b_hh, g-scaled)
#   dw_ih0    : (4, 4H)     decoder layer-0 input weight (seed step only)
#   dw_h1     : (H, 4H)     lin_out folded into decoder layer-0 (lw @ W_ih0)
#   dw_hh0/dw_ih1/dw_hh1 : (H, 4H)
#   db        : (3, 4H)     [db0_seed, db0_folded(+lb@W_ih0), db1]
#   lw        : (H, 4) ; lb : (1, 4)
# ---------------------------------------------------------------------------
def encdec_kernel(x_ref, ew_ih0_ref, ew_hh0_ref, ew_ih1_ref, ew_hh1_ref,
                  eb_ref, dw_ih0_ref, dw_h1_ref, dw_hh0_ref, dw_ih1_ref,
                  dw_hh1_ref, db_ref, lw_ref, lb_ref, out_ref):
    H = HIDDEN
    T = TARGET_LENGTH
    x_tm = x_ref[...]                                # (T*bb, 4)
    bb = x_tm.shape[0] // T

    ew_hh0 = ew_hh0_ref[...]
    ew_ih1 = ew_ih1_ref[...]
    ew_hh1 = ew_hh1_ref[...]
    dw_h1 = dw_h1_ref[...]
    dw_hh0 = dw_hh0_ref[...]
    dw_ih1 = dw_ih1_ref[...]
    dw_hh1 = dw_hh1_ref[...]
    lw = lw_ref[...]                                 # (H, 4)

    # Hoisted bias broadcasts — emitted once, not once per chained cell.
    eb1_b = jnp.broadcast_to(eb_ref[1:2, :], (bb, 4 * H))
    db0f_b = jnp.broadcast_to(db_ref[1:2, :], (bb, 4 * H))
    db1_b = jnp.broadcast_to(db_ref[2:3, :], (bb, 4 * H))
    lb_b = jnp.broadcast_to(lb_ref[...], (bb, INPUT_SIZE))

    def gates_to_hc(gates, c):
        # Single lane-dense sigmoid over all 4H gate lanes; the g-gate columns
        # were pre-scaled by 2 in the wrapper, so tanh(g) = 2*sigmoid(2g) - 1.
        sg = jax.nn.sigmoid(gates)
        i = sg[:, 0 * H:1 * H]
        f = sg[:, 1 * H:2 * H]
        g = 2.0 * sg[:, 2 * H:3 * H] - 1.0
        o = sg[:, 3 * H:4 * H]
        c_new = f * c + i * g
        h_new = o * jnp.tanh(c_new)
        return h_new, c_new

    # Encoder layer-0 input projections for ALL timesteps: ONE MXU matmul,
    # off the recurrent critical path (layer-0 bias folded in).
    xproj = jnp.dot(x_tm, ew_ih0_ref[...],
                    preferred_element_type=jnp.float32) + eb_ref[0:1, :]
    xp = [xproj[t * bb:(t + 1) * bb, :] for t in range(T)]     # (bb, 4H) each

    # Decoder seed projection (x[:, 0, :] through W_ih0_dec + its bias),
    # also independent of the recurrence.
    seed_proj = jnp.dot(x_tm[0:bb, :], dw_ih0_ref[...],
                        preferred_element_type=jnp.float32) + db_ref[0:1, :]

    zeros = jnp.zeros((bb, H), jnp.float32)
    h0, c0, h1, c1 = zeros, zeros, zeros, zeros      # self.hidden = init_hidden()

    # ---- encoder: out, hidden = encoder(cur_inp[0:target_length], hidden) ----
    for t in range(T):
        g0 = xp[t] + jnp.dot(h0, ew_hh0, preferred_element_type=jnp.float32)
        h0, c0 = gates_to_hc(g0, c0)
        g1 = (jnp.dot(h0, ew_ih1, preferred_element_type=jnp.float32)
              + jnp.dot(h1, ew_hh1, preferred_element_type=jnp.float32)
              + eb1_b)
        h1, c1 = gates_to_hc(g1, c1)

    # ---- decoder: autoregressive; lin_out folded into layer-0 weights ----
    outs = []
    for step in range(T):
        if step == 0:
            g0 = seed_proj + jnp.dot(h0, dw_hh0,
                                     preferred_element_type=jnp.float32)
        else:
            g0 = (jnp.dot(h1, dw_h1, preferred_element_type=jnp.float32)
                  + jnp.dot(h0, dw_hh0, preferred_element_type=jnp.float32)
                  + db0f_b)
        h0, c0 = gates_to_hc(g0, c0)
        g1 = (jnp.dot(h0, dw_ih1, preferred_element_type=jnp.float32)
              + jnp.dot(h1, dw_hh1, preferred_element_type=jnp.float32)
              + db1_b)
        h1, c1 = gates_to_hc(g1, c1)
        # Output projection feeds only the store, NOT the recurrence.
        outs.append(jnp.dot(h1, lw, preferred_element_type=jnp.float32) + lb_b)

    # Single lane-dense store of all T*4 = 32 output lanes at once.
    out_ref[...] = jnp.concatenate(outs, axis=1)     # (bb, T*4)


def _const_spec(arr):
    n = arr.ndim
    return pl.BlockSpec(arr.shape, lambda i, _n=n: (0,) * _n)


def encdec_forward(x, packed):
    B, T, F = x.shape
    assert T == TARGET_LENGTH and F == INPUT_SIZE
    assert B % NUM_BATCH_BLOCKS == 0
    nb = NUM_BATCH_BLOCKS
    bb = B // nb

    # Time-major-within-block layout (pure wrapper-side layout plumbing) so
    # per-step rows and the decoder seed are contiguous static sublane slices.
    x_tm = x.reshape(nb, bb, T, F).transpose(0, 2, 1, 3).reshape(nb * T * bb, F)

    weights = (packed["ew_ih0"], packed["ew_hh0"], packed["ew_ih1"],
               packed["ew_hh1"], packed["eb"], packed["dw_ih0"],
               packed["dw_h1"], packed["dw_hh0"], packed["dw_ih1"],
               packed["dw_hh1"], packed["db"], packed["lw"], packed["lb"])

    out_flat = pl.pallas_call(
        encdec_kernel,
        out_shape=jax.ShapeDtypeStruct((B, T * F), jnp.float32),
        grid=(nb,),
        in_specs=[pl.BlockSpec((T * bb, F), lambda i: (i, 0))]
                 + [_const_spec(w) for w in weights],
        out_specs=pl.BlockSpec((bb, T * F), lambda i: (i, 0)),
        compiler_params=pltpu.CompilerParams(
            dimension_semantics=("parallel",)),
    )(x_tm, *weights)
    return out_flat.reshape(B, T, F)


# ---------------------------------------------------------------------------
# Parameter construction (deterministic, PyTorch-style uniform init) + packing
# ---------------------------------------------------------------------------
def init_params(key):
    scale = 1.0 / jnp.sqrt(HIDDEN)
    u = lambda k, s: jax.random.uniform(k, s, jnp.float32, -scale, scale)

    def lstm_params(key):
        layers = []
        for l in range(NUM_LAYERS):
            in_dim = INPUT_SIZE if l == 0 else HIDDEN
            key, k1, k2, k3, k4 = jax.random.split(key, 5)
            layers.append((u(k1, (4 * HIDDEN, in_dim)),   # W_ih
                           u(k2, (4 * HIDDEN, HIDDEN)),   # W_hh
                           u(k3, (4 * HIDDEN,)),          # b_ih
                           u(k4, (4 * HIDDEN,))))         # b_hh
        return layers, key

    enc, key = lstm_params(key)
    dec, key = lstm_params(key)
    key, k1, k2 = jax.random.split(key, 3)
    lin_w = u(k1, (INPUT_SIZE, HIDDEN))       # lin_out.weight
    lin_b = u(k2, (INPUT_SIZE,))              # lin_out.bias
    # lin_in1 (INPUT_SIZE -> MIDDLE_DIM) exists in __init__ but is unused in forward().
    return {"enc": enc, "dec": dec, "lin_w": lin_w, "lin_b": lin_b}


def pack_params(params):
    H = HIDDEN
    # Pre-scale the tanh ("g") gate columns/bias entries by 2 so the kernel
    # computes tanh(g) = 2*sigmoid(2g) - 1 with a single sigmoid pass.
    gscale = jnp.ones((4 * H,), jnp.float32).at[2 * H:3 * H].set(2.0)

    def prep(layer):
        w_ih, w_hh, b_ih, b_hh = layer
        return (w_ih.T * gscale, w_hh.T * gscale, (b_ih + b_hh) * gscale)

    ew_ih0, ew_hh0, eb0 = prep(params["enc"][0])
    ew_ih1, ew_hh1, eb1 = prep(params["enc"][1])
    dw_ih0, dw_hh0, db0 = prep(params["dec"][0])
    dw_ih1, dw_hh1, db1 = prep(params["dec"][1])

    lw = params["lin_w"].T                            # (H, 4)
    lb = params["lin_b"].reshape(1, INPUT_SIZE)       # (1, 4)

    # Fold lin_out into the decoder layer-0 input projection so the
    # autoregressive steps feed gates directly from h1.
    dw_h1 = lw @ dw_ih0                               # (H, 4H)
    db0_folded = db0 + (lb @ dw_ih0)[0]               # (4H,)

    return dict(
        ew_ih0=ew_ih0, ew_hh0=ew_hh0, ew_ih1=ew_ih1, ew_hh1=ew_hh1,
        eb=jnp.stack([eb0, eb1]),                     # (2, 4H)
        dw_ih0=dw_ih0, dw_h1=dw_h1, dw_hh0=dw_hh0,
        dw_ih1=dw_ih1, dw_hh1=dw_hh1,
        db=jnp.stack([db0, db0_folded, db1]),         # (3, 4H)
        lw=lw, lb=lb)


# ---------------------------------------------------------------------------
# Pure-JAX reference (mirrors the PyTorch forward pass exactly, raw params)
# ---------------------------------------------------------------------------
def _lstm_cell_ref(x, h, c, w_ih, w_hh, b_ih, b_hh):
    gates = x @ w_ih.T + b_ih + h @ w_hh.T + b_hh
    i, f, g, o = jnp.split(gates, 4, axis=-1)
    c_new = jax.nn.sigmoid(f) * c + jax.nn.sigmoid(i) * jnp.tanh(g)
    h_new = jax.nn.sigmoid(o) * jnp.tanh(c_new)
    return h_new, c_new


def encdec_ref(x, params):
    res = []
    for b in range(x.shape[0]):
        seq = x[b]                                    # (T, 4)
        h = [jnp.zeros((1, HIDDEN), jnp.float32) for _ in range(NUM_LAYERS)]
        c = [jnp.zeros((1, HIDDEN), jnp.float32) for _ in range(NUM_LAYERS)]
        for t in range(TARGET_LENGTH):                # encoder
            inp = seq[t:t + 1]
            for l in range(NUM_LAYERS):
                h[l], c[l] = _lstm_cell_ref(inp, h[l], c[l], *params["enc"][l])
                inp = h[l]
        dec_in = seq[0:1]                             # decoder seed
        fake = []
        for _ in range(TARGET_LENGTH):
            inp = dec_in
            for l in range(NUM_LAYERS):
                h[l], c[l] = _lstm_cell_ref(inp, h[l], c[l], *params["dec"][l])
                inp = h[l]
            dec_in = inp @ params["lin_w"].T + params["lin_b"]
            fake.append(dec_in)
        res.append(jnp.concatenate(fake, axis=0)[None])
    return jnp.concatenate(res, axis=0)


if __name__ == "__main__":
    key = jax.random.PRNGKey(0)
    key, xkey = jax.random.split(key)
    x = jax.random.normal(xkey, (BATCH, TARGET_LENGTH, INPUT_SIZE), jnp.float32)

    params = init_params(key)
    packed = pack_params(params)

    out = encdec_forward(x, packed)
    out = jax.block_until_ready(out)

    ref = jax.block_until_ready(encdec_ref(x, params))
    assert out.shape == (BATCH, TARGET_LENGTH, INPUT_SIZE)
    max_err = jnp.max(jnp.abs(out - ref))
    assert jnp.allclose(out, ref, atol=1e-3, rtol=1e-3), f"max abs err {max_err}"

    print("KERNEL_OK")
</pallas_src>

<mosaic_0001>
module attributes {stable_mosaic.version = 11 : i64} {
  func.func @encdec_kernel(%arg0: i32, %arg1: memref<16x4xf32, #tpu.memory_space<vmem>>, %arg2: memref<4x128xf32, #tpu.memory_space<vmem>>, %arg3: memref<32x128xf32, #tpu.memory_space<vmem>>, %arg4: memref<32x128xf32, #tpu.memory_space<vmem>>, %arg5: memref<32x128xf32, #tpu.memory_space<vmem>>, %arg6: memref<2x128xf32, #tpu.memory_space<vmem>>, %arg7: memref<4x128xf32, #tpu.memory_space<vmem>>, %arg8: memref<32x128xf32, #tpu.memory_space<vmem>>, %arg9: memref<32x128xf32, #tpu.memory_space<vmem>>, %arg10: memref<32x128xf32, #tpu.memory_space<vmem>>, %arg11: memref<32x128xf32, #tpu.memory_space<vmem>>, %arg12: memref<3x128xf32, #tpu.memory_space<vmem>>, %arg13: memref<32x4xf32, #tpu.memory_space<vmem>>, %arg14: memref<1x4xf32, #tpu.memory_space<vmem>>, %arg15: memref<2x32xf32, #tpu.memory_space<vmem>>) attributes {dimension_semantics = [#tpu.dimension_semantics<parallel>], iteration_bounds = array<i64: 1>, scalar_prefetch = 0 : i64, scratch_operands = 0 : i64, tpu.core_type = #tpu.core_type<tc>, window_params = [{transform_indices = @transform_0, window_bounds = array<i64: 16, 4>}, {pipeline_mode = #tpu.pipeline_mode<synchronous>, transform_indices = @transform_1, window_bounds = array<i64: 4, 128>}, {pipeline_mode = #tpu.pipeline_mode<synchronous>, transform_indices = @transform_2, window_bounds = array<i64: 32, 128>}, {pipeline_mode = #tpu.pipeline_mode<synchronous>, transform_indices = @transform_3, window_bounds = array<i64: 32, 128>}, {pipeline_mode = #tpu.pipeline_mode<synchronous>, transform_indices = @transform_4, window_bounds = array<i64: 32, 128>}, {pipeline_mode = #tpu.pipeline_mode<synchronous>, transform_indices = @transform_5, window_bounds = array<i64: 2, 128>}, {pipeline_mode = #tpu.pipeline_mode<synchronous>, transform_indices = @transform_6, window_bounds = array<i64: 4, 128>}, {pipeline_mode = #tpu.pipeline_mode<synchronous>, transform_indices = @transform_7, window_bounds = array<i64: 32, 128>}, {pipeline_mode = #tpu.pipeline_mode<synchronous>, transform_indices = @transform_8, window_bounds = array<i64: 32, 128>}, {pipeline_mode = #tpu.pipeline_mode<synchronous>, transform_indices = @transform_9, window_bounds = array<i64: 32, 128>}, {pipeline_mode = #tpu.pipeline_mode<synchronous>, transform_indices = @transform_10, window_bounds = array<i64: 32, 128>}, {pipeline_mode = #tpu.pipeline_mode<synchronous>, transform_indices = @transform_11, window_bounds = array<i64: 3, 128>}, {pipeline_mode = #tpu.pipeline_mode<synchronous>, transform_indices = @transform_12, window_bounds = array<i64: 32, 4>}, {pipeline_mode = #tpu.pipeline_mode<synchronous>, transform_indices = @transform_13, window_bounds = array<i64: 1, 4>}, {transform_indices = @transform_14, window_bounds = array<i64: 2, 32>}]} {
    %c0 = arith.constant 0 : index
    %c0_0 = arith.constant 0 : index
    %0 = vector.load %arg1[%c0, %c0_0] : memref<16x4xf32, #tpu.memory_space<vmem>>, vector<16x4xf32>
    %c0_1 = arith.constant 0 : index
    %c0_2 = arith.constant 0 : index
    %1 = vector.load %arg3[%c0_1, %c0_2] : memref<32x128xf32, #tpu.memory_space<vmem>>, vector<32x128xf32>
    %c0_3 = arith.constant 0 : index
    %c0_4 = arith.constant 0 : index
    %2 = vector.load %arg4[%c0_3, %c0_4] : memref<32x128xf32, #tpu.memory_space<vmem>>, vector<32x128xf32>
    %c0_5 = arith.constant 0 : index
    %c0_6 = arith.constant 0 : index
    %3 = vector.load %arg5[%c0_5, %c0_6] : memref<32x128xf32, #tpu.memory_space<vmem>>, vector<32x128xf32>
    %c0_7 = arith.constant 0 : index
    %c0_8 = arith.constant 0 : index
    %4 = vector.load %arg8[%c0_7, %c0_8] : memref<32x128xf32, #tpu.memory_space<vmem>>, vector<32x128xf32>
    %c0_9 = arith.constant 0 : index
    %c0_10 = arith.constant 0 : index
    %5 = vector.load %arg9[%c0_9, %c0_10] : memref<32x128xf32, #tpu.memory_space<vmem>>, vector<32x128xf32>
    %c0_11 = arith.constant 0 : index
    %c0_12 = arith.constant 0 : index
    %6 = vector.load %arg10[%c0_11, %c0_12] : memref<32x128xf32, #tpu.memory_space<vmem>>, vector<32x128xf32>
    %c0_13 = arith.constant 0 : index
    %c0_14 = arith.constant 0 : index
    %7 = vector.load %arg11[%c0_13, %c0_14] : memref<32x128xf32, #tpu.memory_space<vmem>>, vector<32x128xf32>
    %c0_15 = arith.constant 0 : index
    %c0_16 = arith.constant 0 : index
    %8 = vector.load %arg13[%c0_15, %c0_16] : memref<32x4xf32, #tpu.memory_space<vmem>>, vector<32x4xf32>
    %c1 = arith.constant 1 : index
    %c0_17 = arith.constant 0 : index
    %9 = vector.load %arg6[%c1, %c0_17] : memref<2x128xf32, #tpu.memory_space<vmem>>, vector<1x128xf32>
    %10 = vector.shape_cast %9 : vector<1x128xf32> to vector<1x128xf32>
    %11 = vector.broadcast %10 : vector<1x128xf32> to vector<2x128xf32>
    %c1_18 = arith.constant 1 : index
    %c0_19 = arith.constant 0 : index
    %12 = vector.load %arg12[%c1_18, %c0_19] : memref<3x128xf32, #tpu.memory_space<vmem>>, vector<1x128xf32>
    %13 = vector.shape_cast %12 : vector<1x128xf32> to vector<1x128xf32>
    %14 = vector.broadcast %13 : vector<1x128xf32> to vector<2x128xf32>
    %c2 = arith.constant 2 : index
    %c0_20 = arith.constant 0 : index
    %15 = vector.load %arg12[%c2, %c0_20] : memref<3x128xf32, #tpu.memory_space<vmem>>, vector<1x128xf32>
    %16 = vector.shape_cast %15 : vector<1x128xf32> to vector<1x128xf32>
    %17 = vector.broadcast %16 : vector<1x128xf32> to vector<2x128xf32>
    %c0_21 = arith.constant 0 : index
    %c0_22 = arith.constant 0 : index
    %18 = vector.load %arg14[%c0_21, %c0_22] : memref<1x4xf32, #tpu.memory_space<vmem>>, vector<1x4xf32>
    %19 = vector.shape_cast %18 : vector<1x4xf32> to vector<1x4xf32>
    %20 = vector.broadcast %19 : vector<1x4xf32> to vector<2x4xf32>
    %c0_23 = arith.constant 0 : index
    %c0_24 = arith.constant 0 : index
    %21 = vector.load %arg2[%c0_23, %c0_24] : memref<4x128xf32, #tpu.memory_space<vmem>>, vector<4x128xf32>
    %cst = arith.constant dense<0.000000e+00> : vector<16x128xf32>
    %22 = tpu.matmul %0, %21, %cst {dimension_numbers = #tpu.dot_dimension_numbers<[1], [0], [0], [1], [0, 0, 1, 1], [], []>} : vector<16x4xf32>, vector<4x128xf32>, vector<16x128xf32> -> vector<16x128xf32>
    %c0_25 = arith.constant 0 : index
    %c0_26 = arith.constant 0 : index
    %23 = vector.load %arg6[%c0_25, %c0_26] : memref<2x128xf32, #tpu.memory_space<vmem>>, vector<1x128xf32>
    %24 = vector.broadcast %23 : vector<1x128xf32> to vector<16x128xf32>
    %25 = arith.addf %22, %24 : vector<16x128xf32>
    %26 = vector.extract_strided_slice %25 {offsets = [0, 0], sizes = [2, 128], strides = [1, 1]} : vector<16x128xf32> to vector<2x128xf32>
    %27 = vector.extract_strided_slice %25 {offsets = [2, 0], sizes = [2, 128], strides = [1, 1]} : vector<16x128xf32> to vector<2x128xf32>
    %28 = vector.extract_strided_slice %25 {offsets = [4, 0], sizes = [2, 128], strides = [1, 1]} : vector<16x128xf32> to vector<2x128xf32>
    %29 = vector.extract_strided_slice %25 {offsets = [6, 0], sizes = [2, 128], strides = [1, 1]} : vector<16x128xf32> to vector<2x128xf32>
    %30 = vector.extract_strided_slice %25 {offsets = [8, 0], sizes = [2, 128], strides = [1, 1]} : vector<16x128xf32> to vector<2x128xf32>
    %31 = vector.extract_strided_slice %25 {offsets = [10, 0], sizes = [2, 128], strides = [1, 1]} : vector<16x128xf32> to vector<2x128xf32>
    %32 = vector.extract_strided_slice %25 {offsets = [12, 0], sizes = [2, 128], strides = [1, 1]} : vector<16x128xf32> to vector<2x128xf32>
    %33 = vector.extract_strided_slice %25 {offsets = [14, 0], sizes = [2, 128], strides = [1, 1]} : vector<16x128xf32> to vector<2x128xf32>
    %34 = vector.extract_strided_slice %0 {offsets = [0, 0], sizes = [2, 4], strides = [1, 1]} : vector<16x4xf32> to vector<2x4xf32>
    %c0_27 = arith.constant 0 : index
    %c0_28 = arith.constant 0 : index
    %35 = vector.load %arg7[%c0_27, %c0_28] : memref<4x128xf32, #tpu.memory_space<vmem>>, vector<4x128xf32>
    %cst_29 = arith.constant dense<0.000000e+00> : vector<2x128xf32>
    %36 = tpu.matmul %34, %35, %cst_29 {dimension_numbers = #tpu.dot_dimension_numbers<[1], [0], [0], [1], [0, 0, 1, 1], [], []>} : vector<2x4xf32>, vector<4x128xf32>, vector<2x128xf32> -> vector<2x128xf32>
    %c0_30 = arith.constant 0 : index
    %c0_31 = arith.constant 0 : index
    %37 = vector.load %arg12[%c0_30, %c0_31] : memref<3x128xf32, #tpu.memory_space<vmem>>, vector<1x128xf32>
    %38 = vector.broadcast %37 : vector<1x128xf32> to vector<2x128xf32>
    %39 = arith.addf %36, %38 : vector<2x128xf32>
    %cst_32 = arith.constant 0.000000e+00 : f32
    %40 = vector.broadcast %cst_32 : f32 to vector<2x32xf32>
    %cst_33 = arith.constant dense<0.000000e+00> : vector<2x128xf32>
    %41 = tpu.matmul %40, %1, %cst_33 {dimension_numbers = #tpu.dot_dimension_numbers<[1], [0], [0], [1], [0, 0, 1, 1], [], []>} : vector<2x32xf32>, vector<32x128xf32>, vector<2x128xf32> -> vector<2x128xf32>
    %42 = arith.addf %26, %41 : vector<2x128xf32>
    %43 = arith.negf %42 : vector<2x128xf32>
    %44 = math.exp %43 : vector<2x128xf32>
    %cst_34 = arith.constant 1.000000e+00 : f32
    %45 = vector.broadcast %cst_34 : f32 to vector<2x128xf32>
    %46 = arith.addf %45, %44 : vector<2x128xf32>
    %47 = arith.divf %45, %46 : vector<2x128xf32>
    %48 = vector.extract_strided_slice %47 {offsets = [0, 0], sizes = [2, 32], strides = [1, 1]} : vector<2x128xf32> to vector<2x32xf32>
    %49 = vector.extract_strided_slice %47 {offsets = [0, 32], sizes = [2, 32], strides = [1, 1]} : vector<2x128xf32> to vector<2x32xf32>
    %50 = vector.extract_strided_slice %47 {offsets = [0, 64], sizes = [2, 32], strides = [1, 1]} : vector<2x128xf32> to vector<2x32xf32>
    %cst_35 = arith.constant 2.000000e+00 : f32
    %51 = vector.broadcast %cst_35 : f32 to vector<2x32xf32>
    %52 = arith.mulf %51, %50 : vector<2x32xf32>
    %cst_36 = arith.constant 1.000000e+00 : f32
    %53 = vector.broadcast %cst_36 : f32 to vector<2x32xf32>
    %54 = arith.subf %52, %53 : vector<2x32xf32>
    %55 = vector.extract_strided_slice %47 {offsets = [0, 96], sizes = [2, 32], strides = [1, 1]} : vector<2x128xf32> to vector<2x32xf32>
    %56 = arith.mulf %49, %40 : vector<2x32xf32>
    %57 = arith.mulf %48, %54 : vector<2x32xf32>
    %58 = arith.addf %56, %57 : vector<2x32xf32>
    %59 = math.tanh %58 : vector<2x32xf32>
    %60 = arith.mulf %55, %59 : vector<2x32xf32>
    %cst_37 = arith.constant dense<0.000000e+00> : vector<2x128xf32>
    %61 = tpu.matmul %60, %2, %cst_37 {dimension_numbers = #tpu.dot_dimension_numbers<[1], [0], [0], [1], [0, 0, 1, 1], [], []>} : vector<2x32xf32>, vector<32x128xf32>, vector<2x128xf32> -> vector<2x128xf32>
    %cst_38 = arith.constant dense<0.000000e+00> : vector<2x128xf32>
    %62 = tpu.matmul %40, %3, %cst_38 {dimension_numbers = #tpu.dot_dimension_numbers<[1], [0], [0], [1], [0, 0, 1, 1], [], []>} : vector<2x32xf32>, vector<32x128xf32>, vector<2x128xf32> -> vector<2x128xf32>
    %63 = arith.addf %61, %62 : vector<2x128xf32>
    %64 = arith.addf %63, %11 : vector<2x128xf32>
    %65 = arith.negf %64 : vector<2x128xf32>
    %66 = math.exp %65 : vector<2x128xf32>
    %cst_39 = arith.constant 1.000000e+00 : f32
    %67 = vector.broadcast %cst_39 : f32 to vector<2x128xf32>
    %68 = arith.addf %67, %66 : vector<2x128xf32>
    %69 = arith.divf %67, %68 : vector<2x128xf32>
    %70 = vector.extract_strided_slice %69 {offsets = [0, 0], sizes = [2, 32], strides = [1, 1]} : vector<2x128xf32> to vector<2x32xf32>
    %71 = vector.extract_strided_slice %69 {offsets = [0, 32], sizes = [2, 32], strides = [1, 1]} : vector<2x128xf32> to vector<2x32xf32>
    %72 = vector.extract_strided_slice %69 {offsets = [0, 64], sizes = [2, 32], strides = [1, 1]} : vector<2x128xf32> to vector<2x32xf32>
    %cst_40 = arith.constant 2.000000e+00 : f32
    %73 = vector.broadcast %cst_40 : f32 to vector<2x32xf32>
    %74 = arith.mulf %73, %72 : vector<2x32xf32>
    %cst_41 = arith.constant 1.000000e+00 : f32
    %75 = vector.broadcast %cst_41 : f32 to vector<2x32xf32>
    %76 = arith.subf %74, %75 : vector<2x32xf32>
    %77 = vector.extract_strided_slice %69 {offsets = [0, 96], sizes = [2, 32], strides = [1, 1]} : vector<2x128xf32> to vector<2x32xf32>
    %78 = arith.mulf %71, %40 : vector<2x32xf32>
    %79 = arith.mulf %70, %76 : vector<2x32xf32>
    %80 = arith.addf %78, %79 : vector<2x32xf32>
    %81 = math.tanh %80 : vector<2x32xf32>
    %82 = arith.mulf %77, %81 : vector<2x32xf32>
    %cst_42 = arith.constant dense<0.000000e+00> : vector<2x128xf32>
    %83 = tpu.matmul %60, %1, %cst_42 {dimension_numbers = #tpu.dot_dimension_numbers<[1], [0], [0], [1], [0, 0, 1, 1], [], []>} : vector<2x32xf32>, vector<32x128xf32>, vector<2x128xf32> -> vector<2x128xf32>
    %84 = arith.addf %27, %83 : vector<2x128xf32>
    %85 = arith.negf %84 : vector<2x128xf32>
    %86 = math.exp %85 : vector<2x128xf32>
    %cst_43 = arith.constant 1.000000e+00 : f32
    %87 = vector.broadcast %cst_43 : f32 to vector<2x128xf32>
    %88 = arith.addf %87, %86 : vector<2x128xf32>
    %89 = arith.divf %87, %88 : vector<2x128xf32>
    %90 = vector.extract_strided_slice %89 {offsets = [0, 0], sizes = [2, 32], strides = [1, 1]} : vector<2x128xf32> to vector<2x32xf32>
    %91 = vector.extract_strided_slice %89 {offsets = [0, 32], sizes = [2, 32], strides = [1, 1]} : vector<2x128xf32> to vector<2x32xf32>
    %92 = vector.extract_strided_slice %89 {offsets = [0, 64], sizes = [2, 32], strides = [1, 1]} : vector<2x128xf32> to vector<2x32xf32>
    %cst_44 = arith.constant 2.000000e+00 : f32
    %93 = vector.broadcast %cst_44 : f32 to vector<2x32xf32>
    %94 = arith.mulf %93, %92 : vector<2x32xf32>
    %cst_45 = arith.constant 1.000000e+00 : f32
    %95 = vector.broadcast %cst_45 : f32 to vector<2x32xf32>
    %96 = arith.subf %94, %95 : vector<2x32xf32>
    %97 = vector.extract_strided_slice %89 {offsets = [0, 96], sizes = [2, 32], strides = [1, 1]} : vector<2x128xf32> to vector<2x32xf32>
    %98 = arith.mulf %91, %58 : vector<2x32xf32>
    %99 = arith.mulf %90, %96 : vector<2x32xf32>
    %100 = arith.addf %98, %99 : vector<2x32xf32>
    %101 = math.tanh %100 : vector<2x32xf32>
    %102 = arith.mulf %97, %101 : vector<2x32xf32>
    %cst_46 = arith.constant dense<0.000000e+00> : vector<2x128xf32>
    %103 = tpu.matmul %102, %2, %cst_46 {dimension_numbers = #tpu.dot_dimension_numbers<[1], [0], [0], [1], [0, 0, 1, 1], [], []>} : vector<2x32xf32>, vector<32x128xf32>, vector<2x128xf32> -> vector<2x128xf32>
    %cst_47 = arith.constant dense<0.000000e+00> : vector<2x128xf32>
    %104 = tpu.matmul %82, %3, %cst_47 {dimension_numbers = #tpu.dot_dimension_numbers<[1], [0], [0], [1], [0, 0, 1, 1], [], []>} : vector<2x32xf32>, vector<32x128xf32>, vector<2x128xf32> -> vector<2x128xf32>
    %105 = arith.addf %103, %104 : vector<2x128xf32>
    %106 = arith.addf %105, %11 : vector<2x128xf32>
    %107 = arith.negf %106 : vector<2x128xf32>
    %108 = math.exp %107 : vector<2x128xf32>
    %cst_48 = arith.constant 1.000000e+00 : f32
    %109 = vector.broadcast %cst_48 : f32 to vector<2x128xf32>
    %110 = arith.addf %109, %108 : vector<2x128xf32>
    %111 = arith.divf %109, %110 : vector<2x128xf32>
    %112 = vector.extract_strided_slice %111 {offsets = [0, 0], sizes = [2, 32], strides = [1, 1]} : vector<2x128xf32> to vector<2x32xf32>
    %113 = vector.extract_strided_slice %111 {offsets = [0, 32], sizes = [2, 32], strides = [1, 1]} : vector<2x128xf32> to vector<2x32xf32>
    %114 = vector.extract_strided_slice %111 {offsets = [0, 64], sizes = [2, 32], strides = [1, 1]} : vector<2x128xf32> to vector<2x32xf32>
    %cst_49 = arith.constant 2.000000e+00 : f32
    %115 = vector.broadcast %cst_49 : f32 to vector<2x32xf32>
    %116 = arith.mulf %115, %114 : vector<2x32xf32>
    %cst_50 = arith.constant 1.000000e+00 : f32
    %117 = vector.broadcast %cst_50 : f32 to vector<2x32xf32>
    %118 = arith.subf %116, %117 : vector<2x32xf32>
    %119 = vector.extract_strided_slice %111 {offsets = [0, 96], sizes = [2, 32], strides = [1, 1]} : vector<2x128xf32> to vector<2x32xf32>
    %120 = arith.mulf %113, %80 : vector<2x32xf32>
    %121 = arith.mulf %112, %118 : vector<2x32xf32>
    %122 = arith.addf %120, %121 : vector<2x32xf32>
    %123 = math.tanh %122 : vector<2x32xf32>
    %124 = arith.mulf %119, %123 : vector<2x32xf32>
    %cst_51 = arith.constant dense<0.000000e+00> : vector<2x128xf32>
    %125 = tpu.matmul %102, %1, %cst_51 {dimension_numbers = #tpu.dot_dimension_numbers<[1], [0], [0], [1], [0, 0, 1, 1], [], []>} : vector<2x32xf32>, vector<32x128xf32>, vector<2x128xf32> -> vector<2x128xf32>
    %126 = arith.addf %28, %125 : vector<2x128xf32>
    %127 = arith.negf %126 : vector<2x128xf32>
    %128 = math.exp %127 : vector<2x128xf32>
    %cst_52 = arith.constant 1.000000e+00 : f32
    %129 = vector.broadcast %cst_52 : f32 to vector<2x128xf32>
    %130 = arith.addf %129, %128 : vector<2x128xf32>
    %131 = arith.divf %129, %130 : vector<2x128xf32>
    %132 = vector.extract_strided_slice %131 {offsets = [0, 0], sizes = [2, 32], strides = [1, 1]} : vector<2x128xf32> to vector<2x32xf32>
    %133 = vector.extract_strided_slice %131 {offsets = [0, 32], sizes = [2, 32], strides = [1, 1]} : vector<2x128xf32> to vector<2x32xf32>
    %134 = vector.extract_strided_slice %131 {offsets = [0, 64], sizes = [2, 32], strides = [1, 1]} : vector<2x128xf32> to vector<2x32xf32>
    %cst_53 = arith.constant 2.000000e+00 : f32
    %135 = vector.broadcast %cst_53 : f32 to vector<2x32xf32>
    %136 = arith.mulf %135, %134 : vector<2x32xf32>
    %cst_54 = arith.constant 1.000000e+00 : f32
    %137 = vector.broadcast %cst_54 : f32 to vector<2x32xf32>
    %138 = arith.subf %136, %137 : vector<2x32xf32>
    %139 = vector.extract_strided_slice %131 {offsets = [0, 96], sizes = [2, 32], strides = [1, 1]} : vector<2x128xf32> to vector<2x32xf32>
    %140 = arith.mulf %133, %100 : vector<2x32xf32>
    %141 = arith.mulf %132, %138 : vector<2x32xf32>
    %142 = arith.addf %140, %141 : vector<2x32xf32>
    %143 = math.tanh %142 : vector<2x32xf32>
    %144 = arith.mulf %139, %143 : vector<2x32xf32>
    %cst_55 = arith.constant dense<0.000000e+00> : vector<2x128xf32>
    %145 = tpu.matmul %144, %2, %cst_55 {dimension_numbers = #tpu.dot_dimension_numbers<[1], [0], [0], [1], [0, 0, 1, 1], [], []>} : vector<2x32xf32>, vector<32x128xf32>, vector<2x128xf32> -> vector<2x128xf32>
    %cst_56 = arith.constant dense<0.000000e+00> : vector<2x128xf32>
    %146 = tpu.matmul %124, %3, %cst_56 {dimension_numbers = #tpu.dot_dimension_numbers<[1], [0], [0], [1], [0, 0, 1, 1], [], []>} : vector<2x32xf32>, vector<32x128xf32>, vector<2x128xf32> -> vector<2x128xf32>
    %147 = arith.addf %145, %146 : vector<2x128xf32>
    %148 = arith.addf %147, %11 : vector<2x128xf32>
    %149 = arith.negf %148 : vector<2x128xf32>
    %150 = math.exp %149 : vector<2x128xf32>
    %cst_57 = arith.constant 1.000000e+00 : f32
    %151 = vector.broadcast %cst_57 : f32 to vector<2x128xf32>
    %152 = arith.addf %151, %150 : vector<2x128xf32>
    %153 = arith.divf %151, %152 : vector<2x128xf32>
    %154 = vector.extract_strided_slice %153 {offsets = [0, 0], sizes = [2, 32], strides = [1, 1]} : vector<2x128xf32> to vector<2x32xf32>
    %155 = vector.extract_strided_slice %153 {offsets = [0, 32], sizes = [2, 32], strides = [1, 1]} : vector<2x128xf32> to vector<2x32xf32>
    %156 = vector.extract_strided_slice %153 {offsets = [0, 64], sizes = [2, 32], strides = [1, 1]} : vector<2x128xf32> to vector<2x32xf32>
    %cst_58 = arith.constant 2.000000e+00 : f32
    %157 = vector.broadcast %cst_58 : f32 to vector<2x32xf32>
    %158 = arith.mulf %157, %156 : vector<2x32xf32>
    %cst_59 = arith.constant 1.000000e+00 : f32
    %159 = vector.broadcast %cst_59 : f32 to vector<2x32xf32>
    %160 = arith.subf %158, %159 : vector<2x32xf32>
    %161 = vector.extract_strided_slice %153 {offsets = [0, 96], sizes = [2, 32], strides = [1, 1]} : vector<2x128xf32> to vector<2x32xf32>
    %162 = arith.mulf %155, %122 : vector<2x32xf32>
    %163 = arith.mulf %154, %160 : vector<2x32xf32>
    %164 = arith.addf %162, %163 : vector<2x32xf32>
    %165 = math.tanh %164 : vector<2x32xf32>
    %166 = arith.mulf %161, %165 : vector<2x32xf32>
    %cst_60 = arith.constant dense<0.000000e+00> : vector<2x128xf32>
    %167 = tpu.matmul %144, %1, %cst_60 {dimension_numbers = #tpu.dot_dimension_numbers<[1], [0], [0], [1], [0, 0, 1, 1], [], []>} : vector<2x32xf32>, vector<32x128xf32>, vector<2x128xf32> -> vector<2x128xf32>
    %168 = arith.addf %29, %167 : vector<2x128xf32>
    %169 = arith.negf %168 : vector<2x128xf32>
    %170 = math.exp %169 : vector<2x128xf32>
    %cst_61 = arith.constant 1.000000e+00 : f32
    %171 = vector.broadcast %cst_61 : f32 to vector<2x128xf32>
    %172 = arith.addf %171, %170 : vector<2x128xf32>
    %173 = arith.divf %171, %172 : vector<2x128xf32>
    %174 = vector.extract_strided_slice %173 {offsets = [0, 0], sizes = [2, 32], strides = [1, 1]} : vector<2x128xf32> to vector<2x32xf32>
    %175 = vector.extract_strided_slice %173 {offsets = [0, 32], sizes = [2, 32], strides = [1, 1]} : vector<2x128xf32> to vector<2x32xf32>
    %176 = vector.extract_strided_slice %173 {offsets = [0, 64], sizes = [2, 32], strides = [1, 1]} : vector<2x128xf32> to vector<2x32xf32>
    %cst_62 = arith.constant 2.000000e+00 : f32
    %177 = vector.broadcast %cst_62 : f32 to vector<2x32xf32>
    %178 = arith.mulf %177, %176 : vector<2x32xf32>
    %cst_63 = arith.constant 1.000000e+00 : f32
    %179 = vector.broadcast %cst_63 : f32 to vector<2x32xf32>
    %180 = arith.subf %178, %179 : vector<2x32xf32>
    %181 = vector.extract_strided_slice %173 {offsets = [0, 96], sizes = [2, 32], strides = [1, 1]} : vector<2x128xf32> to vector<2x32xf32>
    %182 = arith.mulf %175, %142 : vector<2x32xf32>
    %183 = arith.mulf %174, %180 : vector<2x32xf32>
    %184 = arith.addf %182, %183 : vector<2x32xf32>
    %185 = math.tanh %184 : vector<2x32xf32>
    %186 = arith.mulf %181, %185 : vector<2x32xf32>
    %cst_64 = arith.constant dense<0.000000e+00> : vector<2x128xf32>
    %187 = tpu.matmul %186, %2, %cst_64 {dimension_numbers = #tpu.dot_dimension_numbers<[1], [0], [0], [1], [0, 0, 1, 1], [], []>} : vector<2x32xf32>, vector<32x128xf32>, vector<2x128xf32> -> vector<2x128xf32>
    %cst_65 = arith.constant dense<0.000000e+00> : vector<2x128xf32>
    %188 = tpu.matmul %166, %3, %cst_65 {dimension_numbers = #tpu.dot_dimension_numbers<[1], [0], [0], [1], [0, 0, 1, 1], [], []>} : vector<2x32xf32>, vector<32x128xf32>, vector<2x128xf32> -> vector<2x128xf32>
    %189 = arith.addf %187, %188 : vector<2x128xf32>
    %190 = arith.addf %189, %11 : vector<2x128xf32>
    %191 = arith.negf %190 : vector<2x128xf32>
    %192 = math.exp %191 : vector<2x128xf32>
    %cst_66 = arith.constant 1.000000e+00 : f32
    %193 = vector.broadcast %cst_66 : f32 to vector<2x128xf32>
    %194 = arith.addf %193, %192 : vector<2x128xf32>
    %195 = arith.divf %193, %194 : vector<2x128xf32>
    %196 = vector.extract_strided_slice %195 {offsets = [0, 0], sizes = [2, 32], strides = [1, 1]} : vector<2x128xf32> to vector<2x32xf32>
    %197 = vector.extract_strided_slice %195 {offsets = [0, 32], sizes = [2, 32], strides = [1, 1]} : vector<2x128xf32> to vector<2x32xf32>
    %198 = vector.extract_strided_slice %195 {offsets = [0, 64], sizes = [2, 32], strides = [1, 1]} : vector<2x128xf32> to vector<2x32xf32>
    %cst_67 = arith.constant 2.000000e+00 : f32
    %199 = vector.broadcast %cst_67 : f32 to vector<2x32xf32>
    %200 = arith.mulf %199, %198 : vector<2x32xf32>
    %cst_68 = arith.constant 1.000000e+00 : f32
    %201 = vector.broadcast %cst_68 : f32 to vector<2x32xf32>
    %202 = arith.subf %200, %201 : vector<2x32xf32>
    %203 = vector.extract_strided_slice %195 {offsets = [0, 96], sizes = [2, 32], strides = [1, 1]} : vector<2x128xf32> to vector<2x32xf32>
    %204 = arith.mulf %197, %164 : vector<2x32xf32>
    %205 = arith.mulf %196, %202 : vector<2x32xf32>
    %206 = arith.addf %204, %205 : vector<2x32xf32>
    %207 = math.tanh %206 : vector<2x32xf32>
    %208 = arith.mulf %203, %207 : vector<2x32xf32>
    %cst_69 = arith.constant dense<0.000000e+00> : vector<2x128xf32>
    %209 = tpu.matmul %186, %1, %cst_69 {dimension_numbers = #tpu.dot_dimension_numbers<[1], [0], [0], [1], [0, 0, 1, 1], [], []>} : vector<2x32xf32>, vector<32x128xf32>, vector<2x128xf32> -> vector<2x128xf32>
    %210 = arith.addf %30, %209 : vector<2x128xf32>
    %211 = arith.negf %210 : vector<2x128xf32>
    %212 = math.exp %211 : vector<2x128xf32>
    %cst_70 = arith.constant 1.000000e+00 : f32
    %213 = vector.broadcast %cst_70 : f32 to vector<2x128xf32>
    %214 = arith.addf %213, %212 : vector<2x128xf32>
    %215 = arith.divf %213, %214 : vector<2x128xf32>
    %216 = vector.extract_strided_slice %215 {offsets = [0, 0], sizes = [2, 32], strides = [1, 1]} : vector<2x128xf32> to vector<2x32xf32>
    %217 = vector.extract_strided_slice %215 {offsets = [0, 32], sizes = [2, 32], strides = [1, 1]} : vector<2x128xf32> to vector<2x32xf32>
    %218 = vector.extract_strided_slice %215 {offsets = [0, 64], sizes = [2, 32], strides = [1, 1]} : vector<2x128xf32> to vector<2x32xf32>
    %cst_71 = arith.constant 2.000000e+00 : f32
    %219 = vector.broadcast %cst_71 : f32 to vector<2x32xf32>
    %220 = arith.mulf %219, %218 : vector<2x32xf32>
    %cst_72 = arith.constant 1.000000e+00 : f32
    %221 = vector.broadcast %cst_72 : f32 to vector<2x32xf32>
    %222 = arith.subf %220, %221 : vector<2x32xf32>
    %223 = vector.extract_strided_slice %215 {offsets = [0, 96], sizes = [2, 32], strides = [1, 1]} : vector<2x128xf32> to vector<2x32xf32>
    %224 = arith.mulf %217, %184 : vector<2x32xf32>
    %225 = arith.mulf %216, %222 : vector<2x32xf32>
    %226 = arith.addf %224, %225 : vector<2x32xf32>
    %227 = math.tanh %226 : vector<2x32xf32>
    %228 = arith.mulf %223, %227 : vector<2x32xf32>
    %cst_73 = arith.constant dense<0.000000e+00> : vector<2x128xf32>
    %229 = tpu.matmul %228, %2, %cst_73 {dimension_numbers = #tpu.dot_dimension_numbers<[1], [0], [0], [1], [0, 0, 1, 1], [], []>} : vector<2x32xf32>, vector<32x128xf32>, vector<2x128xf32> -> vector<2x128xf32>
    %cst_74 = arith.constant dense<0.000000e+00> : vector<2x128xf32>
    %230 = tpu.matmul %208, %3, %cst_74 {dimension_numbers = #tpu.dot_dimension_numbers<[1], [0], [0], [1], [0, 0, 1, 1], [], []>} : vector<2x32xf32>, vector<32x128xf32>, vector<2x128xf32> -> vector<2x128xf32>
    %231 = arith.addf %229, %230 : vector<2x128xf32>
    %232 = arith.addf %231, %11 : vector<2x128xf32>
    %233 = arith.negf %232 : vector<2x128xf32>
    %234 = math.exp %233 : vector<2x128xf32>
    %cst_75 = arith.constant 1.000000e+00 : f32
    %235 = vector.broadcast %cst_75 : f32 to vector<2x128xf32>
    %236 = arith.addf %235, %234 : vector<2x128xf32>
    %237 = arith.divf %235, %236 : vector<2x128xf32>
    %238 = vector.extract_strided_slice %237 {offsets = [0, 0], sizes = [2, 32], strides = [1, 1]} : vector<2x128xf32> to vector<2x32xf32>
    %239 = vector.extract_strided_slice %237 {offsets = [0, 32], sizes = [2, 32], strides = [1, 1]} : vector<2x128xf32> to vector<2x32xf32>
    %240 = vector.extract_strided_slice %237 {offsets = [0, 64], sizes = [2, 32], strides = [1, 1]} : vector<2x128xf32> to vector<2x32xf32>
    %cst_76 = arith.constant 2.000000e+00 : f32
    %241 = vector.broadcast %cst_76 : f32 to vector<2x32xf32>
    %242 = arith.mulf %241, %240 : vector<2x32xf32>
    %cst_77 = arith.constant 1.000000e+00 : f32
    %243 = vector.broadcast %cst_77 : f32 to vector<2x32xf32>
    %244 = arith.subf %242, %243 : vector<2x32xf32>
    %245 = vector.extract_strided_slice %237 {offsets = [0, 96], sizes = [2, 32], strides = [1, 1]} : vector<2x128xf32> to vector<2x32xf32>
    %246 = arith.mulf %239, %206 : vector<2x32xf32>
    %247 = arith.mulf %238, %244 : vector<2x32xf32>
    %248 = arith.addf %246, %247 : vector<2x32xf32>
    %249 = math.tanh %248 : vector<2x32xf32>
    %250 = arith.mulf %245, %249 : vector<2x32xf32>
    %cst_78 = arith.constant dense<0.000000e+00> : vector<2x128xf32>
    %251 = tpu.matmul %228, %1, %cst_78 {dimension_numbers = #tpu.dot_dimension_numbers<[1], [0], [0], [1], [0, 0, 1, 1], [], []>} : vector<2x32xf32>, vector<32x128xf32>, vector<2x128xf32> -> vector<2x128xf32>
    %252 = arith.addf %31, %251 : vector<2x128xf32>
    %253 = arith.negf %252 : vector<2x128xf32>
    %254 = math.exp %253 : vector<2x128xf32>
    %cst_79 = arith.constant 1.000000e+00 : f32
    %255 = vector.broadcast %cst_79 : f32 to vector<2x128xf32>
    %256 = arith.addf %255, %254 : vector<2x128xf32>
    %257 = arith.divf %255, %256 : vector<2x128xf32>
    %258 = vector.extract_strided_slice %257 {offsets = [0, 0], sizes = [2, 32], strides = [1, 1]} : vector<2x128xf32> to vector<2x32xf32>
    %259 = vector.extract_strided_slice %257 {offsets = [0, 32], sizes = [2, 32], strides = [1, 1]} : vector<2x128xf32> to vector<2x32xf32>
    %260 = vector.extract_strided_slice %257 {offsets = [0, 64], sizes = [2, 32], strides = [1, 1]} : vector<2x128xf32> to vector<2x32xf32>
    %cst_80 = arith.constant 2.000000e+00 : f32
    %261 = vector.broadcast %cst_80 : f32 to vector<2x32xf32>
    %262 = arith.mulf %261, %260 : vector<2x32xf32>
    %cst_81 = arith.constant 1.000000e+00 : f32
    %263 = vector.broadcast %cst_81 : f32 to vector<2x32xf32>
    %264 = arith.subf %262, %263 : vector<2x32xf32>
    %265 = vector.extract_strided_slice %257 {offsets = [0, 96], sizes = [2, 32], strides = [1, 1]} : vector<2x128xf32> to vector<2x32xf32>
    %266 = arith.mulf %259, %226 : vector<2x32xf32>
    %267 = arith.mulf %258, %264 : vector<2x32xf32>
    %268 = arith.addf %266, %267 : vector<2x32xf32>
    %269 = math.tanh %268 : vector<2x32xf32>
    %270 = arith.mulf %265, %269 : vector<2x32xf32>
    %cst_82 = arith.constant dense<0.000000e+00> : vector<2x128xf32>
    %271 = tpu.matmul %270, %2, %cst_82 {dimension_numbers = #tpu.dot_dimension_numbers<[1], [0], [0], [1], [0, 0, 1, 1], [], []>} : vector<2x32xf32>, vector<32x128xf32>, vector<2x128xf32> -> vector<2x128xf32>
    %cst_83 = arith.constant dense<0.000000e+00> : vector<2x128xf32>
    %272 = tpu.matmul %250, %3, %cst_83 {dimension_numbers = #tpu.dot_dimension_numbers<[1], [0], [0], [1], [0, 0, 1, 1], [], []>} : vector<2x32xf32>, vector<32x128xf32>, vector<2x128xf32> -> vector<2x128xf32>
    %273 = arith.addf %271, %272 : vector<2x128xf32>
    %274 = arith.addf %273, %11 : vector<2x128xf32>
    %275 = arith.negf %274 : vector<2x128xf32>
    %276 = math.exp %275 : vector<2x128xf32>
    %cst_84 = arith.constant 1.000000e+00 : f32
    %277 = vector.broadcast %cst_84 : f32 to vector<2x128xf32>
    %278 = arith.addf %277, %276 : vector<2x128xf32>
    %279 = arith.divf %277, %278 : vector<2x128xf32>
    %280 = vector.extract_strided_slice %279 {offsets = [0, 0], sizes = [2, 32], strides = [1, 1]} : vector<2x128xf32> to vector<2x32xf32>
    %281 = vector.extract_strided_slice %279 {offsets = [0, 32], sizes = [2, 32], strides = [1, 1]} : vector<2x128xf32> to vector<2x32xf32>
    %282 = vector.extract_strided_slice %279 {offsets = [0, 64], sizes = [2, 32], strides = [1, 1]} : vector<2x128xf32> to vector<2x32xf32>
    %cst_85 = arith.constant 2.000000e+00 : f32
    %283 = vector.broadcast %cst_85 : f32 to vector<2x32xf32>
    %284 = arith.mulf %283, %282 : vector<2x32xf32>
    %cst_86 = arith.constant 1.000000e+00 : f32
    %285 = vector.broadcast %cst_86 : f32 to vector<2x32xf32>
    %286 = arith.subf %284, %285 : vector<2x32xf32>
    %287 = vector.extract_strided_slice %279 {offsets = [0, 96], sizes = [2, 32], strides = [1, 1]} : vector<2x128xf32> to vector<2x32xf32>
    %288 = arith.mulf %281, %248 : vector<2x32xf32>
    %289 = arith.mulf %280, %286 : vector<2x32xf32>
    %290 = arith.addf %288, %289 : vector<2x32xf32>
    %291 = math.tanh %290 : vector<2x32xf32>
    %292 = arith.mulf %287, %291 : vector<2x32xf32>
    %cst_87 = arith.constant dense<0.000000e+00> : vector<2x128xf32>
    %293 = tpu.matmul %270, %1, %cst_87 {dimension_numbers = #tpu.dot_dimension_numbers<[1], [0], [0], [1], [0, 0, 1, 1], [], []>} : vector<2x32xf32>, vector<32x128xf32>, vector<2x128xf32> -> vector<2x128xf32>
    %294 = arith.addf %32, %293 : vector<2x128xf32>
    %295 = arith.negf %294 : vector<2x128xf32>
    %296 = math.exp %295 : vector<2x128xf32>
    %cst_88 = arith.constant 1.000000e+00 : f32
    %297 = vector.broadcast %cst_88 : f32 to vector<2x128xf32>
    %298 = arith.addf %297, %296 : vector<2x128xf32>
    %299 = arith.divf %297, %298 : vector<2x128xf32>
    %300 = vector.extract_strided_slice %299 {offsets = [0, 0], sizes = [2, 32], strides = [1, 1]} : vector<2x128xf32> to vector<2x32xf32>
    %301 = vector.extract_strided_slice %299 {offsets = [0, 32], sizes = [2, 32], strides = [1, 1]} : vector<2x128xf32> to vector<2x32xf32>
    %302 = vector.extract_strided_slice %299 {offsets = [0, 64], sizes = [2, 32], strides = [1, 1]} : vector<2x128xf32> to vector<2x32xf32>
    %cst_89 = arith.constant 2.000000e+00 : f32
    %303 = vector.broadcast %cst_89 : f32 to vector<2x32xf32>
    %304 = arith.mulf %303, %302 : vector<2x32xf32>
    %cst_90 = arith.constant 1.000000e+00 : f32
    %305 = vector.broadcast %cst_90 : f32 to vector<2x32xf32>
    %306 = arith.subf %304, %305 : vector<2x32xf32>
    %307 = vector.extract_strided_slice %299 {offsets = [0, 96], sizes = [2, 32], strides = [1, 1]} : vector<2x128xf32> to vector<2x32xf32>
    %308 = arith.mulf %301, %268 : vector<2x32xf32>
    %309 = arith.mulf %300, %306 : vector<2x32xf32>
    %310 = arith.addf %308, %309 : vector<2x32xf32>
    %311 = math.tanh %310 : vector<2x32xf32>
    %312 = arith.mulf %307, %311 : vector<2x32xf32>
    %cst_91 = arith.constant dense<0.000000e+00> : vector<2x128xf32>
    %313 = tpu.matmul %312, %2, %cst_91 {dimension_numbers = #tpu.dot_dimension_numbers<[1], [0], [0], [1], [0, 0, 1, 1], [], []>} : vector<2x32xf32>, vector<32x128xf32>, vector<2x128xf32> -> vector<2x128xf32>
    %cst_92 = arith.constant dense<0.000000e+00> : vector<2x128xf32>
    %314 = tpu.matmul %292, %3, %cst_92 {dimension_numbers = #tpu.dot_dimension_numbers<[1], [0], [0], [1], [0, 0, 1, 1], [], []>} : vector<2x32xf32>, vector<32x128xf32>, vector<2x128xf32> -> vector<2x128xf32>
    %315 = arith.addf %313, %314 : vector<2x128xf32>
    %316 = arith.addf %315, %11 : vector<2x128xf32>
    %317 = arith.negf %316 : vector<2x128xf32>
    %318 = math.exp %317 : vector<2x128xf32>
    %cst_93 = arith.constant 1.000000e+00 : f32
    %319 = vector.broadcast %cst_93 : f32 to vector<2x128xf32>
    %320 = arith.addf %319, %318 : vector<2x128xf32>
    %321 = arith.divf %319, %320 : vector<2x128xf32>
    %322 = vector.extract_strided_slice %321 {offsets = [0, 0], sizes = [2, 32], strides = [1, 1]} : vector<2x128xf32> to vector<2x32xf32>
    %323 = vector.extract_strided_slice %321 {offsets = [0, 32], sizes = [2, 32], strides = [1, 1]} : vector<2x128xf32> to vector<2x32xf32>
    %324 = vector.extract_strided_slice %321 {offsets = [0, 64], sizes = [2, 32], strides = [1, 1]} : vector<2x128xf32> to vector<2x32xf32>
    %cst_94 = arith.constant 2.000000e+00 : f32
    %325 = vector.broadcast %cst_94 : f32 to vector<2x32xf32>
    %326 = arith.mulf %325, %324 : vector<2x32xf32>
    %cst_95 = arith.constant 1.000000e+00 : f32
    %327 = vector.broadcast %cst_95 : f32 to vector<2x32xf32>
    %328 = arith.subf %326, %327 : vector<2x32xf32>
    %329 = vector.extract_strided_slice %321 {offsets = [0, 96], sizes = [2, 32], strides = [1, 1]} : vector<2x128xf32> to vector<2x32xf32>
    %330 = arith.mulf %323, %290 : vector<2x32xf32>
    %331 = arith.mulf %322, %328 : vector<2x32xf32>
    %332 = arith.addf %330, %331 : vector<2x32xf32>
    %333 = math.tanh %332 : vector<2x32xf32>
    %334 = arith.mulf %329, %333 : vector<2x32xf32>
    %cst_96 = arith.constant dense<0.000000e+00> : vector<2x128xf32>
    %335 = tpu.matmul %312, %1, %cst_96 {dimension_numbers = #tpu.dot_dimension_numbers<[1], [0], [0], [1], [0, 0, 1, 1], [], []>} : vector<2x32xf32>, vector<32x128xf32>, vector<2x128xf32> -> vector<2x128xf32>
    %336 = arith.addf %33, %335 : vector<2x128xf32>
    %337 = arith.negf %336 : vector<2x128xf32>
    %338 = math.exp %337 : vector<2x128xf32>
    %cst_97 = arith.constant 1.000000e+00 : f32
    %339 = vector.broadcast %cst_97 : f32 to vector<2x128xf32>
    %340 = arith.addf %339, %338 : vector<2x128xf32>
    %341 = arith.divf %339, %340 : vector<2x128xf32>
    %342 = vector.extract_strided_slice %341 {offsets = [0, 0], sizes = [2, 32], strides = [1, 1]} : vector<2x128xf32> to vector<2x32xf32>
    %343 = vector.extract_strided_slice %341 {offsets = [0, 32], sizes = [2, 32], strides = [1, 1]} : vector<2x128xf32> to vector<2x32xf32>
    %344 = vector.extract_strided_slice %341 {offsets = [0, 64], sizes = [2, 32], strides = [1, 1]} : vector<2x128xf32> to vector<2x32xf32>
    %cst_98 = arith.constant 2.000000e+00 : f32
    %345 = vector.broadcast %cst_98 : f32 to vector<2x32xf32>
    %346 = arith.mulf %345, %344 : vector<2x32xf32>
    %cst_99 = arith.constant 1.000000e+00 : f32
    %347 = vector.broadcast %cst_99 : f32 to vector<2x32xf32>
    %348 = arith.subf %346, %347 : vector<2x32xf32>
    %349 = vector.extract_strided_slice %341 {offsets = [0, 96], sizes = [2, 32], strides = [1, 1]} : vector<2x128xf32> to vector<2x32xf32>
    %350 = arith.mulf %343, %310 : vector<2x32xf32>
    %351 = arith.mulf %342, %348 : vector<2x32xf32>
    %352 = arith.addf %350, %351 : vector<2x32xf32>
    %353 = math.tanh %352 : vector<2x32xf32>
    %354 = arith.mulf %349, %353 : vector<2x32xf32>
    %cst_100 = arith.constant dense<0.000000e+00> : vector<2x128xf32>
    %355 = tpu.matmul %354, %2, %cst_100 {dimension_numbers = #tpu.dot_dimension_numbers<[1], [0], [0], [1], [0, 0, 1, 1], [], []>} : vector<2x32xf32>, vector<32x128xf32>, vector<2x128xf32> -> vector<2x128xf32>
    %cst_101 = arith.constant dense<0.000000e+00> : vector<2x128xf32>
    %356 = tpu.matmul %334, %3, %cst_101 {dimension_numbers = #tpu.dot_dimension_numbers<[1], [0], [0], [1], [0, 0, 1, 1], [], []>} : vector<2x32xf32>, vector<32x128xf32>, vector<2x128xf32> -> vector<2x128xf32>
    %357 = arith.addf %355, %356 : vector<2x128xf32>
    %358 = arith.addf %357, %11 : vector<2x128xf32>
    %359 = arith.negf %358 : vector<2x128xf32>
    %360 = math.exp %359 : vector<2x128xf32>
    %cst_102 = arith.constant 1.000000e+00 : f32
    %361 = vector.broadcast %cst_102 : f32 to vector<2x128xf32>
    %362 = arith.addf %361, %360 : vector<2x128xf32>
    %363 = arith.divf %361, %362 : vector<2x128xf32>
    %364 = vector.extract_strided_slice %363 {offsets = [0, 0], sizes = [2, 32], strides = [1, 1]} : vector<2x128xf32> to vector<2x32xf32>
    %365 = vector.extract_strided_slice %363 {offsets = [0, 32], sizes = [2, 32], strides = [1, 1]} : vector<2x128xf32> to vector<2x32xf32>
    %366 = vector.extract_strided_slice %363 {offsets = [0, 64], sizes = [2, 32], strides = [1, 1]} : vector<2x128xf32> to vector<2x32xf32>
    %cst_103 = arith.constant 2.000000e+00 : f32
    %367 = vector.broadcast %cst_103 : f32 to vector<2x32xf32>
    %368 = arith.mulf %367, %366 : vector<2x32xf32>
    %cst_104 = arith.constant 1.000000e+00 : f32
    %369 = vector.broadcast %cst_104 : f32 to vector<2x32xf32>
    %370 = arith.subf %368, %369 : vector<2x32xf32>
    %371 = vector.extract_strided_slice %363 {offsets = [0, 96], sizes = [2, 32], strides = [1, 1]} : vector<2x128xf32> to vector<2x32xf32>
    %372 = arith.mulf %365, %332 : vector<2x32xf32>
    %373 = arith.mulf %364, %370 : vector<2x32xf32>
    %374 = arith.addf %372, %373 : vector<2x32xf32>
    %375 = math.tanh %374 : vector<2x32xf32>
    %376 = arith.mulf %371, %375 : vector<2x32xf32>
    %cst_105 = arith.constant dense<0.000000e+00> : vector<2x128xf32>
    %377 = tpu.matmul %354, %5, %cst_105 {dimension_numbers = #tpu.dot_dimension_numbers<[1], [0], [0], [1], [0, 0, 1, 1], [], []>} : vector<2x32xf32>, vector<32x128xf32>, vector<2x128xf32> -> vector<2x128xf32>
    %378 = arith.addf %39, %377 : vector<2x128xf32>
    %379 = arith.negf %378 : vector<2x128xf32>
    %380 = math.exp %379 : vector<2x128xf32>
    %cst_106 = arith.constant 1.000000e+00 : f32
    %381 = vector.broadcast %cst_106 : f32 to vector<2x128xf32>
    %382 = arith.addf %381, %380 : vector<2x128xf32>
    %383 = arith.divf %381, %382 : vector<2x128xf32>
    %384 = vector.extract_strided_slice %383 {offsets = [0, 0], sizes = [2, 32], strides = [1, 1]} : vector<2x128xf32> to vector<2x32xf32>
    %385 = vector.extract_strided_slice %383 {offsets = [0, 32], sizes = [2, 32], strides = [1, 1]} : vector<2x128xf32> to vector<2x32xf32>
    %386 = vector.extract_strided_slice %383 {offsets = [0, 64], sizes = [2, 32], strides = [1, 1]} : vector<2x128xf32> to vector<2x32xf32>
    %cst_107 = arith.constant 2.000000e+00 : f32
    %387 = vector.broadcast %cst_107 : f32 to vector<2x32xf32>
    %388 = arith.mulf %387, %386 : vector<2x32xf32>
    %cst_108 = arith.constant 1.000000e+00 : f32
    %389 = vector.broadcast %cst_108 : f32 to vector<2x32xf32>
    %390 = arith.subf %388, %389 : vector<2x32xf32>
    %391 = vector.extract_strided_slice %383 {offsets = [0, 96], sizes = [2, 32], strides = [1, 1]} : vector<2x128xf32> to vector<2x32xf32>
    %392 = arith.mulf %385, %352 : vector<2x32xf32>
    %393 = arith.mulf %384, %390 : vector<2x32xf32>
    %394 = arith.addf %392, %393 : vector<2x32xf32>
    %395 = math.tanh %394 : vector<2x32xf32>
    %396 = arith.mulf %391, %395 : vector<2x32xf32>
    %cst_109 = arith.constant dense<0.000000e+00> : vector<2x128xf32>
    %397 = tpu.matmul %396, %6, %cst_109 {dimension_numbers = #tpu.dot_dimension_numbers<[1], [0], [0], [1], [0, 0, 1, 1], [], []>} : vector<2x32xf32>, vector<32x128xf32>, vector<2x128xf32> -> vector<2x128xf32>
    %cst_110 = arith.constant dense<0.000000e+00> : vector<2x128xf32>
    %398 = tpu.matmul %376, %7, %cst_110 {dimension_numbers = #tpu.dot_dimension_numbers<[1], [0], [0], [1], [0, 0, 1, 1], [], []>} : vector<2x32xf32>, vector<32x128xf32>, vector<2x128xf32> -> vector<2x128xf32>
    %399 = arith.addf %397, %398 : vector<2x128xf32>
    %400 = arith.addf %399, %17 : vector<2x128xf32>
    %401 = arith.negf %400 : vector<2x128xf32>
    %402 = math.exp %401 : vector<2x128xf32>
    %cst_111 = arith.constant 1.000000e+00 : f32
    %403 = vector.broadcast %cst_111 : f32 to vector<2x128xf32>
    %404 = arith.addf %403, %402 : vector<2x128xf32>
    %405 = arith.divf %403, %404 : vector<2x128xf32>
    %406 = vector.extract_strided_slice %405 {offsets = [0, 0], sizes = [2, 32], strides = [1, 1]} : vector<2x128xf32> to vector<2x32xf32>
    %407 = vector.extract_strided_slice %405 {offsets = [0, 32], sizes = [2, 32], strides = [1, 1]} : vector<2x128xf32> to vector<2x32xf32>
    %408 = vector.extract_strided_slice %405 {offsets = [0, 64], sizes = [2, 32], strides = [1, 1]} : vector<2x128xf32> to vector<2x32xf32>
    %cst_112 = arith.constant 2.000000e+00 : f32
    %409 = vector.broadcast %cst_112 : f32 to vector<2x32xf32>
    %410 = arith.mulf %409, %408 : vector<2x32xf32>
    %cst_113 = arith.constant 1.000000e+00 : f32
    %411 = vector.broadcast %cst_113 : f32 to vector<2x32xf32>
    %412 = arith.subf %410, %411 : vector<2x32xf32>
    %413 = vector.extract_strided_slice %405 {offsets = [0, 96], sizes = [2, 32], strides = [1, 1]} : vector<2x128xf32> to vector<2x32xf32>
    %414 = arith.mulf %407, %374 : vector<2x32xf32>
    %415 = arith.mulf %406, %412 : vector<2x32xf32>
    %416 = arith.addf %414, %415 : vector<2x32xf32>
    %417 = math.tanh %416 : vector<2x32xf32>
    %418 = arith.mulf %413, %417 : vector<2x32xf32>
    %cst_114 = arith.constant dense<0.000000e+00> : vector<2x4xf32>
    %419 = tpu.matmul %418, %8, %cst_114 {dimension_numbers = #tpu.dot_dimension_numbers<[1], [0], [0], [1], [0, 0, 1, 1], [], []>} : vector<2x32xf32>, vector<32x4xf32>, vector<2x4xf32> -> vector<2x4xf32>
    %420 = arith.addf %419, %20 : vector<2x4xf32>
    %cst_115 = arith.constant dense<0.000000e+00> : vector<2x128xf32>
    %421 = tpu.matmul %418, %4, %cst_115 {dimension_numbers = #tpu.dot_dimension_numbers<[1], [0], [0], [1], [0, 0, 1, 1], [], []>} : vector<2x32xf32>, vector<32x128xf32>, vector<2x128xf32> -> vector<2x128xf32>
    %cst_116 = arith.constant dense<0.000000e+00> : vector<2x128xf32>
    %422 = tpu.matmul %396, %5, %cst_116 {dimension_numbers = #tpu.dot_dimension_numbers<[1], [0], [0], [1], [0, 0, 1, 1], [], []>} : vector<2x32xf32>, vector<32x128xf32>, vector<2x128xf32> -> vector<2x128xf32>
    %423 = arith.addf %421, %422 : vector<2x128xf32>
    %424 = arith.addf %423, %14 : vector<2x128xf32>
    %425 = arith.negf %424 : vector<2x128xf32>
    %426 = math.exp %425 : vector<2x128xf32>
    %cst_117 = arith.constant 1.000000e+00 : f32
    %427 = vector.broadcast %cst_117 : f32 to vector<2x128xf32>
    %428 = arith.addf %427, %426 : vector<2x128xf32>
    %429 = arith.divf %427, %428 : vector<2x128xf32>
    %430 = vector.extract_strided_slice %429 {offsets = [0, 0], sizes = [2, 32], strides = [1, 1]} : vector<2x128xf32> to vector<2x32xf32>
    %431 = vector.extract_strided_slice %429 {offsets = [0, 32], sizes = [2, 32], strides = [1, 1]} : vector<2x128xf32> to vector<2x32xf32>
    %432 = vector.extract_strided_slice %429 {offsets = [0, 64], sizes = [2, 32], strides = [1, 1]} : vector<2x128xf32> to vector<2x32xf32>
    %cst_118 = arith.constant 2.000000e+00 : f32
    %433 = vector.broadcast %cst_118 : f32 to vector<2x32xf32>
    %434 = arith.mulf %433, %432 : vector<2x32xf32>
    %cst_119 = arith.constant 1.000000e+00 : f32
    %435 = vector.broadcast %cst_119 : f32 to vector<2x32xf32>
    %436 = arith.subf %434, %435 : vector<2x32xf32>
    %437 = vector.extract_strided_slice %429 {offsets = [0, 96], sizes = [2, 32], strides = [1, 1]} : vector<2x128xf32> to vector<2x32xf32>
    %438 = arith.mulf %431, %394 : vector<2x32xf32>
    %439 = arith.mulf %430, %436 : vector<2x32xf32>
    %440 = arith.addf %438, %439 : vector<2x32xf32>
    %441 = math.tanh %440 : vector<2x32xf32>
    %442 = arith.mulf %437, %441 : vector<2x32xf32>
    %cst_120 = arith.constant dense<0.000000e+00> : vector<2x128xf32>
    %443 = tpu.matmul %442, %6, %cst_120 {dimension_numbers = #tpu.dot_dimension_numbers<[1], [0], [0], [1], [0, 0, 1, 1], [], []>} : vector<2x32xf32>, vector<32x128xf32>, vector<2x128xf32> -> vector<2x128xf32>
    %cst_121 = arith.constant dense<0.000000e+00> : vector<2x128xf32>
    %444 = tpu.matmul %418, %7, %cst_121 {dimension_numbers = #tpu.dot_dimension_numbers<[1], [0], [0], [1], [0, 0, 1, 1], [], []>} : vector<2x32xf32>, vector<32x128xf32>, vector<2x128xf32> -> vector<2x128xf32>
    %445 = arith.addf %443, %444 : vector<2x128xf32>
    %446 = arith.addf %445, %17 : vector<2x128xf32>
    %447 = arith.negf %446 : vector<2x128xf32>
    %448 = math.exp %447 : vector<2x128xf32>
    %cst_122 = arith.constant 1.000000e+00 : f32
    %449 = vector.broadcast %cst_122 : f32 to vector<2x128xf32>
    %450 = arith.addf %449, %448 : vector<2x128xf32>
    %451 = arith.divf %449, %450 : vector<2x128xf32>
    %452 = vector.extract_strided_slice %451 {offsets = [0, 0], sizes = [2, 32], strides = [1, 1]} : vector<2x128xf32> to vector<2x32xf32>
    %453 = vector.extract_strided_slice %451 {offsets = [0, 32], sizes = [2, 32], strides = [1, 1]} : vector<2x128xf32> to vector<2x32xf32>
    %454 = vector.extract_strided_slice %451 {offsets = [0, 64], sizes = [2, 32], strides = [1, 1]} : vector<2x128xf32> to vector<2x32xf32>
    %cst_123 = arith.constant 2.000000e+00 : f32
    %455 = vector.broadcast %cst_123 : f32 to vector<2x32xf32>
    %456 = arith.mulf %455, %454 : vector<2x32xf32>
    %cst_124 = arith.constant 1.000000e+00 : f32
    %457 = vector.broadcast %cst_124 : f32 to vector<2x32xf32>
    %458 = arith.subf %456, %457 : vector<2x32xf32>
    %459 = vector.extract_strided_slice %451 {offsets = [0, 96], sizes = [2, 32], strides = [1, 1]} : vector<2x128xf32> to vector<2x32xf32>
    %460 = arith.mulf %453, %416 : vector<2x32xf32>
    %461 = arith.mulf %452, %458 : vector<2x32xf32>
    %462 = arith.addf %460, %461 : vector<2x32xf32>
    %463 = math.tanh %462 : vector<2x32xf32>
    %464 = arith.mulf %459, %463 : vector<2x32xf32>
    %cst_125 = arith.constant dense<0.000000e+00> : vector<2x4xf32>
    %465 = tpu.matmul %464, %8, %cst_125 {dimension_numbers = #tpu.dot_dimension_numbers<[1], [0], [0], [1], [0, 0, 1, 1], [], []>} : vector<2x32xf32>, vector<32x4xf32>, vector<2x4xf32> -> vector<2x4xf32>
    %466 = arith.addf %465, %20 : vector<2x4xf32>
    %cst_126 = arith.constant dense<0.000000e+00> : vector<2x128xf32>
    %467 = tpu.matmul %464, %4, %cst_126 {dimension_numbers = #tpu.dot_dimension_numbers<[1], [0], [0], [1], [0, 0, 1, 1], [], []>} : vector<2x32xf32>, vector<32x128xf32>, vector<2x128xf32> -> vector<2x128xf32>
    %cst_127 = arith.constant dense<0.000000e+00> : vector<2x128xf32>
    %468 = tpu.matmul %442, %5, %cst_127 {dimension_numbers = #tpu.dot_dimension_numbers<[1], [0], [0], [1], [0, 0, 1, 1], [], []>} : vector<2x32xf32>, vector<32x128xf32>, vector<2x128xf32> -> vector<2x128xf32>
    %469 = arith.addf %467, %468 : vector<2x128xf32>
    %470 = arith.addf %469, %14 : vector<2x128xf32>
    %471 = arith.negf %470 : vector<2x128xf32>
    %472 = math.exp %471 : vector<2x128xf32>
    %cst_128 = arith.constant 1.000000e+00 : f32
    %473 = vector.broadcast %cst_128 : f32 to vector<2x128xf32>
    %474 = arith.addf %473, %472 : vector<2x128xf32>
    %475 = arith.divf %473, %474 : vector<2x128xf32>
    %476 = vector.extract_strided_slice %475 {offsets = [0, 0], sizes = [2, 32], strides = [1, 1]} : vector<2x128xf32> to vector<2x32xf32>
    %477 = vector.extract_strided_slice %475 {offsets = [0, 32], sizes = [2, 32], strides = [1, 1]} : vector<2x128xf32> to vector<2x32xf32>
    %478 = vector.extract_strided_slice %475 {offsets = [0, 64], sizes = [2, 32], strides = [1, 1]} : vector<2x128xf32> to vector<2x32xf32>
    %cst_129 = arith.constant 2.000000e+00 : f32
    %479 = vector.broadcast %cst_129 : f32 to vector<2x32xf32>
    %480 = arith.mulf %479, %478 : vector<2x32xf32>
    %cst_130 = arith.constant 1.000000e+00 : f32
    %481 = vector.broadcast %cst_130 : f32 to vector<2x32xf32>
    %482 = arith.subf %480, %481 : vector<2x32xf32>
    %483 = vector.extract_strided_slice %475 {offsets = [0, 96], sizes = [2, 32], strides = [1, 1]} : vector<2x128xf32> to vector<2x32xf32>
    %484 = arith.mulf %477, %440 : vector<2x32xf32>
    %485 = arith.mulf %476, %482 : vector<2x32xf32>
    %486 = arith.addf %484, %485 : vector<2x32xf32>
    %487 = math.tanh %486 : vector<2x32xf32>
    %488 = arith.mulf %483, %487 : vector<2x32xf32>
    %cst_131 = arith.constant dense<0.000000e+00> : vector<2x128xf32>
    %489 = tpu.matmul %488, %6, %cst_131 {dimension_numbers = #tpu.dot_dimension_numbers<[1], [0], [0], [1], [0, 0, 1, 1], [], []>} : vector<2x32xf32>, vector<32x128xf32>, vector<2x128xf32> -> vector<2x128xf32>
    %cst_132 = arith.constant dense<0.000000e+00> : vector<2x128xf32>
    %490 = tpu.matmul %464, %7, %cst_132 {dimension_numbers = #tpu.dot_dimension_numbers<[1], [0], [0], [1], [0, 0, 1, 1], [], []>} : vector<2x32xf32>, vector<32x128xf32>, vector<2x128xf32> -> vector<2x128xf32>
    %491 = arith.addf %489, %490 : vector<2x128xf32>
    %492 = arith.addf %491, %17 : vector<2x128xf32>
    %493 = arith.negf %492 : vector<2x128xf32>
    %494 = math.exp %493 : vector<2x128xf32>
    %cst_133 = arith.constant 1.000000e+00 : f32
    %495 = vector.broadcast %cst_133 : f32 to vector<2x128xf32>
    %496 = arith.addf %495, %494 : vector<2x128xf32>
    %497 = arith.divf %495, %496 : vector<2x128xf32>
    %498 = vector.extract_strided_slice %497 {offsets = [0, 0], sizes = [2, 32], strides = [1, 1]} : vector<2x128xf32> to vector<2x32xf32>
    %499 = vector.extract_strided_slice %497 {offsets = [0, 32], sizes = [2, 32], strides = [1, 1]} : vector<2x128xf32> to vector<2x32xf32>
    %500 = vector.extract_strided_slice %497 {offsets = [0, 64], sizes = [2, 32], strides = [1, 1]} : vector<2x128xf32> to vector<2x32xf32>
    %cst_134 = arith.constant 2.000000e+00 : f32
    %501 = vector.broadcast %cst_134 : f32 to vector<2x32xf32>
    %502 = arith.mulf %501, %500 : vector<2x32xf32>
    %cst_135 = arith.constant 1.000000e+00 : f32
    %503 = vector.broadcast %cst_135 : f32 to vector<2x32xf32>
    %504 = arith.subf %502, %503 : vector<2x32xf32>
    %505 = vector.extract_strided_slice %497 {offsets = [0, 96], sizes = [2, 32], strides = [1, 1]} : vector<2x128xf32> to vector<2x32xf32>
    %506 = arith.mulf %499, %462 : vector<2x32xf32>
    %507 = arith.mulf %498, %504 : vector<2x32xf32>
    %508 = arith.addf %506, %507 : vector<2x32xf32>
    %509 = math.tanh %508 : vector<2x32xf32>
    %510 = arith.mulf %505, %509 : vector<2x32xf32>
    %cst_136 = arith.constant dense<0.000000e+00> : vector<2x4xf32>
    %511 = tpu.matmul %510, %8, %cst_136 {dimension_numbers = #tpu.dot_dimension_numbers<[1], [0], [0], [1], [0, 0, 1, 1], [], []>} : vector<2x32xf32>, vector<32x4xf32>, vector<2x4xf32> -> vector<2x4xf32>
    %512 = arith.addf %511, %20 : vector<2x4xf32>
    %cst_137 = arith.constant dense<0.000000e+00> : vector<2x128xf32>
    %513 = tpu.matmul %510, %4, %cst_137 {dimension_numbers = #tpu.dot_dimension_numbers<[1], [0], [0], [1], [0, 0, 1, 1], [], []>} : vector<2x32xf32>, vector<32x128xf32>, vector<2x128xf32> -> vector<2x128xf32>
    %cst_138 = arith.constant dense<0.000000e+00> : vector<2x128xf32>
    %514 = tpu.matmul %488, %5, %cst_138 {dimension_numbers = #tpu.dot_dimension_numbers<[1], [0], [0], [1], [0, 0, 1, 1], [], []>} : vector<2x32xf32>, vector<32x128xf32>, vector<2x128xf32> -> vector<2x128xf32>
    %515 = arith.addf %513, %514 : vector<2x128xf32>
    %516 = arith.addf %515, %14 : vector<2x128xf32>
    %517 = arith.negf %516 : vector<2x128xf32>
    %518 = math.exp %517 : vector<2x128xf32>
    %cst_139 = arith.constant 1.000000e+00 : f32
    %519 = vector.broadcast %cst_139 : f32 to vector<2x128xf32>
    %520 = arith.addf %519, %518 : vector<2x128xf32>
    %521 = arith.divf %519, %520 : vector<2x128xf32>
    %522 = vector.extract_strided_slice %521 {offsets = [0, 0], sizes = [2, 32], strides = [1, 1]} : vector<2x128xf32> to vector<2x32xf32>
    %523 = vector.extract_strided_slice %521 {offsets = [0, 32], sizes = [2, 32], strides = [1, 1]} : vector<2x128xf32> to vector<2x32xf32>
    %524 = vector.extract_strided_slice %521 {offsets = [0, 64], sizes = [2, 32], strides = [1, 1]} : vector<2x128xf32> to vector<2x32xf32>
    %cst_140 = arith.constant 2.000000e+00 : f32
    %525 = vector.broadcast %cst_140 : f32 to vector<2x32xf32>
    %526 = arith.mulf %525, %524 : vector<2x32xf32>
    %cst_141 = arith.constant 1.000000e+00 : f32
    %527 = vector.broadcast %cst_141 : f32 to vector<2x32xf32>
    %528 = arith.subf %526, %527 : vector<2x32xf32>
    %529 = vector.extract_strided_slice %521 {offsets = [0, 96], sizes = [2, 32], strides = [1, 1]} : vector<2x128xf32> to vector<2x32xf32>
    %530 = arith.mulf %523, %486 : vector<2x32xf32>
    %531 = arith.mulf %522, %528 : vector<2x32xf32>
    %532 = arith.addf %530, %531 : vector<2x32xf32>
    %533 = math.tanh %532 : vector<2x32xf32>
    %534 = arith.mulf %529, %533 : vector<2x32xf32>
    %cst_142 = arith.constant dense<0.000000e+00> : vector<2x128xf32>
    %535 = tpu.matmul %534, %6, %cst_142 {dimension_numbers = #tpu.dot_dimension_numbers<[1], [0], [0], [1], [0, 0, 1, 1], [], []>} : vector<2x32xf32>, vector<32x128xf32>, vector<2x128xf32> -> vector<2x128xf32>
    %cst_143 = arith.constant dense<0.000000e+00> : vector<2x128xf32>
    %536 = tpu.matmul %510, %7, %cst_143 {dimension_numbers = #tpu.dot_dimension_numbers<[1], [0], [0], [1], [0, 0, 1, 1], [], []>} : vector<2x32xf32>, vector<32x128xf32>, vector<2x128xf32> -> vector<2x128xf32>
    %537 = arith.addf %535, %536 : vector<2x128xf32>
    %538 = arith.addf %537, %17 : vector<2x128xf32>
    %539 = arith.negf %538 : vector<2x128xf32>
    %540 = math.exp %539 : vector<2x128xf32>
    %cst_144 = arith.constant 1.000000e+00 : f32
    %541 = vector.broadcast %cst_144 : f32 to vector<2x128xf32>
    %542 = arith.addf %541, %540 : vector<2x128xf32>
    %543 = arith.divf %541, %542 : vector<2x128xf32>
    %544 = vector.extract_strided_slice %543 {offsets = [0, 0], sizes = [2, 32], strides = [1, 1]} : vector<2x128xf32> to vector<2x32xf32>
    %545 = vector.extract_strided_slice %543 {offsets = [0, 32], sizes = [2, 32], strides = [1, 1]} : vector<2x128xf32> to vector<2x32xf32>
    %546 = vector.extract_strided_slice %543 {offsets = [0, 64], sizes = [2, 32], strides = [1, 1]} : vector<2x128xf32> to vector<2x32xf32>
    %cst_145 = arith.constant 2.000000e+00 : f32
    %547 = vector.broadcast %cst_145 : f32 to vector<2x32xf32>
    %548 = arith.mulf %547, %546 : vector<2x32xf32>
    %cst_146 = arith.constant 1.000000e+00 : f32
    %549 = vector.broadcast %cst_146 : f32 to vector<2x32xf32>
    %550 = arith.subf %548, %549 : vector<2x32xf32>
    %551 = vector.extract_strided_slice %543 {offsets = [0, 96], sizes = [2, 32], strides = [1, 1]} : vector<2x128xf32> to vector<2x32xf32>
    %552 = arith.mulf %545, %508 : vector<2x32xf32>
    %553 = arith.mulf %544, %550 : vector<2x32xf32>
    %554 = arith.addf %552, %553 : vector<2x32xf32>
    %555 = math.tanh %554 : vector<2x32xf32>
    %556 = arith.mulf %551, %555 : vector<2x32xf32>
    %cst_147 = arith.constant dense<0.000000e+00> : vector<2x4xf32>
    %557 = tpu.matmul %556, %8, %cst_147 {dimension_numbers = #tpu.dot_dimension_numbers<[1], [0], [0], [1], [0, 0, 1, 1], [], []>} : vector<2x32xf32>, vector<32x4xf32>, vector<2x4xf32> -> vector<2x4xf32>
    %558 = arith.addf %557, %20 : vector<2x4xf32>
    %cst_148 = arith.constant dense<0.000000e+00> : vector<2x128xf32>
    %559 = tpu.matmul %556, %4, %cst_148 {dimension_numbers = #tpu.dot_dimension_numbers<[1], [0], [0], [1], [0, 0, 1, 1], [], []>} : vector<2x32xf32>, vector<32x128xf32>, vector<2x128xf32> -> vector<2x128xf32>
    %cst_149 = arith.constant dense<0.000000e+00> : vector<2x128xf32>
    %560 = tpu.matmul %534, %5, %cst_149 {dimension_numbers = #tpu.dot_dimension_numbers<[1], [0], [0], [1], [0, 0, 1, 1], [], []>} : vector<2x32xf32>, vector<32x128xf32>, vector<2x128xf32> -> vector<2x128xf32>
    %561 = arith.addf %559, %560 : vector<2x128xf32>
    %562 = arith.addf %561, %14 : vector<2x128xf32>
    %563 = arith.negf %562 : vector<2x128xf32>
    %564 = math.exp %563 : vector<2x128xf32>
    %cst_150 = arith.constant 1.000000e+00 : f32
    %565 = vector.broadcast %cst_150 : f32 to vector<2x128xf32>
    %566 = arith.addf %565, %564 : vector<2x128xf32>
    %567 = arith.divf %565, %566 : vector<2x128xf32>
    %568 = vector.extract_strided_slice %567 {offsets = [0, 0], sizes = [2, 32], strides = [1, 1]} : vector<2x128xf32> to vector<2x32xf32>
    %569 = vector.extract_strided_slice %567 {offsets = [0, 32], sizes = [2, 32], strides = [1, 1]} : vector<2x128xf32> to vector<2x32xf32>
    %570 = vector.extract_strided_slice %567 {offsets = [0, 64], sizes = [2, 32], strides = [1, 1]} : vector<2x128xf32> to vector<2x32xf32>
    %cst_151 = arith.constant 2.000000e+00 : f32
    %571 = vector.broadcast %cst_151 : f32 to vector<2x32xf32>
    %572 = arith.mulf %571, %570 : vector<2x32xf32>
    %cst_152 = arith.constant 1.000000e+00 : f32
    %573 = vector.broadcast %cst_152 : f32 to vector<2x32xf32>
    %574 = arith.subf %572, %573 : vector<2x32xf32>
    %575 = vector.extract_strided_slice %567 {offsets = [0, 96], sizes = [2, 32], strides = [1, 1]} : vector<2x128xf32> to vector<2x32xf32>
    %576 = arith.mulf %569, %532 : vector<2x32xf32>
    %577 = arith.mulf %568, %574 : vector<2x32xf32>
    %578 = arith.addf %576, %577 : vector<2x32xf32>
    %579 = math.tanh %578 : vector<2x32xf32>
    %580 = arith.mulf %575, %579 : vector<2x32xf32>
    %cst_153 = arith.constant dense<0.000000e+00> : vector<2x128xf32>
    %581 = tpu.matmul %580, %6, %cst_153 {dimension_numbers = #tpu.dot_dimension_numbers<[1], [0], [0], [1], [0, 0, 1, 1], [], []>} : vector<2x32xf32>, vector<32x128xf32>, vector<2x128xf32> -> vector<2x128xf32>
    %cst_154 = arith.constant dense<0.000000e+00> : vector<2x128xf32>
    %582 = tpu.matmul %556, %7, %cst_154 {dimension_numbers = #tpu.dot_dimension_numbers<[1], [0], [0], [1], [0, 0, 1, 1], [], []>} : vector<2x32xf32>, vector<32x128xf32>, vector<2x128xf32> -> vector<2x128xf32>
    %583 = arith.addf %581, %582 : vector<2x128xf32>
    %584 = arith.addf %583, %17 : vector<2x128xf32>
    %585 = arith.negf %584 : vector<2x128xf32>
    %586 = math.exp %585 : vector<2x128xf32>
    %cst_155 = arith.constant 1.000000e+00 : f32
    %587 = vector.broadcast %cst_155 : f32 to vector<2x128xf32>
    %588 = arith.addf %587, %586 : vector<2x128xf32>
    %589 = arith.divf %587, %588 : vector<2x128xf32>
    %590 = vector.extract_strided_slice %589 {offsets = [0, 0], sizes = [2, 32], strides = [1, 1]} : vector<2x128xf32> to vector<2x32xf32>
    %591 = vector.extract_strided_slice %589 {offsets = [0, 32], sizes = [2, 32], strides = [1, 1]} : vector<2x128xf32> to vector<2x32xf32>
    %592 = vector.extract_strided_slice %589 {offsets = [0, 64], sizes = [2, 32], strides = [1, 1]} : vector<2x128xf32> to vector<2x32xf32>
    %cst_156 = arith.constant 2.000000e+00 : f32
    %593 = vector.broadcast %cst_156 : f32 to vector<2x32xf32>
    %594 = arith.mulf %593, %592 : vector<2x32xf32>
    %cst_157 = arith.constant 1.000000e+00 : f32
    %595 = vector.broadcast %cst_157 : f32 to vector<2x32xf32>
    %596 = arith.subf %594, %595 : vector<2x32xf32>
    %597 = vector.extract_strided_slice %589 {offsets = [0, 96], sizes = [2, 32], strides = [1, 1]} : vector<2x128xf32> to vector<2x32xf32>
    %598 = arith.mulf %591, %554 : vector<2x32xf32>
    %599 = arith.mulf %590, %596 : vector<2x32xf32>
    %600 = arith.addf %598, %599 : vector<2x32xf32>
    %601 = math.tanh %600 : vector<2x32xf32>
    %602 = arith.mulf %597, %601 : vector<2x32xf32>
    %cst_158 = arith.constant dense<0.000000e+00> : vector<2x4xf32>
    %603 = tpu.matmul %602, %8, %cst_158 {dimension_numbers = #tpu.dot_dimension_numbers<[1], [0], [0], [1], [0, 0, 1, 1], [], []>} : vector<2x32xf32>, vector<32x4xf32>, vector<2x4xf32> -> vector<2x4xf32>
    %604 = arith.addf %603, %20 : vector<2x4xf32>
    %cst_159 = arith.constant dense<0.000000e+00> : vector<2x128xf32>
    %605 = tpu.matmul %602, %4, %cst_159 {dimension_numbers = #tpu.dot_dimension_numbers<[1], [0], [0], [1], [0, 0, 1, 1], [], []>} : vector<2x32xf32>, vector<32x128xf32>, vector<2x128xf32> -> vector<2x128xf32>
    %cst_160 = arith.constant dense<0.000000e+00> : vector<2x128xf32>
    %606 = tpu.matmul %580, %5, %cst_160 {dimension_numbers = #tpu.dot_dimension_numbers<[1], [0], [0], [1], [0, 0, 1, 1], [], []>} : vector<2x32xf32>, vector<32x128xf32>, vector<2x128xf32> -> vector<2x128xf32>
    %607 = arith.addf %605, %606 : vector<2x128xf32>
    %608 = arith.addf %607, %14 : vector<2x128xf32>
    %609 = arith.negf %608 : vector<2x128xf32>
    %610 = math.exp %609 : vector<2x128xf32>
    %cst_161 = arith.constant 1.000000e+00 : f32
    %611 = vector.broadcast %cst_161 : f32 to vector<2x128xf32>
    %612 = arith.addf %611, %610 : vector<2x128xf32>
    %613 = arith.divf %611, %612 : vector<2x128xf32>
    %614 = vector.extract_strided_slice %613 {offsets = [0, 0], sizes = [2, 32], strides = [1, 1]} : vector<2x128xf32> to vector<2x32xf32>
    %615 = vector.extract_strided_slice %613 {offsets = [0, 32], sizes = [2, 32], strides = [1, 1]} : vector<2x128xf32> to vector<2x32xf32>
    %616 = vector.extract_strided_slice %613 {offsets = [0, 64], sizes = [2, 32], strides = [1, 1]} : vector<2x128xf32> to vector<2x32xf32>
    %cst_162 = arith.constant 2.000000e+00 : f32
    %617 = vector.broadcast %cst_162 : f32 to vector<2x32xf32>
    %618 = arith.mulf %617, %616 : vector<2x32xf32>
    %cst_163 = arith.constant 1.000000e+00 : f32
    %619 = vector.broadcast %cst_163 : f32 to vector<2x32xf32>
    %620 = arith.subf %618, %619 : vector<2x32xf32>
    %621 = vector.extract_strided_slice %613 {offsets = [0, 96], sizes = [2, 32], strides = [1, 1]} : vector<2x128xf32> to vector<2x32xf32>
    %622 = arith.mulf %615, %578 : vector<2x32xf32>
    %623 = arith.mulf %614, %620 : vector<2x32xf32>
    %624 = arith.addf %622, %623 : vector<2x32xf32>
    %625 = math.tanh %624 : vector<2x32xf32>
    %626 = arith.mulf %621, %625 : vector<2x32xf32>
    %cst_164 = arith.constant dense<0.000000e+00> : vector<2x128xf32>
    %627 = tpu.matmul %626, %6, %cst_164 {dimension_numbers = #tpu.dot_dimension_numbers<[1], [0], [0], [1], [0, 0, 1, 1], [], []>} : vector<2x32xf32>, vector<32x128xf32>, vector<2x128xf32> -> vector<2x128xf32>
    %cst_165 = arith.constant dense<0.000000e+00> : vector<2x128xf32>
    %628 = tpu.matmul %602, %7, %cst_165 {dimension_numbers = #tpu.dot_dimension_numbers<[1], [0], [0], [1], [0, 0, 1, 1], [], []>} : vector<2x32xf32>, vector<32x128xf32>, vector<2x128xf32> -> vector<2x128xf32>
    %629 = arith.addf %627, %628 : vector<2x128xf32>
    %630 = arith.addf %629, %17 : vector<2x128xf32>
    %631 = arith.negf %630 : vector<2x128xf32>
    %632 = math.exp %631 : vector<2x128xf32>
    %cst_166 = arith.constant 1.000000e+00 : f32
    %633 = vector.broadcast %cst_166 : f32 to vector<2x128xf32>
    %634 = arith.addf %633, %632 : vector<2x128xf32>
    %635 = arith.divf %633, %634 : vector<2x128xf32>
    %636 = vector.extract_strided_slice %635 {offsets = [0, 0], sizes = [2, 32], strides = [1, 1]} : vector<2x128xf32> to vector<2x32xf32>
    %637 = vector.extract_strided_slice %635 {offsets = [0, 32], sizes = [2, 32], strides = [1, 1]} : vector<2x128xf32> to vector<2x32xf32>
    %638 = vector.extract_strided_slice %635 {offsets = [0, 64], sizes = [2, 32], strides = [1, 1]} : vector<2x128xf32> to vector<2x32xf32>
    %cst_167 = arith.constant 2.000000e+00 : f32
    %639 = vector.broadcast %cst_167 : f32 to vector<2x32xf32>
    %640 = arith.mulf %639, %638 : vector<2x32xf32>
    %cst_168 = arith.constant 1.000000e+00 : f32
    %641 = vector.broadcast %cst_168 : f32 to vector<2x32xf32>
    %642 = arith.subf %640, %641 : vector<2x32xf32>
    %643 = vector.extract_strided_slice %635 {offsets = [0, 96], sizes = [2, 32], strides = [1, 1]} : vector<2x128xf32> to vector<2x32xf32>
    %644 = arith.mulf %637, %600 : vector<2x32xf32>
    %645 = arith.mulf %636, %642 : vector<2x32xf32>
    %646 = arith.addf %644, %645 : vector<2x32xf32>
    %647 = math.tanh %646 : vector<2x32xf32>
    %648 = arith.mulf %643, %647 : vector<2x32xf32>
    %cst_169 = arith.constant dense<0.000000e+00> : vector<2x4xf32>
    %649 = tpu.matmul %648, %8, %cst_169 {dimension_numbers = #tpu.dot_dimension_numbers<[1], [0], [0], [1], [0, 0, 1, 1], [], []>} : vector<2x32xf32>, vector<32x4xf32>, vector<2x4xf32> -> vector<2x4xf32>
    %650 = arith.addf %649, %20 : vector<2x4xf32>
    %cst_170 = arith.constant dense<0.000000e+00> : vector<2x128xf32>
    %651 = tpu.matmul %648, %4, %cst_170 {dimension_numbers = #tpu.dot_dimension_numbers<[1], [0], [0], [1], [0, 0, 1, 1], [], []>} : vector<2x32xf32>, vector<32x128xf32>, vector<2x128xf32> -> vector<2x128xf32>
    %cst_171 = arith.constant dense<0.000000e+00> : vector<2x128xf32>
    %652 = tpu.matmul %626, %5, %cst_171 {dimension_numbers = #tpu.dot_dimension_numbers<[1], [0], [0], [1], [0, 0, 1, 1], [], []>} : vector<2x32xf32>, vector<32x128xf32>, vector<2x128xf32> -> vector<2x128xf32>
    %653 = arith.addf %651, %652 : vector<2x128xf32>
    %654 = arith.addf %653, %14 : vector<2x128xf32>
    %655 = arith.negf %654 : vector<2x128xf32>
    %656 = math.exp %655 : vector<2x128xf32>
    %cst_172 = arith.constant 1.000000e+00 : f32
    %657 = vector.broadcast %cst_172 : f32 to vector<2x128xf32>
    %658 = arith.addf %657, %656 : vector<2x128xf32>
    %659 = arith.divf %657, %658 : vector<2x128xf32>
    %660 = vector.extract_strided_slice %659 {offsets = [0, 0], sizes = [2, 32], strides = [1, 1]} : vector<2x128xf32> to vector<2x32xf32>
    %661 = vector.extract_strided_slice %659 {offsets = [0, 32], sizes = [2, 32], strides = [1, 1]} : vector<2x128xf32> to vector<2x32xf32>
    %662 = vector.extract_strided_slice %659 {offsets = [0, 64], sizes = [2, 32], strides = [1, 1]} : vector<2x128xf32> to vector<2x32xf32>
    %cst_173 = arith.constant 2.000000e+00 : f32
    %663 = vector.broadcast %cst_173 : f32 to vector<2x32xf32>
    %664 = arith.mulf %663, %662 : vector<2x32xf32>
    %cst_174 = arith.constant 1.000000e+00 : f32
    %665 = vector.broadcast %cst_174 : f32 to vector<2x32xf32>
    %666 = arith.subf %664, %665 : vector<2x32xf32>
    %667 = vector.extract_strided_slice %659 {offsets = [0, 96], sizes = [2, 32], strides = [1, 1]} : vector<2x128xf32> to vector<2x32xf32>
    %668 = arith.mulf %661, %624 : vector<2x32xf32>
    %669 = arith.mulf %660, %666 : vector<2x32xf32>
    %670 = arith.addf %668, %669 : vector<2x32xf32>
    %671 = math.tanh %670 : vector<2x32xf32>
    %672 = arith.mulf %667, %671 : vector<2x32xf32>
    %cst_175 = arith.constant dense<0.000000e+00> : vector<2x128xf32>
    %673 = tpu.matmul %672, %6, %cst_175 {dimension_numbers = #tpu.dot_dimension_numbers<[1], [0], [0], [1], [0, 0, 1, 1], [], []>} : vector<2x32xf32>, vector<32x128xf32>, vector<2x128xf32> -> vector<2x128xf32>
    %cst_176 = arith.constant dense<0.000000e+00> : vector<2x128xf32>
    %674 = tpu.matmul %648, %7, %cst_176 {dimension_numbers = #tpu.dot_dimension_numbers<[1], [0], [0], [1], [0, 0, 1, 1], [], []>} : vector<2x32xf32>, vector<32x128xf32>, vector<2x128xf32> -> vector<2x128xf32>
    %675 = arith.addf %673, %674 : vector<2x128xf32>
    %676 = arith.addf %675, %17 : vector<2x128xf32>
    %677 = arith.negf %676 : vector<2x128xf32>
    %678 = math.exp %677 : vector<2x128xf32>
    %cst_177 = arith.constant 1.000000e+00 : f32
    %679 = vector.broadcast %cst_177 : f32 to vector<2x128xf32>
    %680 = arith.addf %679, %678 : vector<2x128xf32>
    %681 = arith.divf %679, %680 : vector<2x128xf32>
    %682 = vector.extract_strided_slice %681 {offsets = [0, 0], sizes = [2, 32], strides = [1, 1]} : vector<2x128xf32> to vector<2x32xf32>
    %683 = vector.extract_strided_slice %681 {offsets = [0, 32], sizes = [2, 32], strides = [1, 1]} : vector<2x128xf32> to vector<2x32xf32>
    %684 = vector.extract_strided_slice %681 {offsets = [0, 64], sizes = [2, 32], strides = [1, 1]} : vector<2x128xf32> to vector<2x32xf32>
    %cst_178 = arith.constant 2.000000e+00 : f32
    %685 = vector.broadcast %cst_178 : f32 to vector<2x32xf32>
    %686 = arith.mulf %685, %684 : vector<2x32xf32>
    %cst_179 = arith.constant 1.000000e+00 : f32
    %687 = vector.broadcast %cst_179 : f32 to vector<2x32xf32>
    %688 = arith.subf %686, %687 : vector<2x32xf32>
    %689 = vector.extract_strided_slice %681 {offsets = [0, 96], sizes = [2, 32], strides = [1, 1]} : vector<2x128xf32> to vector<2x32xf32>
    %690 = arith.mulf %683, %646 : vector<2x32xf32>
    %691 = arith.mulf %682, %688 : vector<2x32xf32>
    %692 = arith.addf %690, %691 : vector<2x32xf32>
    %693 = math.tanh %692 : vector<2x32xf32>
    %694 = arith.mulf %689, %693 : vector<2x32xf32>
    %cst_180 = arith.constant dense<0.000000e+00> : vector<2x4xf32>
    %695 = tpu.matmul %694, %8, %cst_180 {dimension_numbers = #tpu.dot_dimension_numbers<[1], [0], [0], [1], [0, 0, 1, 1], [], []>} : vector<2x32xf32>, vector<32x4xf32>, vector<2x4xf32> -> vector<2x4xf32>
    %696 = arith.addf %695, %20 : vector<2x4xf32>
    %cst_181 = arith.constant dense<0.000000e+00> : vector<2x128xf32>
    %697 = tpu.matmul %694, %4, %cst_181 {dimension_numbers = #tpu.dot_dimension_numbers<[1], [0], [0], [1], [0, 0, 1, 1], [], []>} : vector<2x32xf32>, vector<32x128xf32>, vector<2x128xf32> -> vector<2x128xf32>
    %cst_182 = arith.constant dense<0.000000e+00> : vector<2x128xf32>
    %698 = tpu.matmul %672, %5, %cst_182 {dimension_numbers = #tpu.dot_dimension_numbers<[1], [0], [0], [1], [0, 0, 1, 1], [], []>} : vector<2x32xf32>, vector<32x128xf32>, vector<2x128xf32> -> vector<2x128xf32>
    %699 = arith.addf %697, %698 : vector<2x128xf32>
    %700 = arith.addf %699, %14 : vector<2x128xf32>
    %701 = arith.negf %700 : vector<2x128xf32>
    %702 = math.exp %701 : vector<2x128xf32>
    %cst_183 = arith.constant 1.000000e+00 : f32
    %703 = vector.broadcast %cst_183 : f32 to vector<2x128xf32>
    %704 = arith.addf %703, %702 : vector<2x128xf32>
    %705 = arith.divf %703, %704 : vector<2x128xf32>
    %706 = vector.extract_strided_slice %705 {offsets = [0, 0], sizes = [2, 32], strides = [1, 1]} : vector<2x128xf32> to vector<2x32xf32>
    %707 = vector.extract_strided_slice %705 {offsets = [0, 32], sizes = [2, 32], strides = [1, 1]} : vector<2x128xf32> to vector<2x32xf32>
    %708 = vector.extract_strided_slice %705 {offsets = [0, 64], sizes = [2, 32], strides = [1, 1]} : vector<2x128xf32> to vector<2x32xf32>
    %cst_184 = arith.constant 2.000000e+00 : f32
    %709 = vector.broadcast %cst_184 : f32 to vector<2x32xf32>
    %710 = arith.mulf %709, %708 : vector<2x32xf32>
    %cst_185 = arith.constant 1.000000e+00 : f32
    %711 = vector.broadcast %cst_185 : f32 to vector<2x32xf32>
    %712 = arith.subf %710, %711 : vector<2x32xf32>
    %713 = vector.extract_strided_slice %705 {offsets = [0, 96], sizes = [2, 32], strides = [1, 1]} : vector<2x128xf32> to vector<2x32xf32>
    %714 = arith.mulf %707, %670 : vector<2x32xf32>
    %715 = arith.mulf %706, %712 : vector<2x32xf32>
    %716 = arith.addf %714, %715 : vector<2x32xf32>
    %717 = math.tanh %716 : vector<2x32xf32>
    %718 = arith.mulf %713, %717 : vector<2x32xf32>
    %cst_186 = arith.constant dense<0.000000e+00> : vector<2x128xf32>
    %719 = tpu.matmul %718, %6, %cst_186 {dimension_numbers = #tpu.dot_dimension_numbers<[1], [0], [0], [1], [0, 0, 1, 1], [], []>} : vector<2x32xf32>, vector<32x128xf32>, vector<2x128xf32> -> vector<2x128xf32>
    %cst_187 = arith.constant dense<0.000000e+00> : vector<2x128xf32>
    %720 = tpu.matmul %694, %7, %cst_187 {dimension_numbers = #tpu.dot_dimension_numbers<[1], [0], [0], [1], [0, 0, 1, 1], [], []>} : vector<2x32xf32>, vector<32x128xf32>, vector<2x128xf32> -> vector<2x128xf32>
    %721 = arith.addf %719, %720 : vector<2x128xf32>
    %722 = arith.addf %721, %17 : vector<2x128xf32>
    %723 = arith.negf %722 : vector<2x128xf32>
    %724 = math.exp %723 : vector<2x128xf32>
    %cst_188 = arith.constant 1.000000e+00 : f32
    %725 = vector.broadcast %cst_188 : f32 to vector<2x128xf32>
    %726 = arith.addf %725, %724 : vector<2x128xf32>
    %727 = arith.divf %725, %726 : vector<2x128xf32>
    %728 = vector.extract_strided_slice %727 {offsets = [0, 0], sizes = [2, 32], strides = [1, 1]} : vector<2x128xf32> to vector<2x32xf32>
    %729 = vector.extract_strided_slice %727 {offsets = [0, 32], sizes = [2, 32], strides = [1, 1]} : vector<2x128xf32> to vector<2x32xf32>
    %730 = vector.extract_strided_slice %727 {offsets = [0, 64], sizes = [2, 32], strides = [1, 1]} : vector<2x128xf32> to vector<2x32xf32>
    %cst_189 = arith.constant 2.000000e+00 : f32
    %731 = vector.broadcast %cst_189 : f32 to vector<2x32xf32>
    %732 = arith.mulf %731, %730 : vector<2x32xf32>
    %cst_190 = arith.constant 1.000000e+00 : f32
    %733 = vector.broadcast %cst_190 : f32 to vector<2x32xf32>
    %734 = arith.subf %732, %733 : vector<2x32xf32>
    %735 = vector.extract_strided_slice %727 {offsets = [0, 96], sizes = [2, 32], strides = [1, 1]} : vector<2x128xf32> to vector<2x32xf32>
    %736 = arith.mulf %729, %692 : vector<2x32xf32>
    %737 = arith.mulf %728, %734 : vector<2x32xf32>
    %738 = arith.addf %736, %737 : vector<2x32xf32>
    %739 = math.tanh %738 : vector<2x32xf32>
    %740 = arith.mulf %735, %739 : vector<2x32xf32>
    %cst_191 = arith.constant dense<0.000000e+00> : vector<2x4xf32>
    %741 = tpu.matmul %740, %8, %cst_191 {dimension_numbers = #tpu.dot_dimension_numbers<[1], [0], [0], [1], [0, 0, 1, 1], [], []>} : vector<2x32xf32>, vector<32x4xf32>, vector<2x4xf32> -> vector<2x4xf32>
    %742 = arith.addf %741, %20 : vector<2x4xf32>
    %743 = tpu.concatenate %420, %466, %512, %558, %604, %650, %696, %742 in 1 : vector<2x4xf32>, vector<2x4xf32>, vector<2x4xf32>, vector<2x4xf32>, vector<2x4xf32>, vector<2x4xf32>, vector<2x4xf32>, vector<2x4xf32> -> vector<2x32xf32>
    %c0_192 = arith.constant 0 : index
    %c0_193 = arith.constant 0 : index
    %744 = vector.load %arg15[%c0_192, %c0_193] : memref<2x32xf32, #tpu.memory_space<vmem>>, vector<2x32xf32>
    tpu.vector_store %arg15[%c0_192, %c0_193], %743 {strides = array<i32>} : memref<2x32xf32, #tpu.memory_space<vmem>>, vector<2x32xf32>,
    return
  }
  func.func @transform_0(%arg0: i32) -> (i32, i32) {
    %c0_i32 = arith.constant 0 : i32
    %c0_i32_0 = arith.constant 0 : i32
    return %arg0, %c0_i32 : i32, i32
  }
  func.func @transform_1(%arg0: i32) -> (i32, i32) {
    %c0_i32 = arith.constant 0 : i32
    %c0_i32_0 = arith.constant 0 : i32
    %c0_i32_1 = arith.constant 0 : i32
    return %c0_i32, %c0_i32_0 : i32, i32
  }
  func.func @transform_2(%arg0: i32) -> (i32, i32) {
    %c0_i32 = arith.constant 0 : i32
    %c0_i32_0 = arith.constant 0 : i32
    %c0_i32_1 = arith.constant 0 : i32
    return %c0_i32, %c0_i32_0 : i32, i32
  }
  func.func @transform_3(%arg0: i32) -> (i32, i32) {
    %c0_i32 = arith.constant 0 : i32
    %c0_i32_0 = arith.constant 0 : i32
    %c0_i32_1 = arith.constant 0 : i32
    return %c0_i32, %c0_i32_0 : i32, i32
  }
  func.func @transform_4(%arg0: i32) -> (i32, i32) {
    %c0_i32 = arith.constant 0 : i32
    %c0_i32_0 = arith.constant 0 : i32
    %c0_i32_1 = arith.constant 0 : i32
    return %c0_i32, %c0_i32_0 : i32, i32
  }
  func.func @transform_5(%arg0: i32) -> (i32, i32) {
    %c0_i32 = arith.constant 0 : i32
    %c0_i32_0 = arith.constant 0 : i32
    %c0_i32_1 = arith.constant 0 : i32
    return %c0_i32, %c0_i32_0 : i32, i32
  }
  func.func @transform_6(%arg0: i32) -> (i32, i32) {
    %c0_i32 = arith.constant 0 : i32
    %c0_i32_0 = arith.constant 0 : i32
    %c0_i32_1 = arith.constant 0 : i32
    return %c0_i32, %c0_i32_0 : i32, i32
  }
  func.func @transform_7(%arg0: i32) -> (i32, i32) {
    %c0_i32 = arith.constant 0 : i32
    %c0_i32_0 = arith.constant 0 : i32
    %c0_i32_1 = arith.constant 0 : i32
    return %c0_i32, %c0_i32_0 : i32, i32
  }
  func.func @transform_8(%arg0: i32) -> (i32, i32) {
    %c0_i32 = arith.constant 0 : i32
    %c0_i32_0 = arith.constant 0 : i32
    %c0_i32_1 = arith.constant 0 : i32
    return %c0_i32, %c0_i32_0 : i32, i32
  }
  func.func @transform_9(%arg0: i32) -> (i32, i32) {
    %c0_i32 = arith.constant 0 : i32
    %c0_i32_0 = arith.constant 0 : i32
    %c0_i32_1 = arith.constant 0 : i32
    return %c0_i32, %c0_i32_0 : i32, i32
  }
  func.func @transform_10(%arg0: i32) -> (i32, i32) {
    %c0_i32 = arith.constant 0 : i32
    %c0_i32_0 = arith.constant 0 : i32
    %c0_i32_1 = arith.constant 0 : i32
    return %c0_i32, %c0_i32_0 : i32, i32
  }
  func.func @transform_11(%arg0: i32) -> (i32, i32) {
    %c0_i32 = arith.constant 0 : i32
    %c0_i32_0 = arith.constant 0 : i32
    %c0_i32_1 = arith.constant 0 : i32
    return %c0_i32, %c0_i32_0 : i32, i32
  }
  func.func @transform_12(%arg0: i32) -> (i32, i32) {
    %c0_i32 = arith.constant 0 : i32
    %c0_i32_0 = arith.constant 0 : i32
    %c0_i32_1 = arith.constant 0 : i32
    return %c0_i32, %c0_i32_0 : i32, i32
  }
  func.func @transform_13(%arg0: i32) -> (i32, i32) {
    %c0_i32 = arith.constant 0 : i32
    %c0_i32_0 = arith.constant 0 : i32
    %c0_i32_1 = arith.constant 0 : i32
    return %c0_i32, %c0_i32_0 : i32, i32
  }
  func.func @transform_14(%arg0: i32) -> (i32, i32) {
    %c0_i32 = arith.constant 0 : i32
    %c0_i32_0 = arith.constant 0 : i32
    return %arg0, %c0_i32 : i32, i32
  }
}

</mosaic_0001>

<llo_original>
// kernel: tpu_custom_call.1
$region0: #{tpu_custom_call.1}
  #allocation0 [shape = 'u32[]', space=smem, size = 0x4, offset = 0x4, fixed_abs, tag = 'smem constant byte address 0x4 - core index']
  #allocation1 [shape = 'u32[72,128]{1,0:T(1,128)}', space=vmem, size = 0x9000, scoped, tag = 'internal scratch']
  %s0 = inlined_call_operand.vmem [shape: f32[16,4], index: 0, kind: input, shape index: {}]
  %s1 = inlined_call_operand.vmem [shape: f32[4,128], index: 1, kind: input, shape index: {}]
  %s2 = inlined_call_operand.vmem [shape: f32[32,128], index: 2, kind: input, shape index: {}]
  %s3 = inlined_call_operand.hbm [shape: f32[32,128], index: 3, kind: input, shape index: {}]
  %s4 = inlined_call_operand.hbm [shape: f32[32,128], index: 4, kind: input, shape index: {}]
  %s5 = inlined_call_operand.vmem [shape: f32[2,128], index: 5, kind: input, shape index: {}]
  %s6 = inlined_call_operand.vmem [shape: f32[4,128], index: 6, kind: input, shape index: {}]
  %s7 = inlined_call_operand.hbm [shape: f32[32,128], index: 7, kind: input, shape index: {}]
  %s8 = inlined_call_operand.hbm [shape: f32[32,128], index: 8, kind: input, shape index: {}]
  %s9 = inlined_call_operand.hbm [shape: f32[32,128], index: 9, kind: input, shape index: {}]
  %s10 = inlined_call_operand.hbm [shape: f32[32,128], index: 10, kind: input, shape index: {}]
  %s11 = inlined_call_operand.vmem [shape: f32[3,128], index: 11, kind: input, shape index: {}]
  %s12 = inlined_call_operand.vmem [shape: f32[32,4], index: 12, kind: input, shape index: {}]
  %s13 = inlined_call_operand.vmem [shape: f32[1,4], index: 13, kind: input, shape index: {}]
  %s14 = inlined_call_operand.hbm [shape: f32[2,32], index: 14, kind: output, shape index: {}]
  %s15 = sld [smem:[#allocation0]]
  $region90: #{tpu_custom_call.1} parent=0
    _
  %s17 = ssub.s32 1, %s15
  %s18 = scalar_select 0, %s17, %s15
  $region1: #{tpu_custom_call.1} parent=0
    #allocation2 [shape = 'u8[16384]{0}', space=vmem, size = 0x4000, scoped, tag = 'input window, operand 3, single buffered']
    #allocation3 [shape = 's32[1]{0}', space=sflag, size = 0x4, scoped, tag = 'scoped memory for tpu_custom_call.1']
    #allocation4 [shape = 's32[1]{0}', space=sflag, size = 0x4, scoped, tag = 'scoped memory for tpu_custom_call.1']
    #allocation5 [shape = 'u8[16384]{0}', space=vmem, size = 0x4000, scoped, tag = 'input window, operand 4, single buffered']
    #allocation6 [shape = 's32[1]{0}', space=sflag, size = 0x4, scoped, tag = 'scoped memory for tpu_custom_call.1']
    #allocation7 [shape = 'u8[16384]{0}', space=vmem, size = 0x4000, scoped, tag = 'input window, operand 7, single buffered']
    #allocation8 [shape = 'u8[16384]{0}', space=vmem, size = 0x4000, scoped, tag = 'input window, operand 8, single buffered']
    #allocation9 [shape = 's32[1]{0}', space=sflag, size = 0x4, scoped, tag = 'scoped memory for tpu_custom_call.1']
    #allocation10 [shape = 'u8[16384]{0}', space=vmem, size = 0x4000, scoped, tag = 'input window, operand 9, single buffered']
    #allocation11 [shape = 'u8[16384]{0}', space=vmem, size = 0x4000, scoped, tag = 'input window, operand 10, single buffered']
    #allocation12 [shape = 's32[1]{0}', space=sflag, size = 0x4, scoped, tag = 'scoped memory for tpu_custom_call.1']
    #allocation13 [shape = 'u8[1024]{0}', space=vmem, size = 0x400, scoped, tag = 'output window, operand 0, single buffered']
    %19 = vsyncpa [#allocation3], 0
    %20 = vsyncpa [#allocation6], 0
    %21 = vsyncpa [#allocation9], 0
    %22 = vsyncpa [#allocation12], 0
    %23 = vsyncpa [#allocation4], 0
    // Predicated region
    $region2: #{tpu_custom_call.1} parent=1 // pred_check
      _
    $region3: #{tpu_custom_call.1} parent=1 // pred_check_branch
      %25 = sbr.rel (0) target = $region5
    $region4: #{tpu_custom_call.1} parent=1 // pred_region
      _
    $region5: #{tpu_custom_call.1} parent=1 // pred_fallthru
      _
    // Predicated region
    $region6: #{tpu_custom_call.1} parent=1 // pred_check
      _
    $region7: #{tpu_custom_call.1} parent=1 // pred_check_branch
      %27 = sbr.rel (0) target = $region9
    $region8: #{tpu_custom_call.1} parent=1 // pred_region
      _
    $region9: #{tpu_custom_call.1} parent=1 // pred_fallthru
      _
    // Predicated region
    $region10: #{tpu_custom_call.1} parent=1 // pred_check
      _
    $region11: #{tpu_custom_call.1} parent=1 // pred_check_branch
      %29 = sbr.rel (0) target = $region13
    $region12: #{tpu_custom_call.1} parent=1 // pred_region
      _
    $region13: #{tpu_custom_call.1} parent=1 // pred_fallthru
      _
    // Predicated region
    $region14: #{tpu_custom_call.1} parent=1 // pred_check
      _
    $region15: #{tpu_custom_call.1} parent=1 // pred_check_branch
      %31 = sbr.rel (0) target = $region17
    $region16: #{tpu_custom_call.1} parent=1 // pred_region
      %33 = vsyncadd [#allocation3], 0
      %s34 = sshll.u32 %s3, 4
      %s35 = int_to_ptr.hbm [resolvable:$true] %s34
      %s36 = sshll.u32 [#allocation2], 4
      %s37 = int_to_ptr.vmem [resolvable:$true] %s36
      %42 = dma.hbm_to_vmem [thread:$0]  %s35, 512, %s37, [#allocation3], 128, 128, 8
    $region17: #{tpu_custom_call.1} parent=1 // pred_fallthru
      _
    // Predicated region
    $region18: #{tpu_custom_call.1} parent=1 // pred_check
      _
    $region19: #{tpu_custom_call.1} parent=1 // pred_check_branch
      %44 = sbr.rel (0) target = $region21
    $region20: #{tpu_custom_call.1} parent=1 // pred_region
      %46 = vsyncadd [#allocation6], 0
      %s47 = sshll.u32 %s4, 4
      %s48 = int_to_ptr.hbm [resolvable:$true] %s47
      %s49 = sshll.u32 [#allocation5], 4
      %s50 = int_to_ptr.vmem [resolvable:$true] %s49
      %55 = dma.hbm_to_vmem [thread:$0]  %s48, 512, %s50, [#allocation6], 128, 128, 8
    $region21: #{tpu_custom_call.1} parent=1 // pred_fallthru
      _
    // Predicated region
    $region22: #{tpu_custom_call.1} parent=1 // pred_check
      _
    $region23: #{tpu_custom_call.1} parent=1 // pred_check_branch
      %57 = sbr.rel (0) target = $region25
    $region24: #{tpu_custom_call.1} parent=1 // pred_region
      _
    $region25: #{tpu_custom_call.1} parent=1 // pred_fallthru
      _
    // Predicated region
    $region26: #{tpu_custom_call.1} parent=1 // pred_check
      _
    $region27: #{tpu_custom_call.1} parent=1 // pred_check_branch
      %59 = sbr.rel (0) target = $region29
    $region28: #{tpu_custom_call.1} parent=1 // pred_region
      _
    $region29: #{tpu_custom_call.1} parent=1 // pred_fallthru
      _
    // Predicated region
    $region30: #{tpu_custom_call.1} parent=1 // pred_check
      _
    $region31: #{tpu_custom_call.1} parent=1 // pred_check_branch
      %61 = sbr.rel (0) target = $region33
    $region32: #{tpu_custom_call.1} parent=1 // pred_region
      %63 = vsyncadd [#allocation6], 0
      %s64 = sshll.u32 %s7, 4
      %s65 = int_to_ptr.hbm [resolvable:$true] %s64
      %s66 = sshll.u32 [#allocation7], 4
      %s67 = int_to_ptr.vmem [resolvable:$true] %s66
      %72 = dma.hbm_to_vmem [thread:$0]  %s65, 512, %s67, [#allocation6], 128, 128, 8
    $region33: #{tpu_custom_call.1} parent=1 // pred_fallthru
      _
    // Predicated region
    $region34: #{tpu_custom_call.1} parent=1 // pred_check
      _
    $region35: #{tpu_custom_call.1} parent=1 // pred_check_branch
      %74 = sbr.rel (0) target = $region37
    $region36: #{tpu_custom_call.1} parent=1 // pred_region
      %76 = vsyncadd [#allocation9], 0
      %s77 = sshll.u32 %s8, 4
      %s78 = int_to_ptr.hbm [resolvable:$true] %s77
      %s79 = sshll.u32 [#allocation8], 4
      %s80 = int_to_ptr.vmem [resolvable:$true] %s79
      %85 = dma.hbm_to_vmem [thread:$0]  %s78, 512, %s80, [#allocation9], 128, 128, 8
    $region37: #{tpu_custom_call.1} parent=1 // pred_fallthru
      _
    // Predicated region
    $region38: #{tpu_custom_call.1} parent=1 // pred_check
      _
    $region39: #{tpu_custom_call.1} parent=1 // pred_check_branch
      %87 = sbr.rel (0) target = $region41
    $region40: #{tpu_custom_call.1} parent=1 // pred_region
      %89 = vsyncadd [#allocation9], 0
      %s90 = sshll.u32 %s9, 4
      %s91 = int_to_ptr.hbm [resolvable:$true] %s90
      %s92 = sshll.u32 [#allocation10], 4
      %s93 = int_to_ptr.vmem [resolvable:$true] %s92
      %98 = dma.hbm_to_vmem [thread:$0]  %s91, 512, %s93, [#allocation9], 128, 128, 8
    $region41: #{tpu_custom_call.1} parent=1 // pred_fallthru
      _
    // Predicated region
    $region42: #{tpu_custom_call.1} parent=1 // pred_check
      _
    $region43: #{tpu_custom_call.1} parent=1 // pred_check_branch
      %100 = sbr.rel (0) target = $region45
    $region44: #{tpu_custom_call.1} parent=1 // pred_region
      %102 = vsyncadd [#allocation12], 0
      %s103 = sshll.u32 %s10, 4
      %s104 = int_to_ptr.hbm [resolvable:$true] %s103
      %s105 = sshll.u32 [#allocation11], 4
      %s106 = int_to_ptr.vmem [resolvable:$true] %s105
      %111 = dma.hbm_to_vmem [thread:$0]  %s104, 512, %s106, [#allocation12], 128, 128, 8
    $region45: #{tpu_custom_call.1} parent=1 // pred_fallthru
      _
    // Predicated region
    $region46: #{tpu_custom_call.1} parent=1 // pred_check
      _
    $region47: #{tpu_custom_call.1} parent=1 // pred_check_branch
      %113 = sbr.rel (0) target = $region49
    $region48: #{tpu_custom_call.1} parent=1 // pred_region
      _
    $region49: #{tpu_custom_call.1} parent=1 // pred_fallthru
      _
    // Predicated region
    $region50: #{tpu_custom_call.1} parent=1 // pred_check
      _
    $region51: #{tpu_custom_call.1} parent=1 // pred_check_branch
      %115 = sbr.rel (0) target = $region53
    $region52: #{tpu_custom_call.1} parent=1 // pred_region
      _
    $region53: #{tpu_custom_call.1} parent=1 // pred_fallthru
      _
    // Predicated region
    $region54: #{tpu_custom_call.1} parent=1 // pred_check
      _
    $region55: #{tpu_custom_call.1} parent=1 // pred_check_branch
      %117 = sbr.rel (0) target = $region57
    $region56: #{tpu_custom_call.1} parent=1 // pred_region
      _
    $region57: #{tpu_custom_call.1} parent=1 // pred_fallthru
      _
    // Predicated region
    $region58: #{tpu_custom_call.1} parent=1 // pred_check
      _
    $region59: #{tpu_custom_call.1} parent=1 // pred_check_branch
      %119 = sbr.rel (0) target = $region61
    $region60: #{tpu_custom_call.1} parent=1 // pred_region
      %121 = dma.done [#allocation3], 512
    $region61: #{tpu_custom_call.1} parent=1 // pred_fallthru
      _
    // Predicated region
    $region62: #{tpu_custom_call.1} parent=1 // pred_check
      _
    $region63: #{tpu_custom_call.1} parent=1 // pred_check_branch
      %123 = sbr.rel (0) target = $region65
    $region64: #{tpu_custom_call.1} parent=1 // pred_region
      %125 = dma.done [#allocation6], 512
    $region65: #{tpu_custom_call.1} parent=1 // pred_fallthru
      _
    // Predicated region
    $region66: #{tpu_custom_call.1} parent=1 // pred_check
      _
    $region67: #{tpu_custom_call.1} parent=1 // pred_check_branch
      %127 = sbr.rel (0) target = $region69
    $region68: #{tpu_custom_call.1} parent=1 // pred_region
      %129 = dma.done [#allocation6], 512
    $region69: #{tpu_custom_call.1} parent=1 // pred_fallthru
      _
    // Predicated region
    $region70: #{tpu_custom_call.1} parent=1 // pred_check
      _
    $region71: #{tpu_custom_call.1} parent=1 // pred_check_branch
      %131 = sbr.rel (0) target = $region73
    $region72: #{tpu_custom_call.1} parent=1 // pred_region
      %133 = dma.done [#allocation9], 512
    $region73: #{tpu_custom_call.1} parent=1 // pred_fallthru
      _
    // Predicated region
    $region74: #{tpu_custom_call.1} parent=1 // pred_check
      _
    $region75: #{tpu_custom_call.1} parent=1 // pred_check_branch
      %135 = sbr.rel (0) target = $region77
    $region76: #{tpu_custom_call.1} parent=1 // pred_region
      %137 = dma.done [#allocation9], 512
    $region77: #{tpu_custom_call.1} parent=1 // pred_fallthru
      _
    // Predicated region
    $region78: #{tpu_custom_call.1} parent=1 // pred_check
      _
    $region79: #{tpu_custom_call.1} parent=1 // pred_check_branch
      %139 = sbr.rel (0) target = $region81
    $region80: #{tpu_custom_call.1} parent=1 // pred_region
      %141 = dma.done [#allocation12], 512
    $region81: #{tpu_custom_call.1} parent=1 // pred_fallthru
      _
    %v142 = vld [vmem:[%s0] sm:$0xff]
    %v143 = vld [vmem:[%s0 + $0x8] sm:$0xff]
    %v144 = vld [vmem:[%s2] sm:$0xff]
    %v145 = vld [vmem:[%s2 + $0x8] sm:$0xff]
    %v146 = vld [vmem:[%s2 + $0x10] sm:$0xff]
    %v147 = vld [vmem:[%s2 + $0x18] sm:$0xff]
    %v148 = vld [vmem:[#allocation2] sm:$0xff]
    %v149 = vld [vmem:[#allocation2 + $0x8] sm:$0xff]
    %v150 = vld [vmem:[#allocation2 + $0x10] sm:$0xff]
    %v151 = vld [vmem:[#allocation2 + $0x18] sm:$0xff]
    %v152 = vld [vmem:[#allocation5] sm:$0xff]
    %v153 = vld [vmem:[#allocation5 + $0x8] sm:$0xff]
    %v154 = vld [vmem:[#allocation5 + $0x10] sm:$0xff]
    %v155 = vld [vmem:[#allocation5 + $0x18] sm:$0xff]
    %v156 = vld [vmem:[#allocation7] sm:$0xff]
    %v157 = vld [vmem:[#allocation7 + $0x8] sm:$0xff]
    %v158 = vld [vmem:[#allocation7 + $0x10] sm:$0xff]
    %v159 = vld [vmem:[#allocation7 + $0x18] sm:$0xff]
    %v160 = vld [vmem:[#allocation8] sm:$0xff]
    %v161 = vld [vmem:[#allocation8 + $0x8] sm:$0xff]
    %v162 = vld [vmem:[#allocation8 + $0x10] sm:$0xff]
    %v163 = vld [vmem:[#allocation8 + $0x18] sm:$0xff]
    %v164 = vld [vmem:[#allocation10] sm:$0xff]
    %v165 = vld [vmem:[#allocation10 + $0x8] sm:$0xff]
    %v166 = vld [vmem:[#allocation10 + $0x10] sm:$0xff]
    %v167 = vld [vmem:[#allocation10 + $0x18] sm:$0xff]
    %v168 = vld [vmem:[#allocation11] sm:$0xff]
    %v169 = vld [vmem:[#allocation11 + $0x8] sm:$0xff]
    %v170 = vld [vmem:[#allocation11 + $0x10] sm:$0xff]
    %v171 = vld [vmem:[#allocation11 + $0x18] sm:$0xff]
    %v172 = vld [vmem:[%s12] sm:$0xff]
    %v173 = vld [vmem:[%s12 + $0x8] sm:$0xff]
    %v174 = vld [vmem:[%s12 + $0x10] sm:$0xff]
    %v175 = vld [vmem:[%s12 + $0x18] sm:$0xff]
    %v176 = vld [vmem:[%s5 + $0x1] sm:$0x1]
    %v177 = vperm.slane %v176, 0
    %v178 = vld [vmem:[%s11 + $0x1] sm:$0x1]
    %v179 = vperm.slane %v178, 0
    %v180 = vld [vmem:[%s11 + $0x2] sm:$0x1]
    %v181 = vperm.slane %v180, 0
    %v182 = vld [vmem:[%s13] sm:$0x1]
    %v184 = vperm.slane %v182, 0
    %v186 = vld [vmem:[%s1] sm:$0xf]
    %v187 = vld [vmem:[%s5] sm:$0x1]
    %v188 = vperm.slane %v187, 0
    %vm189 = vcmask 31744
    %v191 = vsel %vm189, %v142, 0
    %v194 = vsel %vm189, %v143, 0
    %vm196 = vcmask 1043456
    %v198 = vsel %vm196, %v186, 0
    %200 = vmatpush.msra.mxu0 0.0
    %201 = vmatpush.msra.mxu0 0.0
    %202 = vmatpush.msra.mxu0 0.0
    %203 = vmatpush.msra.mxu0 0.0
    %204 = vmatpush.msra.mxu0 0.0
    %205 = vmatpush.msra.mxu0 0.0
    %206 = vmatpush.msra.mxu0 0.0
    %207 = vmatpush.msra.mxu0 0.0
    %208 = vmatpush.msra.mxu0 0.0
    %209 = vmatpush.msra.mxu0 0.0
    %210 = vmatpush.msra.mxu0 0.0
    %211 = vmatpush.msra.mxu0 0.0
    %212 = vmatpush.msra.mxu0 0.0
    %213 = vmatpush.msra.mxu0 0.0
    %214 = vmatpush.msra.mxu0 0.0
    %215 = vmatpush.msra.mxu0 %v198
    %216 = vmatmul.f32.gmra.mxu0 %v191
    %v217 = vpop.f32.mrf.mxu0
    %v218 = vadd.f32 %v188, %v217
    %219 = vmatmul.f32.gmra.mxu0 %v194
    %v220 = vpop.f32.mrf.mxu0
    %v221 = vadd.f32 %v188, %v220
    %222 = vdwg.mxu0
    %v223 = vld [vmem:[%s6] sm:$0xf]
    %v224 = vld [vmem:[%s11] sm:$0x1]
    %v225 = vperm.slane %v224, 0
    %v227 = vsel %vm196, %v223, 0
    %229 = vmatpush.msra.mxu0 0.0
    %230 = vmatpush.msra.mxu0 0.0
    %231 = vmatpush.msra.mxu0 0.0
    %232 = vmatpush.msra.mxu0 0.0
    %233 = vmatpush.msra.mxu0 0.0
    %234 = vmatpush.msra.mxu0 0.0
    %235 = vmatpush.msra.mxu0 0.0
    %236 = vmatpush.msra.mxu0 0.0
    %237 = vmatpush.msra.mxu0 0.0
    %238 = vmatpush.msra.mxu0 0.0
    %239 = vmatpush.msra.mxu0 0.0
    %240 = vmatpush.msra.mxu0 0.0
    %241 = vmatpush.msra.mxu0 0.0
    %242 = vmatpush.msra.mxu0 0.0
    %243 = vmatpush.msra.mxu0 0.0
    %244 = vmatpush.msra.mxu0 %v227
    %245 = vmatmul.f32.gmra.mxu0 %v191
    %v246 = vpop.f32.mrf.mxu0
    %v247 = vadd.f32 %v225, %v246
    %248 = vdwg.mxu0
    %vm249 = vcmask 261120
    %v251 = vsel %vm249, 0.0, 0
    %253 = vmatpush.msra.mxu0 0.0
    %254 = vmatpush.msra.mxu0 0.0
    %255 = vmatpush.msra.mxu0 0.0
    %256 = vmatpush.msra.mxu0 0.0
    %257 = vmatpush.msra.mxu0 0.0
    %258 = vmatpush.msra.mxu0 0.0
    %259 = vmatpush.msra.mxu0 0.0
    %260 = vmatpush.msra.mxu0 0.0
    %261 = vmatpush.msra.mxu0 0.0
    %262 = vmatpush.msra.mxu0 0.0
    %263 = vmatpush.msra.mxu0 0.0
    %264 = vmatpush.msra.mxu0 0.0
    %265 = vmatpush.msra.mxu0 %v147
    %266 = vmatpush.msra.mxu0 %v146
    %267 = vmatpush.msra.mxu0 %v145
    %268 = vmatpush.msra.mxu0 %v144
    %269 = vmatmul.f32.gmra.mxu0 %v251
    %v270 = vpop.f32.mrf.mxu0
    %v271 = vadd.f32 0.0, %v270
    %272 = vdwg.mxu0
    %v273 = vadd.f32 %v218, %v271
    %v274 = vxor.u32 %v273, 2147483648
    %v275 = vmul.f32 %v274, 1.442695
    %v276 = vpow.pop %v275
    %v277 = vadd.f32 %v276, 1.0
    %v278 = vrcp.pop %v277
    %v279 = vmul.f32 %v277, %v278
    %v280 = vsub.f32 1.0, %v279
    %v281 = vmul.f32 %v278, %v280
    %v282 = vadd.f32 %v278, %v281
    %vm283 = vweird.f32 %v277
    %vm284 = vweird.f32 %v278
    %vm285 = vmor %vm283, %vm284
    %v286 = vsel %vm285, %v278, %v282
    %v287 = vand.u32 2147483647, %v277
    %vm288 = vcmp.eq.f32.partialorder %v287, 8.507059e+37
    %v289 = vand.u32 %v277, 2147483648
    %v290 = vor.u32 1.1754944e-38, %v289
    %v291 = vsel %vm288, %v290, %v286
    %v292 = vmul.f32 1.0, %v291
    %v293 = vmul.f32 %v292, 2.0
    %v294 = vsub.f32 %v293, 1.0
    %v295 = vmul.f32 %v292, 0.0
    %297 = vrot.lane.b32.xlu0 %v294, 64
    %v298 = vpop.permute.xlu0 %297
    %v300 = vmul.f32 %v292, %v298
    %302 = vrot.lane.b32.xlu0 %v300, 32
    %v303 = vpop.permute.xlu0 %302
    %v305 = vadd.f32 %v295, %v303
    %v306 = vtanh.pop %v305
    %308 = vrot.lane.b32.xlu0 %v306, 64
    %v309 = vpop.permute.xlu0 %308
    %v311 = vmul.f32 %v292, %v309
    %312 = vmatpush.msra.mxu0 0.0
    %313 = vmatpush.msra.mxu0 0.0
    %314 = vmatpush.msra.mxu0 0.0
    %315 = vmatpush.msra.mxu0 0.0
    %316 = vmatpush.msra.mxu0 0.0
    %317 = vmatpush.msra.mxu0 0.0
    %318 = vmatpush.msra.mxu0 0.0
    %319 = vmatpush.msra.mxu0 0.0
    %320 = vmatpush.msra.mxu0 0.0
    %321 = vmatpush.msra.mxu0 0.0
    %322 = vmatpush.msra.mxu0 0.0
    %323 = vmatpush.msra.mxu0 0.0
    %324 = vmatpush.msra.mxu0 %v155
    %325 = vmatpush.msra.mxu0 %v154
    %326 = vmatpush.msra.mxu0 %v153
    %327 = vmatpush.msra.mxu0 %v152
    %328 = vmatmul.f32.gmra.mxu0 %v251
    %v329 = vpop.f32.mrf.mxu0
    %v330 = vadd.f32 0.0, %v329
    %331 = vdwg.mxu0
    %333 = vrot.lane.b32.xlu0 %v311, 32
    %v334 = vpop.permute.xlu0 %333
    %v335 = vsel %vm249, %v334, 0
    %337 = vmatpush.msra.mxu0 0.0
    %338 = vmatpush.msra.mxu0 0.0
    %339 = vmatpush.msra.mxu0 0.0
    %340 = vmatpush.msra.mxu0 0.0
    %341 = vmatpush.msra.mxu0 0.0
    %342 = vmatpush.msra.mxu0 0.0
    %343 = vmatpush.msra.mxu0 0.0
    %344 = vmatpush.msra.mxu0 0.0
    %345 = vmatpush.msra.mxu0 0.0
    %346 = vmatpush.msra.mxu0 0.0
    %347 = vmatpush.msra.mxu0 0.0
    %348 = vmatpush.msra.mxu0 0.0
    %349 = vmatpush.msra.mxu0 %v151
    %350 = vmatpush.msra.mxu0 %v150
    %351 = vmatpush.msra.mxu0 %v149
    %352 = vmatpush.msra.mxu0 %v148
    %353 = vmatmul.f32.gmra.mxu0 %v335
    %v354 = vpop.f32.mrf.mxu0
    %v355 = vadd.f32 %v330, %v354
    %356 = vdwg.mxu0
    %v357 = vadd.f32 %v355, %v177
    %v358 = vxor.u32 %v357, 2147483648
    %v359 = vmul.f32 %v358, 1.442695
    %v360 = vpow.pop %v359
    %v361 = vadd.f32 %v360, 1.0
    %v362 = vrcp.pop %v361
    %v363 = vmul.f32 %v361, %v362
    %v364 = vsub.f32 1.0, %v363
    %v365 = vmul.f32 %v362, %v364
    %v366 = vadd.f32 %v362, %v365
    %vm367 = vweird.f32 %v361
    %vm368 = vweird.f32 %v362
    %vm369 = vmor %vm367, %vm368
    %v370 = vsel %vm369, %v362, %v366
    %v371 = vand.u32 2147483647, %v361
    %vm372 = vcmp.eq.f32.partialorder %v371, 8.507059e+37
    %v373 = vand.u32 %v361, 2147483648
    %v374 = vor.u32 1.1754944e-38, %v373
    %v375 = vsel %vm372, %v374, %v370
    %v376 = vmul.f32 1.0, %v375
    %v377 = vmul.f32 %v376, 2.0
    %v378 = vsub.f32 %v377, 1.0
    %v379 = vmul.f32 %v376, 0.0
    %381 = vrot.lane.b32.xlu0 %v378, 64
    %v382 = vpop.permute.xlu0 %381
    %v384 = vmul.f32 %v376, %v382
    %386 = vrot.lane.b32.xlu0 %v384, 32
    %v387 = vpop.permute.xlu0 %386
    %v389 = vadd.f32 %v379, %v387
    %v390 = vtanh.pop %v389
    %392 = vrot.lane.b32.xlu0 %v390, 64
    %v393 = vpop.permute.xlu0 %392
    %v395 = vmul.f32 %v376, %v393
    %396 = vmatpush.msra.mxu0 0.0
    %397 = vmatpush.msra.mxu0 0.0
    %398 = vmatpush.msra.mxu0 0.0
    %399 = vmatpush.msra.mxu0 0.0
    %400 = vmatpush.msra.mxu0 0.0
    %401 = vmatpush.msra.mxu0 0.0
    %402 = vmatpush.msra.mxu0 0.0
    %403 = vmatpush.msra.mxu0 0.0
    %404 = vmatpush.msra.mxu0 0.0
    %405 = vmatpush.msra.mxu0 0.0
    %406 = vmatpush.msra.mxu0 0.0
    %407 = vmatpush.msra.mxu0 0.0
    %408 = vmatpush.msra.mxu0 %v147
    %409 = vmatpush.msra.mxu0 %v146
    %410 = vmatpush.msra.mxu0 %v145
    %411 = vmatpush.msra.mxu0 %v144
    %412 = vmatmul.f32.gmra.mxu0 %v335
    %v413 = vpop.f32.mrf.mxu0
    %v414 = vadd.f32 0.0, %v413
    %415 = vdwg.mxu0
    %v417 = vrot.slane %v414, 6
    %v419 = vadd.f32 %v218, %v417
    %v420 = vxor.u32 %v419, 2147483648
    %v421 = vmul.f32 %v420, 1.442695
    %v422 = vpow.pop %v421
    %v423 = vadd.f32 %v422, 1.0
    %v424 = vrcp.pop %v423
    %v425 = vmul.f32 %v423, %v424
    %v426 = vsub.f32 1.0, %v425
    %v427 = vmul.f32 %v424, %v426
    %v428 = vadd.f32 %v424, %v427
    %vm429 = vweird.f32 %v423
    %vm430 = vweird.f32 %v424
    %vm431 = vmor %vm429, %vm430
    %v432 = vsel %vm431, %v424, %v428
    %v433 = vand.u32 2147483647, %v423
    %vm434 = vcmp.eq.f32.partialorder %v433, 8.507059e+37
    %v435 = vand.u32 %v423, 2147483648
    %v436 = vor.u32 1.1754944e-38, %v435
    %v437 = vsel %vm434, %v436, %v432
    %v438 = vmul.f32 1.0, %v437
    %v439 = vmul.f32 %v438, 2.0
    %v440 = vsub.f32 %v439, 1.0
    %v442 = vrot.slane %v305, 6
    %v444 = vmul.f32 %v438, %v442
    %446 = vrot.lane.b32.xlu0 %v440, 64
    %v447 = vpop.permute.xlu0 %446
    %v449 = vmul.f32 %v438, %v447
    %451 = vrot.lane.b32.xlu0 %v449, 32
    %v452 = vpop.permute.xlu0 %451
    %v454 = vadd.f32 %v444, %v452
    %v455 = vtanh.pop %v454
    %457 = vrot.lane.b32.xlu0 %v455, 64
    %v458 = vpop.permute.xlu0 %457
    %v460 = vmul.f32 %v438, %v458
    %462 = vrot.lane.b32.xlu0 %v395, 32
    %v463 = vpop.permute.xlu0 %462
    %v464 = vsel %vm249, %v463, 0
    %466 = vmatpush.msra.mxu0 0.0
    %467 = vmatpush.msra.mxu0 0.0
    %468 = vmatpush.msra.mxu0 0.0
    %469 = vmatpush.msra.mxu0 0.0
    %470 = vmatpush.msra.mxu0 0.0
    %471 = vmatpush.msra.mxu0 0.0
    %472 = vmatpush.msra.mxu0 0.0
    %473 = vmatpush.msra.mxu0 0.0
    %474 = vmatpush.msra.mxu0 0.0
    %475 = vmatpush.msra.mxu0 0.0
    %476 = vmatpush.msra.mxu0 0.0
    %477 = vmatpush.msra.mxu0 0.0
    %478 = vmatpush.msra.mxu0 %v155
    %479 = vmatpush.msra.mxu0 %v154
    %480 = vmatpush.msra.mxu0 %v153
    %481 = vmatpush.msra.mxu0 %v152
    %482 = vmatmul.f32.gmra.mxu0 %v464
    %v483 = vpop.f32.mrf.mxu0
    %v484 = vadd.f32 0.0, %v483
    %485 = vdwg.mxu0
    %v487 = vrot.slane %v460, 2
    %488 = vrot.lane.b32.xlu0 %v487, 32
    %v489 = vpop.permute.xlu0 %488
    %v490 = vsel %vm249, %v489, 0
    %492 = vmatpush.msra.mxu0 0.0
    %493 = vmatpush.msra.mxu0 0.0
    %494 = vmatpush.msra.mxu0 0.0
    %495 = vmatpush.msra.mxu0 0.0
    %496 = vmatpush.msra.mxu0 0.0
    %497 = vmatpush.msra.mxu0 0.0
    %498 = vmatpush.msra.mxu0 0.0
    %499 = vmatpush.msra.mxu0 0.0
    %500 = vmatpush.msra.mxu0 0.0
    %501 = vmatpush.msra.mxu0 0.0
    %502 = vmatpush.msra.mxu0 0.0
    %503 = vmatpush.msra.mxu0 0.0
    %504 = vmatpush.msra.mxu0 %v151
    %505 = vmatpush.msra.mxu0 %v150
    %506 = vmatpush.msra.mxu0 %v149
    %507 = vmatpush.msra.mxu0 %v148
    %508 = vmatmul.f32.gmra.mxu0 %v490
    %v509 = vpop.f32.mrf.mxu0
    %v510 = vadd.f32 %v484, %v509
    %511 = vdwg.mxu0
    %v512 = vadd.f32 %v510, %v177
    %v513 = vxor.u32 %v512, 2147483648
    %v514 = vmul.f32 %v513, 1.442695
    %v515 = vpow.pop %v514
    %v516 = vadd.f32 %v515, 1.0
    %v517 = vrcp.pop %v516
    %v518 = vmul.f32 %v516, %v517
    %v519 = vsub.f32 1.0, %v518
    %v520 = vmul.f32 %v517, %v519
    %v521 = vadd.f32 %v517, %v520
    %vm522 = vweird.f32 %v516
    %vm523 = vweird.f32 %v517
    %vm524 = vmor %vm522, %vm523
    %v525 = vsel %vm524, %v517, %v521
    %v526 = vand.u32 2147483647, %v516
    %vm527 = vcmp.eq.f32.partialorder %v526, 8.507059e+37
    %v528 = vand.u32 %v516, 2147483648
    %v529 = vor.u32 1.1754944e-38, %v528
    %v530 = vsel %vm527, %v529, %v525
    %v531 = vmul.f32 1.0, %v530
    %v532 = vmul.f32 %v531, 2.0
    %v533 = vsub.f32 %v532, 1.0
    %v534 = vmul.f32 %v531, %v389
    %536 = vrot.lane.b32.xlu0 %v533, 64
    %v537 = vpop.permute.xlu0 %536
    %v539 = vmul.f32 %v531, %v537
    %541 = vrot.lane.b32.xlu0 %v539, 32
    %v542 = vpop.permute.xlu0 %541
    %v544 = vadd.f32 %v534, %v542
    %v545 = vtanh.pop %v544
    %547 = vrot.lane.b32.xlu0 %v545, 64
    %v548 = vpop.permute.xlu0 %547
    %v550 = vmul.f32 %v531, %v548
    %551 = vmatpush.msra.mxu0 0.0
    %552 = vmatpush.msra.mxu0 0.0
    %553 = vmatpush.msra.mxu0 0.0
    %554 = vmatpush.msra.mxu0 0.0
    %555 = vmatpush.msra.mxu0 0.0
    %556 = vmatpush.msra.mxu0 0.0
    %557 = vmatpush.msra.mxu0 0.0
    %558 = vmatpush.msra.mxu0 0.0
    %559 = vmatpush.msra.mxu0 0.0
    %560 = vmatpush.msra.mxu0 0.0
    %561 = vmatpush.msra.mxu0 0.0
    %562 = vmatpush.msra.mxu0 0.0
    %563 = vmatpush.msra.mxu0 %v147
    %564 = vmatpush.msra.mxu0 %v146
    %565 = vmatpush.msra.mxu0 %v145
    %566 = vmatpush.msra.mxu0 %v144
    %567 = vmatmul.f32.gmra.mxu0 %v490
    %v568 = vpop.f32.mrf.mxu0
    %v569 = vadd.f32 0.0, %v568
    %570 = vdwg.mxu0
    %v572 = vrot.slane %v569, 4
    %v574 = vadd.f32 %v218, %v572
    %v575 = vxor.u32 %v574, 2147483648
    %v576 = vmul.f32 %v575, 1.442695
    %v577 = vpow.pop %v576
    %v578 = vadd.f32 %v577, 1.0
    %v579 = vrcp.pop %v578
    %v580 = vmul.f32 %v578, %v579
    %v581 = vsub.f32 1.0, %v580
    %v582 = vmul.f32 %v579, %v581
    %v583 = vadd.f32 %v579, %v582
    %vm584 = vweird.f32 %v578
    %vm585 = vweird.f32 %v579
    %vm586 = vmor %vm584, %vm585
    %v587 = vsel %vm586, %v579, %v583
    %v588 = vand.u32 2147483647, %v578
    %vm589 = vcmp.eq.f32.partialorder %v588, 8.507059e+37
    %v590 = vand.u32 %v578, 2147483648
    %v591 = vor.u32 1.1754944e-38, %v590
    %v592 = vsel %vm589, %v591, %v587
    %v593 = vmul.f32 1.0, %v592
    %v594 = vmul.f32 %v593, 2.0
    %v595 = vsub.f32 %v594, 1.0
    %v597 = vrot.slane %v454, 6
    %v599 = vmul.f32 %v593, %v597
    %601 = vrot.lane.b32.xlu0 %v595, 64
    %v602 = vpop.permute.xlu0 %601
    %v604 = vmul.f32 %v593, %v602
    %606 = vrot.lane.b32.xlu0 %v604, 32
    %v607 = vpop.permute.xlu0 %606
    %v609 = vadd.f32 %v599, %v607
    %v610 = vtanh.pop %v609
    %612 = vrot.lane.b32.xlu0 %v610, 64
    %v613 = vpop.permute.xlu0 %612
    %v615 = vmul.f32 %v593, %v613
    %617 = vrot.lane.b32.xlu0 %v550, 32
    %v618 = vpop.permute.xlu0 %617
    %v619 = vsel %vm249, %v618, 0
    %621 = vmatpush.msra.mxu0 0.0
    %622 = vmatpush.msra.mxu0 0.0
    %623 = vmatpush.msra.mxu0 0.0
    %624 = vmatpush.msra.mxu0 0.0
    %625 = vmatpush.msra.mxu0 0.0
    %626 = vmatpush.msra.mxu0 0.0
    %627 = vmatpush.msra.mxu0 0.0
    %628 = vmatpush.msra.mxu0 0.0
    %629 = vmatpush.msra.mxu0 0.0
    %630 = vmatpush.msra.mxu0 0.0
    %631 = vmatpush.msra.mxu0 0.0
    %632 = vmatpush.msra.mxu0 0.0
    %633 = vmatpush.msra.mxu0 %v155
    %634 = vmatpush.msra.mxu0 %v154
    %635 = vmatpush.msra.mxu0 %v153
    %636 = vmatpush.msra.mxu0 %v152
    %637 = vmatmul.f32.gmra.mxu0 %v619
    %v638 = vpop.f32.mrf.mxu0
    %v639 = vadd.f32 0.0, %v638
    %640 = vdwg.mxu0
    %v642 = vrot.slane %v615, 4
    %643 = vrot.lane.b32.xlu0 %v642, 32
    %v644 = vpop.permute.xlu0 %643
    %v645 = vsel %vm249, %v644, 0
    %647 = vmatpush.msra.mxu0 0.0
    %648 = vmatpush.msra.mxu0 0.0
    %649 = vmatpush.msra.mxu0 0.0
    %650 = vmatpush.msra.mxu0 0.0
    %651 = vmatpush.msra.mxu0 0.0
    %652 = vmatpush.msra.mxu0 0.0
    %653 = vmatpush.msra.mxu0 0.0
    %654 = vmatpush.msra.mxu0 0.0
    %655 = vmatpush.msra.mxu0 0.0
    %656 = vmatpush.msra.mxu0 0.0
    %657 = vmatpush.msra.mxu0 0.0
    %658 = vmatpush.msra.mxu0 0.0
    %659 = vmatpush.msra.mxu0 %v151
    %660 = vmatpush.msra.mxu0 %v150
    %661 = vmatpush.msra.mxu0 %v149
    %662 = vmatpush.msra.mxu0 %v148
    %663 = vmatmul.f32.gmra.mxu0 %v645
    %v664 = vpop.f32.mrf.mxu0
    %v665 = vadd.f32 %v639, %v664
    %666 = vdwg.mxu0
    %v667 = vadd.f32 %v665, %v177
    %v668 = vxor.u32 %v667, 2147483648
    %v669 = vmul.f32 %v668, 1.442695
    %v670 = vpow.pop %v669
    %v671 = vadd.f32 %v670, 1.0
    %v672 = vrcp.pop %v671
    %v673 = vmul.f32 %v671, %v672
    %v674 = vsub.f32 1.0, %v673
    %v675 = vmul.f32 %v672, %v674
    %v676 = vadd.f32 %v672, %v675
    %vm677 = vweird.f32 %v671
    %vm678 = vweird.f32 %v672
    %vm679 = vmor %vm677, %vm678
    %v680 = vsel %vm679, %v672, %v676
    %v681 = vand.u32 2147483647, %v671
    %vm682 = vcmp.eq.f32.partialorder %v681, 8.507059e+37
    %v683 = vand.u32 %v671, 2147483648
    %v684 = vor.u32 1.1754944e-38, %v683
    %v685 = vsel %vm682, %v684, %v680
    %v686 = vmul.f32 1.0, %v685
    %v687 = vmul.f32 %v686, 2.0
    %v688 = vsub.f32 %v687, 1.0
    %v689 = vmul.f32 %v686, %v544
    %691 = vrot.lane.b32.xlu0 %v688, 64
    %v692 = vpop.permute.xlu0 %691
    %v694 = vmul.f32 %v686, %v692
    %696 = vrot.lane.b32.xlu0 %v694, 32
    %v697 = vpop.permute.xlu0 %696
    %v699 = vadd.f32 %v689, %v697
    %v700 = vtanh.pop %v699
    %702 = vrot.lane.b32.xlu0 %v700, 64
    %v703 = vpop.permute.xlu0 %702
    %v705 = vmul.f32 %v686, %v703
    %706 = vmatpush.msra.mxu0 0.0
    %707 = vmatpush.msra.mxu0 0.0
    %708 = vmatpush.msra.mxu0 0.0
    %709 = vmatpush.msra.mxu0 0.0
    %710 = vmatpush.msra.mxu0 0.0
    %711 = vmatpush.msra.mxu0 0.0
    %712 = vmatpush.msra.mxu0 0.0
    %713 = vmatpush.msra.mxu0 0.0
    %714 = vmatpush.msra.mxu0 0.0
    %715 = vmatpush.msra.mxu0 0.0
    %716 = vmatpush.msra.mxu0 0.0
    %717 = vmatpush.msra.mxu0 0.0
    %718 = vmatpush.msra.mxu0 %v147
    %719 = vmatpush.msra.mxu0 %v146
    %720 = vmatpush.msra.mxu0 %v145
    %721 = vmatpush.msra.mxu0 %v144
    %722 = vmatmul.f32.gmra.mxu0 %v645
    %v723 = vpop.f32.mrf.mxu0
    %v724 = vadd.f32 0.0, %v723
    %725 = vdwg.mxu0
    %v727 = vrot.slane %v724, 2
    %v729 = vadd.f32 %v218, %v727
    %v730 = vxor.u32 %v729, 2147483648
    %v731 = vmul.f32 %v730, 1.442695
    %v732 = vpow.pop %v731
    %v733 = vadd.f32 %v732, 1.0
    %v734 = vrcp.pop %v733
    %v735 = vmul.f32 %v733, %v734
    %v736 = vsub.f32 1.0, %v735
    %v737 = vmul.f32 %v734, %v736
    %v738 = vadd.f32 %v734, %v737
    %vm739 = vweird.f32 %v733
    %vm740 = vweird.f32 %v734
    %vm741 = vmor %vm739, %vm740
    %v742 = vsel %vm741, %v734, %v738
    %v743 = vand.u32 2147483647, %v733
    %vm744 = vcmp.eq.f32.partialorder %v743, 8.507059e+37
    %v745 = vand.u32 %v733, 2147483648
    %v746 = vor.u32 1.1754944e-38, %v745
    %v747 = vsel %vm744, %v746, %v742
    %v748 = vmul.f32 1.0, %v747
    %v749 = vmul.f32 %v748, 2.0
    %v750 = vsub.f32 %v749, 1.0
    %v752 = vrot.slane %v609, 6
    %v754 = vmul.f32 %v748, %v752
    %756 = vrot.lane.b32.xlu0 %v750, 64
    %v757 = vpop.permute.xlu0 %756
    %v759 = vmul.f32 %v748, %v757
    %761 = vrot.lane.b32.xlu0 %v759, 32
    %v762 = vpop.permute.xlu0 %761
    %v764 = vadd.f32 %v754, %v762
    %v765 = vtanh.pop %v764
    %767 = vrot.lane.b32.xlu0 %v765, 64
    %v768 = vpop.permute.xlu0 %767
    %v770 = vmul.f32 %v748, %v768
    %772 = vrot.lane.b32.xlu0 %v705, 32
    %v773 = vpop.permute.xlu0 %772
    %v774 = vsel %vm249, %v773, 0
    %776 = vmatpush.msra.mxu0 0.0
    %777 = vmatpush.msra.mxu0 0.0
    %778 = vmatpush.msra.mxu0 0.0
    %779 = vmatpush.msra.mxu0 0.0
    %780 = vmatpush.msra.mxu0 0.0
    %781 = vmatpush.msra.mxu0 0.0
    %782 = vmatpush.msra.mxu0 0.0
    %783 = vmatpush.msra.mxu0 0.0
    %784 = vmatpush.msra.mxu0 0.0
    %785 = vmatpush.msra.mxu0 0.0
    %786 = vmatpush.msra.mxu0 0.0
    %787 = vmatpush.msra.mxu0 0.0
    %788 = vmatpush.msra.mxu0 %v155
    %789 = vmatpush.msra.mxu0 %v154
    %790 = vmatpush.msra.mxu0 %v153
    %791 = vmatpush.msra.mxu0 %v152
    %792 = vmatmul.f32.gmra.mxu0 %v774
    %v793 = vpop.f32.mrf.mxu0
    %v794 = vadd.f32 0.0, %v793
    %795 = vdwg.mxu0
    %v797 = vrot.slane %v770, 6
    %798 = vrot.lane.b32.xlu0 %v797, 32
    %v799 = vpop.permute.xlu0 %798
    %v800 = vsel %vm249, %v799, 0
    %802 = vmatpush.msra.mxu0 0.0
    %803 = vmatpush.msra.mxu0 0.0
    %804 = vmatpush.msra.mxu0 0.0
    %805 = vmatpush.msra.mxu0 0.0
    %806 = vmatpush.msra.mxu0 0.0
    %807 = vmatpush.msra.mxu0 0.0
    %808 = vmatpush.msra.mxu0 0.0
    %809 = vmatpush.msra.mxu0 0.0
    %810 = vmatpush.msra.mxu0 0.0
    %811 = vmatpush.msra.mxu0 0.0
    %812 = vmatpush.msra.mxu0 0.0
    %813 = vmatpush.msra.mxu0 0.0
    %814 = vmatpush.msra.mxu0 %v151
    %815 = vmatpush.msra.mxu0 %v150
    %816 = vmatpush.msra.mxu0 %v149
    %817 = vmatpush.msra.mxu0 %v148
    %818 = vmatmul.f32.gmra.mxu0 %v800
    %v819 = vpop.f32.mrf.mxu0
    %v820 = vadd.f32 %v794, %v819
    %821 = vdwg.mxu0
    %v822 = vadd.f32 %v820, %v177
    %v823 = vxor.u32 %v822, 2147483648
    %v824 = vmul.f32 %v823, 1.442695
    %v825 = vpow.pop %v824
    %v826 = vadd.f32 %v825, 1.0
    %v827 = vrcp.pop %v826
    %v828 = vmul.f32 %v826, %v827
    %v829 = vsub.f32 1.0, %v828
    %v830 = vmul.f32 %v827, %v829
    %v831 = vadd.f32 %v827, %v830
    %vm832 = vweird.f32 %v826
    %vm833 = vweird.f32 %v827
    %vm834 = vmor %vm832, %vm833
    %v835 = vsel %vm834, %v827, %v831
    %v836 = vand.u32 2147483647, %v826
    %vm837 = vcmp.eq.f32.partialorder %v836, 8.507059e+37
    %v838 = vand.u32 %v826, 2147483648
    %v839 = vor.u32 1.1754944e-38, %v838
    %v840 = vsel %vm837, %v839, %v835
    %v841 = vmul.f32 1.0, %v840
    %v842 = vmul.f32 %v841, 2.0
    %v843 = vsub.f32 %v842, 1.0
    %v844 = vmul.f32 %v841, %v699
    %846 = vrot.lane.b32.xlu0 %v843, 64
    %v847 = vpop.permute.xlu0 %846
    %v849 = vmul.f32 %v841, %v847
    %851 = vrot.lane.b32.xlu0 %v849, 32
    %v852 = vpop.permute.xlu0 %851
    %v854 = vadd.f32 %v844, %v852
    %v855 = vtanh.pop %v854
    %857 = vrot.lane.b32.xlu0 %v855, 64
    %v858 = vpop.permute.xlu0 %857
    %v860 = vmul.f32 %v841, %v858
    %861 = vmatpush.msra.mxu0 0.0
    %862 = vmatpush.msra.mxu0 0.0
    %863 = vmatpush.msra.mxu0 0.0
    %864 = vmatpush.msra.mxu0 0.0
    %865 = vmatpush.msra.mxu0 0.0
    %866 = vmatpush.msra.mxu0 0.0
    %867 = vmatpush.msra.mxu0 0.0
    %868 = vmatpush.msra.mxu0 0.0
    %869 = vmatpush.msra.mxu0 0.0
    %870 = vmatpush.msra.mxu0 0.0
    %871 = vmatpush.msra.mxu0 0.0
    %872 = vmatpush.msra.mxu0 0.0
    %873 = vmatpush.msra.mxu0 %v147
    %874 = vmatpush.msra.mxu0 %v146
    %875 = vmatpush.msra.mxu0 %v145
    %876 = vmatpush.msra.mxu0 %v144
    %877 = vmatmul.f32.gmra.mxu0 %v800
    %v878 = vpop.f32.mrf.mxu0
    %v879 = vadd.f32 0.0, %v878
    %880 = vdwg.mxu0
    %v881 = vadd.f32 %v221, %v879
    %v882 = vxor.u32 %v881, 2147483648
    %v883 = vmul.f32 %v882, 1.442695
    %v884 = vpow.pop %v883
    %v885 = vadd.f32 %v884, 1.0
    %v886 = vrcp.pop %v885
    %v887 = vmul.f32 %v885, %v886
    %v888 = vsub.f32 1.0, %v887
    %v889 = vmul.f32 %v886, %v888
    %v890 = vadd.f32 %v886, %v889
    %vm891 = vweird.f32 %v885
    %vm892 = vweird.f32 %v886
    %vm893 = vmor %vm891, %vm892
    %v894 = vsel %vm893, %v886, %v890
    %v895 = vand.u32 2147483647, %v885
    %vm896 = vcmp.eq.f32.partialorder %v895, 8.507059e+37
    %v897 = vand.u32 %v885, 2147483648
    %v898 = vor.u32 1.1754944e-38, %v897
    %v899 = vsel %vm896, %v898, %v894
    %v900 = vmul.f32 1.0, %v899
    %v901 = vmul.f32 %v900, 2.0
    %v902 = vsub.f32 %v901, 1.0
    %v904 = vrot.slane %v764, 6
    %v906 = vmul.f32 %v900, %v904
    %908 = vrot.lane.b32.xlu0 %v902, 64
    %v909 = vpop.permute.xlu0 %908
    %v911 = vmul.f32 %v900, %v909
    %913 = vrot.lane.b32.xlu0 %v911, 32
    %v914 = vpop.permute.xlu0 %913
    %v916 = vadd.f32 %v906, %v914
    %v917 = vtanh.pop %v916
    %919 = vrot.lane.b32.xlu0 %v917, 64
    %v920 = vpop.permute.xlu0 %919
    %v922 = vmul.f32 %v900, %v920
    %924 = vrot.lane.b32.xlu0 %v860, 32
    %v925 = vpop.permute.xlu0 %924
    %v926 = vsel %vm249, %v925, 0
    %928 = vmatpush.msra.mxu0 0.0
    %929 = vmatpush.msra.mxu0 0.0
    %930 = vmatpush.msra.mxu0 0.0
    %931 = vmatpush.msra.mxu0 0.0
    %932 = vmatpush.msra.mxu0 0.0
    %933 = vmatpush.msra.mxu0 0.0
    %934 = vmatpush.msra.mxu0 0.0
    %935 = vmatpush.msra.mxu0 0.0
    %936 = vmatpush.msra.mxu0 0.0
    %937 = vmatpush.msra.mxu0 0.0
    %938 = vmatpush.msra.mxu0 0.0
    %939 = vmatpush.msra.mxu0 0.0
    %940 = vmatpush.msra.mxu0 %v155
    %941 = vmatpush.msra.mxu0 %v154
    %942 = vmatpush.msra.mxu0 %v153
    %943 = vmatpush.msra.mxu0 %v152
    %944 = vmatmul.f32.gmra.mxu0 %v926
    %v945 = vpop.f32.mrf.mxu0
    %v946 = vadd.f32 0.0, %v945
    %947 = vdwg.mxu0
    %949 = vrot.lane.b32.xlu0 %v922, 32
    %v950 = vpop.permute.xlu0 %949
    %v951 = vsel %vm249, %v950, 0
    %953 = vmatpush.msra.mxu0 0.0
    %954 = vmatpush.msra.mxu0 0.0
    %955 = vmatpush.msra.mxu0 0.0
    %956 = vmatpush.msra.mxu0 0.0
    %957 = vmatpush.msra.mxu0 0.0
    %958 = vmatpush.msra.mxu0 0.0
    %959 = vmatpush.msra.mxu0 0.0
    %960 = vmatpush.msra.mxu0 0.0
    %961 = vmatpush.msra.mxu0 0.0
    %962 = vmatpush.msra.mxu0 0.0
    %963 = vmatpush.msra.mxu0 0.0
    %964 = vmatpush.msra.mxu0 0.0
    %965 = vmatpush.msra.mxu0 %v151
    %966 = vmatpush.msra.mxu0 %v150
    %967 = vmatpush.msra.mxu0 %v149
    %968 = vmatpush.msra.mxu0 %v148
    %969 = vmatmul.f32.gmra.mxu0 %v951
    %v970 = vpop.f32.mrf.mxu0
    %v971 = vadd.f32 %v946, %v970
    %972 = vdwg.mxu0
    %v973 = vadd.f32 %v971, %v177
    %v974 = vxor.u32 %v973, 2147483648
    %v975 = vmul.f32 %v974, 1.442695
    %v976 = vpow.pop %v975
    %v977 = vadd.f32 %v976, 1.0
    %v978 = vrcp.pop %v977
    %v979 = vmul.f32 %v977, %v978
    %v980 = vsub.f32 1.0, %v979
    %v981 = vmul.f32 %v978, %v980
    %v982 = vadd.f32 %v978, %v981
    %vm983 = vweird.f32 %v977
    %vm984 = vweird.f32 %v978
    %vm985 = vmor %vm983, %vm984
    %v986 = vsel %vm985, %v978, %v982
    %v987 = vand.u32 2147483647, %v977
    %vm988 = vcmp.eq.f32.partialorder %v987, 8.507059e+37
    %v989 = vand.u32 %v977, 2147483648
    %v990 = vor.u32 1.1754944e-38, %v989
    %v991 = vsel %vm988, %v990, %v986
    %v992 = vmul.f32 1.0, %v991
    %v993 = vmul.f32 %v992, 2.0
    %v994 = vsub.f32 %v993, 1.0
    %v995 = vmul.f32 %v992, %v854
    %997 = vrot.lane.b32.xlu0 %v994, 64
    %v998 = vpop.permute.xlu0 %997
    %v1000 = vmul.f32 %v992, %v998
    %1002 = vrot.lane.b32.xlu0 %v1000, 32
    %v1003 = vpop.permute.xlu0 %1002
    %v1005 = vadd.f32 %v995, %v1003
    %v1006 = vtanh.pop %v1005
    %1008 = vrot.lane.b32.xlu0 %v1006, 64
    %v1009 = vpop.permute.xlu0 %1008
    %v1011 = vmul.f32 %v992, %v1009
    %1012 = vmatpush.msra.mxu0 0.0
    %1013 = vmatpush.msra.mxu0 0.0
    %1014 = vmatpush.msra.mxu0 0.0
    %1015 = vmatpush.msra.mxu0 0.0
    %1016 = vmatpush.msra.mxu0 0.0
    %1017 = vmatpush.msra.mxu0 0.0
    %1018 = vmatpush.msra.mxu0 0.0
    %1019 = vmatpush.msra.mxu0 0.0
    %1020 = vmatpush.msra.mxu0 0.0
    %1021 = vmatpush.msra.mxu0 0.0
    %1022 = vmatpush.msra.mxu0 0.0
    %1023 = vmatpush.msra.mxu0 0.0
    %1024 = vmatpush.msra.mxu0 %v147
    %1025 = vmatpush.msra.mxu0 %v146
    %1026 = vmatpush.msra.mxu0 %v145
    %1027 = vmatpush.msra.mxu0 %v144
    %1028 = vmatmul.f32.gmra.mxu0 %v951
    %v1029 = vpop.f32.mrf.mxu0
    %v1030 = vadd.f32 0.0, %v1029
    %1031 = vdwg.mxu0
    %v1033 = vrot.slane %v1030, 6
    %v1035 = vadd.f32 %v221, %v1033
    %v1036 = vxor.u32 %v1035, 2147483648
    %v1037 = vmul.f32 %v1036, 1.442695
    %v1038 = vpow.pop %v1037
    %v1039 = vadd.f32 %v1038, 1.0
    %v1040 = vrcp.pop %v1039
    %v1041 = vmul.f32 %v1039, %v1040
    %v1042 = vsub.f32 1.0, %v1041
    %v1043 = vmul.f32 %v1040, %v1042
    %v1044 = vadd.f32 %v1040, %v1043
    %vm1045 = vweird.f32 %v1039
    %vm1046 = vweird.f32 %v1040
    %vm1047 = vmor %vm1045, %vm1046
    %v1048 = vsel %vm1047, %v1040, %v1044
    %v1049 = vand.u32 2147483647, %v1039
    %vm1050 = vcmp.eq.f32.partialorder %v1049, 8.507059e+37
    %v1051 = vand.u32 %v1039, 2147483648
    %v1052 = vor.u32 1.1754944e-38, %v1051
    %v1053 = vsel %vm1050, %v1052, %v1048
    %v1054 = vmul.f32 1.0, %v1053
    %v1055 = vmul.f32 %v1054, 2.0
    %v1056 = vsub.f32 %v1055, 1.0
    %v1058 = vrot.slane %v916, 6
    %v1060 = vmul.f32 %v1054, %v1058
    %1062 = vrot.lane.b32.xlu0 %v1056, 64
    %v1063 = vpop.permute.xlu0 %1062
    %v1065 = vmul.f32 %v1054, %v1063
    %1067 = vrot.lane.b32.xlu0 %v1065, 32
    %v1068 = vpop.permute.xlu0 %1067
    %v1070 = vadd.f32 %v1060, %v1068
    %v1071 = vtanh.pop %v1070
    %1073 = vrot.lane.b32.xlu0 %v1071, 64
    %v1074 = vpop.permute.xlu0 %1073
    %v1076 = vmul.f32 %v1054, %v1074
    %1078 = vrot.lane.b32.xlu0 %v1011, 32
    %v1079 = vpop.permute.xlu0 %1078
    %v1080 = vsel %vm249, %v1079, 0
    %1082 = vmatpush.msra.mxu0 0.0
    %1083 = vmatpush.msra.mxu0 0.0
    %1084 = vmatpush.msra.mxu0 0.0
    %1085 = vmatpush.msra.mxu0 0.0
    %1086 = vmatpush.msra.mxu0 0.0
    %1087 = vmatpush.msra.mxu0 0.0
    %1088 = vmatpush.msra.mxu0 0.0
    %1089 = vmatpush.msra.mxu0 0.0
    %1090 = vmatpush.msra.mxu0 0.0
    %1091 = vmatpush.msra.mxu0 0.0
    %1092 = vmatpush.msra.mxu0 0.0
    %1093 = vmatpush.msra.mxu0 0.0
    %1094 = vmatpush.msra.mxu0 %v155
    %1095 = vmatpush.msra.mxu0 %v154
    %1096 = vmatpush.msra.mxu0 %v153
    %1097 = vmatpush.msra.mxu0 %v152
    %1098 = vmatmul.f32.gmra.mxu0 %v1080
    %v1099 = vpop.f32.mrf.mxu0
    %v1100 = vadd.f32 0.0, %v1099
    %1101 = vdwg.mxu0
    %v1103 = vrot.slane %v1076, 2
    %1104 = vrot.lane.b32.xlu0 %v1103, 32
    %v1105 = vpop.permute.xlu0 %1104
    %v1106 = vsel %vm249, %v1105, 0
    %1108 = vmatpush.msra.mxu0 0.0
    %1109 = vmatpush.msra.mxu0 0.0
    %1110 = vmatpush.msra.mxu0 0.0
    %1111 = vmatpush.msra.mxu0 0.0
    %1112 = vmatpush.msra.mxu0 0.0
    %1113 = vmatpush.msra.mxu0 0.0
    %1114 = vmatpush.msra.mxu0 0.0
    %1115 = vmatpush.msra.mxu0 0.0
    %1116 = vmatpush.msra.mxu0 0.0
    %1117 = vmatpush.msra.mxu0 0.0
    %1118 = vmatpush.msra.mxu0 0.0
    %1119 = vmatpush.msra.mxu0 0.0
    %1120 = vmatpush.msra.mxu0 %v151
    %1121 = vmatpush.msra.mxu0 %v150
    %1122 = vmatpush.msra.mxu0 %v149
    %1123 = vmatpush.msra.mxu0 %v148
    %1124 = vmatmul.f32.gmra.mxu0 %v1106
    %v1125 = vpop.f32.mrf.mxu0
    %v1126 = vadd.f32 %v1100, %v1125
    %1127 = vdwg.mxu0
    %v1128 = vadd.f32 %v1126, %v177
    %v1129 = vxor.u32 %v1128, 2147483648
    %v1130 = vmul.f32 %v1129, 1.442695
    %v1131 = vpow.pop %v1130
    %v1132 = vadd.f32 %v1131, 1.0
    %v1133 = vrcp.pop %v1132
    %v1134 = vmul.f32 %v1132, %v1133
    %v1135 = vsub.f32 1.0, %v1134
    %v1136 = vmul.f32 %v1133, %v1135
    %v1137 = vadd.f32 %v1133, %v1136
    %vm1138 = vweird.f32 %v1132
    %vm1139 = vweird.f32 %v1133
    %vm1140 = vmor %vm1138, %vm1139
    %v1141 = vsel %vm1140, %v1133, %v1137
    %v1142 = vand.u32 2147483647, %v1132
    %vm1143 = vcmp.eq.f32.partialorder %v1142, 8.507059e+37
    %v1144 = vand.u32 %v1132, 2147483648
    %v1145 = vor.u32 1.1754944e-38, %v1144
    %v1146 = vsel %vm1143, %v1145, %v1141
    %v1147 = vmul.f32 1.0, %v1146
    %v1148 = vmul.f32 %v1147, 2.0
    %v1149 = vsub.f32 %v1148, 1.0
    %v1150 = vmul.f32 %v1147, %v1005
    %1152 = vrot.lane.b32.xlu0 %v1149, 64
    %v1153 = vpop.permute.xlu0 %1152
    %v1155 = vmul.f32 %v1147, %v1153
    %1157 = vrot.lane.b32.xlu0 %v1155, 32
    %v1158 = vpop.permute.xlu0 %1157
    %v1160 = vadd.f32 %v1150, %v1158
    %v1161 = vtanh.pop %v1160
    %1163 = vrot.lane.b32.xlu0 %v1161, 64
    %v1164 = vpop.permute.xlu0 %1163
    %v1166 = vmul.f32 %v1147, %v1164
    %1167 = vmatpush.msra.mxu0 0.0
    %1168 = vmatpush.msra.mxu0 0.0
    %1169 = vmatpush.msra.mxu0 0.0
    %1170 = vmatpush.msra.mxu0 0.0
    %1171 = vmatpush.msra.mxu0 0.0
    %1172 = vmatpush.msra.mxu0 0.0
    %1173 = vmatpush.msra.mxu0 0.0
    %1174 = vmatpush.msra.mxu0 0.0
    %1175 = vmatpush.msra.mxu0 0.0
    %1176 = vmatpush.msra.mxu0 0.0
    %1177 = vmatpush.msra.mxu0 0.0
    %1178 = vmatpush.msra.mxu0 0.0
    %1179 = vmatpush.msra.mxu0 %v147
    %1180 = vmatpush.msra.mxu0 %v146
    %1181 = vmatpush.msra.mxu0 %v145
    %1182 = vmatpush.msra.mxu0 %v144
    %1183 = vmatmul.f32.gmra.mxu0 %v1106
    %v1184 = vpop.f32.mrf.mxu0
    %v1185 = vadd.f32 0.0, %v1184
    %1186 = vdwg.mxu0
    %v1188 = vrot.slane %v1185, 4
    %v1190 = vadd.f32 %v221, %v1188
    %v1191 = vxor.u32 %v1190, 2147483648
    %v1192 = vmul.f32 %v1191, 1.442695
    %v1193 = vpow.pop %v1192
    %v1194 = vadd.f32 %v1193, 1.0
    %v1195 = vrcp.pop %v1194
    %v1196 = vmul.f32 %v1194, %v1195
    %v1197 = vsub.f32 1.0, %v1196
    %v1198 = vmul.f32 %v1195, %v1197
    %v1199 = vadd.f32 %v1195, %v1198
    %vm1200 = vweird.f32 %v1194
    %vm1201 = vweird.f32 %v1195
    %vm1202 = vmor %vm1200, %vm1201
    %v1203 = vsel %vm1202, %v1195, %v1199
    %v1204 = vand.u32 2147483647, %v1194
    %vm1205 = vcmp.eq.f32.partialorder %v1204, 8.507059e+37
    %v1206 = vand.u32 %v1194, 2147483648
    %v1207 = vor.u32 1.1754944e-38, %v1206
    %v1208 = vsel %vm1205, %v1207, %v1203
    %v1209 = vmul.f32 1.0, %v1208
    %v1210 = vmul.f32 %v1209, 2.0
    %v1211 = vsub.f32 %v1210, 1.0
    %v1213 = vrot.slane %v1070, 6
    %v1215 = vmul.f32 %v1209, %v1213
    %1217 = vrot.lane.b32.xlu0 %v1211, 64
    %v1218 = vpop.permute.xlu0 %1217
    %v1220 = vmul.f32 %v1209, %v1218
    %1222 = vrot.lane.b32.xlu0 %v1220, 32
    %v1223 = vpop.permute.xlu0 %1222
    %v1225 = vadd.f32 %v1215, %v1223
    %v1226 = vtanh.pop %v1225
    %1228 = vrot.lane.b32.xlu0 %v1226, 64
    %v1229 = vpop.permute.xlu0 %1228
    %v1231 = vmul.f32 %v1209, %v1229
    %1233 = vrot.lane.b32.xlu0 %v1166, 32
    %v1234 = vpop.permute.xlu0 %1233
    %v1235 = vsel %vm249, %v1234, 0
    %1237 = vmatpush.msra.mxu0 0.0
    %1238 = vmatpush.msra.mxu0 0.0
    %1239 = vmatpush.msra.mxu0 0.0
    %1240 = vmatpush.msra.mxu0 0.0
    %1241 = vmatpush.msra.mxu0 0.0
    %1242 = vmatpush.msra.mxu0 0.0
    %1243 = vmatpush.msra.mxu0 0.0
    %1244 = vmatpush.msra.mxu0 0.0
    %1245 = vmatpush.msra.mxu0 0.0
    %1246 = vmatpush.msra.mxu0 0.0
    %1247 = vmatpush.msra.mxu0 0.0
    %1248 = vmatpush.msra.mxu0 0.0
    %1249 = vmatpush.msra.mxu0 %v155
    %1250 = vmatpush.msra.mxu0 %v154
    %1251 = vmatpush.msra.mxu0 %v153
    %1252 = vmatpush.msra.mxu0 %v152
    %1253 = vmatmul.f32.gmra.mxu0 %v1235
    %v1254 = vpop.f32.mrf.mxu0
    %v1255 = vadd.f32 0.0, %v1254
    %1256 = vdwg.mxu0
    %v1258 = vrot.slane %v1231, 4
    %1259 = vrot.lane.b32.xlu0 %v1258, 32
    %v1260 = vpop.permute.xlu0 %1259
    %v1261 = vsel %vm249, %v1260, 0
    %1263 = vmatpush.msra.mxu0 0.0
    %1264 = vmatpush.msra.mxu0 0.0
    %1265 = vmatpush.msra.mxu0 0.0
    %1266 = vmatpush.msra.mxu0 0.0
    %1267 = vmatpush.msra.mxu0 0.0
    %1268 = vmatpush.msra.mxu0 0.0
    %1269 = vmatpush.msra.mxu0 0.0
    %1270 = vmatpush.msra.mxu0 0.0
    %1271 = vmatpush.msra.mxu0 0.0
    %1272 = vmatpush.msra.mxu0 0.0
    %1273 = vmatpush.msra.mxu0 0.0
    %1274 = vmatpush.msra.mxu0 0.0
    %1275 = vmatpush.msra.mxu0 %v151
    %1276 = vmatpush.msra.mxu0 %v150
    %1277 = vmatpush.msra.mxu0 %v149
    %1278 = vmatpush.msra.mxu0 %v148
    %1279 = vmatmul.f32.gmra.mxu0 %v1261
    %v1280 = vpop.f32.mrf.mxu0
    %v1281 = vadd.f32 %v1255, %v1280
    %1282 = vdwg.mxu0
    %v1283 = vadd.f32 %v1281, %v177
    %v1284 = vxor.u32 %v1283, 2147483648
    %v1285 = vmul.f32 %v1284, 1.442695
    %v1286 = vpow.pop %v1285
    %v1287 = vadd.f32 %v1286, 1.0
    %v1288 = vrcp.pop %v1287
    %v1289 = vmul.f32 %v1287, %v1288
    %v1290 = vsub.f32 1.0, %v1289
    %v1291 = vmul.f32 %v1288, %v1290
    %v1292 = vadd.f32 %v1288, %v1291
    %vm1293 = vweird.f32 %v1287
    %vm1294 = vweird.f32 %v1288
    %vm1295 = vmor %vm1293, %vm1294
    %v1296 = vsel %vm1295, %v1288, %v1292
    %v1297 = vand.u32 2147483647, %v1287
    %vm1298 = vcmp.eq.f32.partialorder %v1297, 8.507059e+37
    %v1299 = vand.u32 %v1287, 2147483648
    %v1300 = vor.u32 1.1754944e-38, %v1299
    %v1301 = vsel %vm1298, %v1300, %v1296
    %v1302 = vmul.f32 1.0, %v1301
    %v1303 = vmul.f32 %v1302, 2.0
    %v1304 = vsub.f32 %v1303, 1.0
    %v1305 = vmul.f32 %v1302, %v1160
    %1307 = vrot.lane.b32.xlu0 %v1304, 64
    %v1308 = vpop.permute.xlu0 %1307
    %v1310 = vmul.f32 %v1302, %v1308
    %1312 = vrot.lane.b32.xlu0 %v1310, 32
    %v1313 = vpop.permute.xlu0 %1312
    %v1315 = vadd.f32 %v1305, %v1313
    %v1316 = vtanh.pop %v1315
    %1318 = vrot.lane.b32.xlu0 %v1316, 64
    %v1319 = vpop.permute.xlu0 %1318
    %v1321 = vmul.f32 %v1302, %v1319
    %1322 = vmatpush.msra.mxu0 0.0
    %1323 = vmatpush.msra.mxu0 0.0
    %1324 = vmatpush.msra.mxu0 0.0
    %1325 = vmatpush.msra.mxu0 0.0
    %1326 = vmatpush.msra.mxu0 0.0
    %1327 = vmatpush.msra.mxu0 0.0
    %1328 = vmatpush.msra.mxu0 0.0
    %1329 = vmatpush.msra.mxu0 0.0
    %1330 = vmatpush.msra.mxu0 0.0
    %1331 = vmatpush.msra.mxu0 0.0
    %1332 = vmatpush.msra.mxu0 0.0
    %1333 = vmatpush.msra.mxu0 0.0
    %1334 = vmatpush.msra.mxu0 %v147
    %1335 = vmatpush.msra.mxu0 %v146
    %1336 = vmatpush.msra.mxu0 %v145
    %1337 = vmatpush.msra.mxu0 %v144
    %1338 = vmatmul.f32.gmra.mxu0 %v1261
    %v1339 = vpop.f32.mrf.mxu0
    %v1340 = vadd.f32 0.0, %v1339
    %1341 = vdwg.mxu0
    %v1343 = vrot.slane %v1340, 2
    %v1345 = vadd.f32 %v221, %v1343
    %v1346 = vxor.u32 %v1345, 2147483648
    %v1347 = vmul.f32 %v1346, 1.442695
    %v1348 = vpow.pop %v1347
    %v1349 = vadd.f32 %v1348, 1.0
    %v1350 = vrcp.pop %v1349
    %v1351 = vmul.f32 %v1349, %v1350
    %v1352 = vsub.f32 1.0, %v1351
    %v1353 = vmul.f32 %v1350, %v1352
    %v1354 = vadd.f32 %v1350, %v1353
    %vm1355 = vweird.f32 %v1349
    %vm1356 = vweird.f32 %v1350
    %vm1357 = vmor %vm1355, %vm1356
    %v1358 = vsel %vm1357, %v1350, %v1354
    %v1359 = vand.u32 2147483647, %v1349
    %vm1360 = vcmp.eq.f32.partialorder %v1359, 8.507059e+37
    %v1361 = vand.u32 %v1349, 2147483648
    %v1362 = vor.u32 1.1754944e-38, %v1361
    %v1363 = vsel %vm1360, %v1362, %v1358
    %v1364 = vmul.f32 1.0, %v1363
    %v1365 = vmul.f32 %v1364, 2.0
    %v1366 = vsub.f32 %v1365, 1.0
    %v1368 = vrot.slane %v1225, 6
    %v1370 = vmul.f32 %v1364, %v1368
    %1372 = vrot.lane.b32.xlu0 %v1366, 64
    %v1373 = vpop.permute.xlu0 %1372
    %v1375 = vmul.f32 %v1364, %v1373
    %1377 = vrot.lane.b32.xlu0 %v1375, 32
    %v1378 = vpop.permute.xlu0 %1377
    %v1380 = vadd.f32 %v1370, %v1378
    %v1381 = vtanh.pop %v1380
    %1383 = vrot.lane.b32.xlu0 %v1381, 64
    %v1384 = vpop.permute.xlu0 %1383
    %v1386 = vmul.f32 %v1364, %v1384
    %1388 = vrot.lane.b32.xlu0 %v1321, 32
    %v1389 = vpop.permute.xlu0 %1388
    %v1390 = vsel %vm249, %v1389, 0
    %1392 = vmatpush.msra.mxu0 0.0
    %1393 = vmatpush.msra.mxu0 0.0
    %1394 = vmatpush.msra.mxu0 0.0
    %1395 = vmatpush.msra.mxu0 0.0
    %1396 = vmatpush.msra.mxu0 0.0
    %1397 = vmatpush.msra.mxu0 0.0
    %1398 = vmatpush.msra.mxu0 0.0
    %1399 = vmatpush.msra.mxu0 0.0
    %1400 = vmatpush.msra.mxu0 0.0
    %1401 = vmatpush.msra.mxu0 0.0
    %1402 = vmatpush.msra.mxu0 0.0
    %1403 = vmatpush.msra.mxu0 0.0
    %1404 = vmatpush.msra.mxu0 %v155
    %1405 = vmatpush.msra.mxu0 %v154
    %1406 = vmatpush.msra.mxu0 %v153
    %1407 = vmatpush.msra.mxu0 %v152
    %1408 = vmatmul.f32.gmra.mxu0 %v1390
    %v1409 = vpop.f32.mrf.mxu0
    %v1410 = vadd.f32 0.0, %v1409
    %1411 = vdwg.mxu0
    %v1413 = vrot.slane %v1386, 6
    %1414 = vrot.lane.b32.xlu0 %v1413, 32
    %v1415 = vpop.permute.xlu0 %1414
    %v1416 = vsel %vm249, %v1415, 0
    %1418 = vmatpush.msra.mxu0 0.0
    %1419 = vmatpush.msra.mxu0 0.0
    %1420 = vmatpush.msra.mxu0 0.0
    %1421 = vmatpush.msra.mxu0 0.0
    %1422 = vmatpush.msra.mxu0 0.0
    %1423 = vmatpush.msra.mxu0 0.0
    %1424 = vmatpush.msra.mxu0 0.0
    %1425 = vmatpush.msra.mxu0 0.0
    %1426 = vmatpush.msra.mxu0 0.0
    %1427 = vmatpush.msra.mxu0 0.0
    %1428 = vmatpush.msra.mxu0 0.0
    %1429 = vmatpush.msra.mxu0 0.0
    %1430 = vmatpush.msra.mxu0 %v151
    %1431 = vmatpush.msra.mxu0 %v150
    %1432 = vmatpush.msra.mxu0 %v149
    %1433 = vmatpush.msra.mxu0 %v148
    %1434 = vmatmul.f32.gmra.mxu0 %v1416
    %v1435 = vpop.f32.mrf.mxu0
    %v1436 = vadd.f32 %v1410, %v1435
    %1437 = vdwg.mxu0
    %v1438 = vadd.f32 %v1436, %v177
    %v1439 = vxor.u32 %v1438, 2147483648
    %v1440 = vmul.f32 %v1439, 1.442695
    %v1441 = vpow.pop %v1440
    %v1442 = vadd.f32 %v1441, 1.0
    %v1443 = vrcp.pop %v1442
    %v1444 = vmul.f32 %v1442, %v1443
    %v1445 = vsub.f32 1.0, %v1444
    %v1446 = vmul.f32 %v1443, %v1445
    %v1447 = vadd.f32 %v1443, %v1446
    %vm1448 = vweird.f32 %v1442
    %vm1449 = vweird.f32 %v1443
    %vm1450 = vmor %vm1448, %vm1449
    %v1451 = vsel %vm1450, %v1443, %v1447
    %v1452 = vand.u32 2147483647, %v1442
    %vm1453 = vcmp.eq.f32.partialorder %v1452, 8.507059e+37
    %v1454 = vand.u32 %v1442, 2147483648
    %v1455 = vor.u32 1.1754944e-38, %v1454
    %v1456 = vsel %vm1453, %v1455, %v1451
    %v1457 = vmul.f32 1.0, %v1456
    %v1458 = vmul.f32 %v1457, 2.0
    %v1459 = vsub.f32 %v1458, 1.0
    %v1460 = vmul.f32 %v1457, %v1315
    %1462 = vrot.lane.b32.xlu0 %v1459, 64
    %v1463 = vpop.permute.xlu0 %1462
    %v1465 = vmul.f32 %v1457, %v1463
    %1467 = vrot.lane.b32.xlu0 %v1465, 32
    %v1468 = vpop.permute.xlu0 %1467
    %v1470 = vadd.f32 %v1460, %v1468
    %v1471 = vtanh.pop %v1470
    %1473 = vrot.lane.b32.xlu0 %v1471, 64
    %v1474 = vpop.permute.xlu0 %1473
    %v1476 = vmul.f32 %v1457, %v1474
    %1477 = vmatpush.msra.mxu0 0.0
    %1478 = vmatpush.msra.mxu0 0.0
    %1479 = vmatpush.msra.mxu0 0.0
    %1480 = vmatpush.msra.mxu0 0.0
    %1481 = vmatpush.msra.mxu0 0.0
    %1482 = vmatpush.msra.mxu0 0.0
    %1483 = vmatpush.msra.mxu0 0.0
    %1484 = vmatpush.msra.mxu0 0.0
    %1485 = vmatpush.msra.mxu0 0.0
    %1486 = vmatpush.msra.mxu0 0.0
    %1487 = vmatpush.msra.mxu0 0.0
    %1488 = vmatpush.msra.mxu0 0.0
    %1489 = vmatpush.msra.mxu0 %v163
    %1490 = vmatpush.msra.mxu0 %v162
    %1491 = vmatpush.msra.mxu0 %v161
    %1492 = vmatpush.msra.mxu0 %v160
    %1493 = vmatmul.f32.gmra.mxu0 %v1416
    %v1494 = vpop.f32.mrf.mxu0
    %v1495 = vadd.f32 0.0, %v1494
    %1496 = vdwg.mxu0
    %v1497 = vadd.f32 %v247, %v1495
    %v1498 = vxor.u32 %v1497, 2147483648
    %v1499 = vmul.f32 %v1498, 1.442695
    %v1500 = vpow.pop %v1499
    %v1501 = vadd.f32 %v1500, 1.0
    %v1502 = vrcp.pop %v1501
    %v1503 = vmul.f32 %v1501, %v1502
    %v1504 = vsub.f32 1.0, %v1503
    %v1505 = vmul.f32 %v1502, %v1504
    %v1506 = vadd.f32 %v1502, %v1505
    %vm1507 = vweird.f32 %v1501
    %vm1508 = vweird.f32 %v1502
    %vm1509 = vmor %vm1507, %vm1508
    %v1510 = vsel %vm1509, %v1502, %v1506
    %v1511 = vand.u32 2147483647, %v1501
    %vm1512 = vcmp.eq.f32.partialorder %v1511, 8.507059e+37
    %v1513 = vand.u32 %v1501, 2147483648
    %v1514 = vor.u32 1.1754944e-38, %v1513
    %v1515 = vsel %vm1512, %v1514, %v1510
    %v1516 = vmul.f32 1.0, %v1515
    %v1517 = vmul.f32 %v1516, 2.0
    %v1518 = vsub.f32 %v1517, 1.0
    %v1520 = vrot.slane %v1380, 6
    %v1522 = vmul.f32 %v1516, %v1520
    %1524 = vrot.lane.b32.xlu0 %v1518, 64
    %v1525 = vpop.permute.xlu0 %1524
    %v1527 = vmul.f32 %v1516, %v1525
    %1529 = vrot.lane.b32.xlu0 %v1527, 32
    %v1530 = vpop.permute.xlu0 %1529
    %v1532 = vadd.f32 %v1522, %v1530
    %v1533 = vtanh.pop %v1532
    %1535 = vrot.lane.b32.xlu0 %v1533, 64
    %v1536 = vpop.permute.xlu0 %1535
    %v1538 = vmul.f32 %v1516, %v1536
    %1540 = vrot.lane.b32.xlu0 %v1476, 32
    %v1541 = vpop.permute.xlu0 %1540
    %v1542 = vsel %vm249, %v1541, 0
    %1544 = vmatpush.msra.mxu0 0.0
    %1545 = vmatpush.msra.mxu0 0.0
    %1546 = vmatpush.msra.mxu0 0.0
    %1547 = vmatpush.msra.mxu0 0.0
    %1548 = vmatpush.msra.mxu0 0.0
    %1549 = vmatpush.msra.mxu0 0.0
    %1550 = vmatpush.msra.mxu0 0.0
    %1551 = vmatpush.msra.mxu0 0.0
    %1552 = vmatpush.msra.mxu0 0.0
    %1553 = vmatpush.msra.mxu0 0.0
    %1554 = vmatpush.msra.mxu0 0.0
    %1555 = vmatpush.msra.mxu0 0.0
    %1556 = vmatpush.msra.mxu0 %v171
    %1557 = vmatpush.msra.mxu0 %v170
    %1558 = vmatpush.msra.mxu0 %v169
    %1559 = vmatpush.msra.mxu0 %v168
    %1560 = vmatmul.f32.gmra.mxu0 %v1542
    %v1561 = vpop.f32.mrf.mxu0
    %v1562 = vadd.f32 0.0, %v1561
    %1563 = vdwg.mxu0
    %1565 = vrot.lane.b32.xlu0 %v1538, 32
    %v1566 = vpop.permute.xlu0 %1565
    %v1567 = vsel %vm249, %v1566, 0
    %1569 = vmatpush.msra.mxu0 0.0
    %1570 = vmatpush.msra.mxu0 0.0
    %1571 = vmatpush.msra.mxu0 0.0
    %1572 = vmatpush.msra.mxu0 0.0
    %1573 = vmatpush.msra.mxu0 0.0
    %1574 = vmatpush.msra.mxu0 0.0
    %1575 = vmatpush.msra.mxu0 0.0
    %1576 = vmatpush.msra.mxu0 0.0
    %1577 = vmatpush.msra.mxu0 0.0
    %1578 = vmatpush.msra.mxu0 0.0
    %1579 = vmatpush.msra.mxu0 0.0
    %1580 = vmatpush.msra.mxu0 0.0
    %1581 = vmatpush.msra.mxu0 %v167
    %1582 = vmatpush.msra.mxu0 %v166
    %1583 = vmatpush.msra.mxu0 %v165
    %1584 = vmatpush.msra.mxu0 %v164
    %1585 = vmatmul.f32.gmra.mxu0 %v1567
    %v1586 = vpop.f32.mrf.mxu0
    %v1587 = vadd.f32 %v1562, %v1586
    %1588 = vdwg.mxu0
    %v1589 = vadd.f32 %v1587, %v181
    %v1590 = vxor.u32 %v1589, 2147483648
    %v1591 = vmul.f32 %v1590, 1.442695
    %v1592 = vpow.pop %v1591
    %v1593 = vadd.f32 %v1592, 1.0
    %v1594 = vrcp.pop %v1593
    %v1595 = vmul.f32 %v1593, %v1594
    %v1596 = vsub.f32 1.0, %v1595
    %v1597 = vmul.f32 %v1594, %v1596
    %v1598 = vadd.f32 %v1594, %v1597
    %vm1599 = vweird.f32 %v1593
    %vm1600 = vweird.f32 %v1594
    %vm1601 = vmor %vm1599, %vm1600
    %v1602 = vsel %vm1601, %v1594, %v1598
    %v1603 = vand.u32 2147483647, %v1593
    %vm1604 = vcmp.eq.f32.partialorder %v1603, 8.507059e+37
    %v1605 = vand.u32 %v1593, 2147483648
    %v1606 = vor.u32 1.1754944e-38, %v1605
    %v1607 = vsel %vm1604, %v1606, %v1602
    %v1608 = vmul.f32 1.0, %v1607
    %v1609 = vmul.f32 %v1608, 2.0
    %v1610 = vsub.f32 %v1609, 1.0
    %v1611 = vmul.f32 %v1608, %v1470
    %1613 = vrot.lane.b32.xlu0 %v1610, 64
    %v1614 = vpop.permute.xlu0 %1613
    %v1616 = vmul.f32 %v1608, %v1614
    %1618 = vrot.lane.b32.xlu0 %v1616, 32
    %v1619 = vpop.permute.xlu0 %1618
    %v1621 = vadd.f32 %v1611, %v1619
    %v1622 = vtanh.pop %v1621
    %1624 = vrot.lane.b32.xlu0 %v1622, 64
    %v1625 = vpop.permute.xlu0 %1624
    %v1627 = vmul.f32 %v1608, %v1625
    %1629 = vrot.lane.b32.xlu0 %v1627, 32
    %v1630 = vpop.permute.xlu0 %1629
    %v1631 = vsel %vm249, %v1630, 0
    %1633 = vmatpush.msra.mxu0 0.0
    %1634 = vmatpush.msra.mxu0 0.0
    %1635 = vmatpush.msra.mxu0 0.0
    %1636 = vmatpush.msra.mxu0 0.0
    %1637 = vmatpush.msra.mxu0 0.0
    %1638 = vmatpush.msra.mxu0 0.0
    %1639 = vmatpush.msra.mxu0 0.0
    %1640 = vmatpush.msra.mxu0 0.0
    %1641 = vmatpush.msra.mxu0 0.0
    %1642 = vmatpush.msra.mxu0 0.0
    %1643 = vmatpush.msra.mxu0 0.0
    %1644 = vmatpush.msra.mxu0 0.0
    %1645 = vmatpush.msra.mxu0 %v175
    %1646 = vmatpush.msra.mxu0 %v174
    %1647 = vmatpush.msra.mxu0 %v173
    %1648 = vmatpush.msra.mxu0 %v172
    %1649 = vmatmul.f32.gmra.mxu0 %v1631
    %v1650 = vpop.f32.mrf.mxu0
    %v1651 = vadd.f32 %v184, %v1650
    %1652 = vdwg.mxu0
    %1653 = vmatpush.msra.mxu0 0.0
    %1654 = vmatpush.msra.mxu0 0.0
    %1655 = vmatpush.msra.mxu0 0.0
    %1656 = vmatpush.msra.mxu0 0.0
    %1657 = vmatpush.msra.mxu0 0.0
    %1658 = vmatpush.msra.mxu0 0.0
    %1659 = vmatpush.msra.mxu0 0.0
    %1660 = vmatpush.msra.mxu0 0.0
    %1661 = vmatpush.msra.mxu0 0.0
    %1662 = vmatpush.msra.mxu0 0.0
    %1663 = vmatpush.msra.mxu0 0.0
    %1664 = vmatpush.msra.mxu0 0.0
    %1665 = vmatpush.msra.mxu0 %v163
    %1666 = vmatpush.msra.mxu0 %v162
    %1667 = vmatpush.msra.mxu0 %v161
    %1668 = vmatpush.msra.mxu0 %v160
    %1669 = vmatmul.f32.gmra.mxu0 %v1567
    %v1670 = vpop.f32.mrf.mxu0
    %v1671 = vadd.f32 0.0, %v1670
    %1672 = vdwg.mxu0
    %1673 = vmatpush.msra.mxu0 0.0
    %1674 = vmatpush.msra.mxu0 0.0
    %1675 = vmatpush.msra.mxu0 0.0
    %1676 = vmatpush.msra.mxu0 0.0
    %1677 = vmatpush.msra.mxu0 0.0
    %1678 = vmatpush.msra.mxu0 0.0
    %1679 = vmatpush.msra.mxu0 0.0
    %1680 = vmatpush.msra.mxu0 0.0
    %1681 = vmatpush.msra.mxu0 0.0
    %1682 = vmatpush.msra.mxu0 0.0
    %1683 = vmatpush.msra.mxu0 0.0
    %1684 = vmatpush.msra.mxu0 0.0
    %1685 = vmatpush.msra.mxu0 %v159
    %1686 = vmatpush.msra.mxu0 %v158
    %1687 = vmatpush.msra.mxu0 %v157
    %1688 = vmatpush.msra.mxu0 %v156
    %1689 = vmatmul.f32.gmra.mxu0 %v1631
    %v1690 = vpop.f32.mrf.mxu0
    %v1691 = vadd.f32 %v1671, %v1690
    %1692 = vdwg.mxu0
    %v1693 = vadd.f32 %v1691, %v179
    %v1694 = vxor.u32 %v1693, 2147483648
    %v1695 = vmul.f32 %v1694, 1.442695
    %v1696 = vpow.pop %v1695
    %v1697 = vadd.f32 %v1696, 1.0
    %v1698 = vrcp.pop %v1697
    %v1699 = vmul.f32 %v1697, %v1698
    %v1700 = vsub.f32 1.0, %v1699
    %v1701 = vmul.f32 %v1698, %v1700
    %v1702 = vadd.f32 %v1698, %v1701
    %vm1703 = vweird.f32 %v1697
    %vm1704 = vweird.f32 %v1698
    %vm1705 = vmor %vm1703, %vm1704
    %v1706 = vsel %vm1705, %v1698, %v1702
    %v1707 = vand.u32 2147483647, %v1697
    %vm1708 = vcmp.eq.f32.partialorder %v1707, 8.507059e+37
    %v1709 = vand.u32 %v1697, 2147483648
    %v1710 = vor.u32 1.1754944e-38, %v1709
    %v1711 = vsel %vm1708, %v1710, %v1706
    %v1712 = vmul.f32 1.0, %v1711
    %v1713 = vmul.f32 %v1712, 2.0
    %v1714 = vsub.f32 %v1713, 1.0
    %v1715 = vmul.f32 %v1712, %v1532
    %1717 = vrot.lane.b32.xlu0 %v1714, 64
    %v1718 = vpop.permute.xlu0 %1717
    %v1720 = vmul.f32 %v1712, %v1718
    %1722 = vrot.lane.b32.xlu0 %v1720, 32
    %v1723 = vpop.permute.xlu0 %1722
    %v1725 = vadd.f32 %v1715, %v1723
    %v1726 = vtanh.pop %v1725
    %1728 = vrot.lane.b32.xlu0 %v1726, 64
    %v1729 = vpop.permute.xlu0 %1728
    %v1731 = vmul.f32 %v1712, %v1729
    %1732 = vmatpush.msra.mxu0 0.0
    %1733 = vmatpush.msra.mxu0 0.0
    %1734 = vmatpush.msra.mxu0 0.0
    %1735 = vmatpush.msra.mxu0 0.0
    %1736 = vmatpush.msra.mxu0 0.0
    %1737 = vmatpush.msra.mxu0 0.0
    %1738 = vmatpush.msra.mxu0 0.0
    %1739 = vmatpush.msra.mxu0 0.0
    %1740 = vmatpush.msra.mxu0 0.0
    %1741 = vmatpush.msra.mxu0 0.0
    %1742 = vmatpush.msra.mxu0 0.0
    %1743 = vmatpush.msra.mxu0 0.0
    %1744 = vmatpush.msra.mxu0 %v171
    %1745 = vmatpush.msra.mxu0 %v170
    %1746 = vmatpush.msra.mxu0 %v169
    %1747 = vmatpush.msra.mxu0 %v168
    %1748 = vmatmul.f32.gmra.mxu0 %v1631
    %v1749 = vpop.f32.mrf.mxu0
    %v1750 = vadd.f32 0.0, %v1749
    %1751 = vdwg.mxu0
    %1753 = vrot.lane.b32.xlu0 %v1731, 32
    %v1754 = vpop.permute.xlu0 %1753
    %v1755 = vsel %vm249, %v1754, 0
    %1757 = vmatpush.msra.mxu0 0.0
    %1758 = vmatpush.msra.mxu0 0.0
    %1759 = vmatpush.msra.mxu0 0.0
    %1760 = vmatpush.msra.mxu0 0.0
    %1761 = vmatpush.msra.mxu0 0.0
    %1762 = vmatpush.msra.mxu0 0.0
    %1763 = vmatpush.msra.mxu0 0.0
    %1764 = vmatpush.msra.mxu0 0.0
    %1765 = vmatpush.msra.mxu0 0.0
    %1766 = vmatpush.msra.mxu0 0.0
    %1767 = vmatpush.msra.mxu0 0.0
    %1768 = vmatpush.msra.mxu0 0.0
    %1769 = vmatpush.msra.mxu0 %v167
    %1770 = vmatpush.msra.mxu0 %v166
    %1771 = vmatpush.msra.mxu0 %v165
    %1772 = vmatpush.msra.mxu0 %v164
    %1773 = vmatmul.f32.gmra.mxu0 %v1755
    %v1774 = vpop.f32.mrf.mxu0
    %v1775 = vadd.f32 %v1750, %v1774
    %1776 = vdwg.mxu0
    %v1777 = vadd.f32 %v1775, %v181
    %v1778 = vxor.u32 %v1777, 2147483648
    %v1779 = vmul.f32 %v1778, 1.442695
    %v1780 = vpow.pop %v1779
    %v1781 = vadd.f32 %v1780, 1.0
    %v1782 = vrcp.pop %v1781
    %v1783 = vmul.f32 %v1781, %v1782
    %v1784 = vsub.f32 1.0, %v1783
    %v1785 = vmul.f32 %v1782, %v1784
    %v1786 = vadd.f32 %v1782, %v1785
    %vm1787 = vweird.f32 %v1781
    %vm1788 = vweird.f32 %v1782
    %vm1789 = vmor %vm1787, %vm1788
    %v1790 = vsel %vm1789, %v1782, %v1786
    %v1791 = vand.u32 2147483647, %v1781
    %vm1792 = vcmp.eq.f32.partialorder %v1791, 8.507059e+37
    %v1793 = vand.u32 %v1781, 2147483648
    %v1794 = vor.u32 1.1754944e-38, %v1793
    %v1795 = vsel %vm1792, %v1794, %v1790
    %v1796 = vmul.f32 1.0, %v1795
    %v1797 = vmul.f32 %v1796, 2.0
    %v1798 = vsub.f32 %v1797, 1.0
    %v1799 = vmul.f32 %v1796, %v1621
    %1801 = vrot.lane.b32.xlu0 %v1798, 64
    %v1802 = vpop.permute.xlu0 %1801
    %v1804 = vmul.f32 %v1796, %v1802
    %1806 = vrot.lane.b32.xlu0 %v1804, 32
    %v1807 = vpop.permute.xlu0 %1806
    %v1809 = vadd.f32 %v1799, %v1807
    %v1810 = vtanh.pop %v1809
    %1812 = vrot.lane.b32.xlu0 %v1810, 64
    %v1813 = vpop.permute.xlu0 %1812
    %v1815 = vmul.f32 %v1796, %v1813
    %1817 = vrot.lane.b32.xlu0 %v1815, 32
    %v1818 = vpop.permute.xlu0 %1817
    %v1819 = vsel %vm249, %v1818, 0
    %1821 = vmatpush.msra.mxu0 0.0
    %1822 = vmatpush.msra.mxu0 0.0
    %1823 = vmatpush.msra.mxu0 0.0
    %1824 = vmatpush.msra.mxu0 0.0
    %1825 = vmatpush.msra.mxu0 0.0
    %1826 = vmatpush.msra.mxu0 0.0
    %1827 = vmatpush.msra.mxu0 0.0
    %1828 = vmatpush.msra.mxu0 0.0
    %1829 = vmatpush.msra.mxu0 0.0
    %1830 = vmatpush.msra.mxu0 0.0
    %1831 = vmatpush.msra.mxu0 0.0
    %1832 = vmatpush.msra.mxu0 0.0
    %1833 = vmatpush.msra.mxu0 %v175
    %1834 = vmatpush.msra.mxu0 %v174
    %1835 = vmatpush.msra.mxu0 %v173
    %1836 = vmatpush.msra.mxu0 %v172
    %1837 = vmatmul.f32.gmra.mxu0 %v1819
    %v1838 = vpop.f32.mrf.mxu0
    %v1839 = vadd.f32 %v184, %v1838
    %1840 = vdwg.mxu0
    %1841 = vmatpush.msra.mxu0 0.0
    %1842 = vmatpush.msra.mxu0 0.0
    %1843 = vmatpush.msra.mxu0 0.0
    %1844 = vmatpush.msra.mxu0 0.0
    %1845 = vmatpush.msra.mxu0 0.0
    %1846 = vmatpush.msra.mxu0 0.0
    %1847 = vmatpush.msra.mxu0 0.0
    %1848 = vmatpush.msra.mxu0 0.0
    %1849 = vmatpush.msra.mxu0 0.0
    %1850 = vmatpush.msra.mxu0 0.0
    %1851 = vmatpush.msra.mxu0 0.0
    %1852 = vmatpush.msra.mxu0 0.0
    %1853 = vmatpush.msra.mxu0 %v163
    %1854 = vmatpush.msra.mxu0 %v162
    %1855 = vmatpush.msra.mxu0 %v161
    %1856 = vmatpush.msra.mxu0 %v160
    %1857 = vmatmul.f32.gmra.mxu0 %v1755
    %v1858 = vpop.f32.mrf.mxu0
    %v1859 = vadd.f32 0.0, %v1858
    %1860 = vdwg.mxu0
    %1861 = vmatpush.msra.mxu0 0.0
    %1862 = vmatpush.msra.mxu0 0.0
    %1863 = vmatpush.msra.mxu0 0.0
    %1864 = vmatpush.msra.mxu0 0.0
    %1865 = vmatpush.msra.mxu0 0.0
    %1866 = vmatpush.msra.mxu0 0.0
    %1867 = vmatpush.msra.mxu0 0.0
    %1868 = vmatpush.msra.mxu0 0.0
    %1869 = vmatpush.msra.mxu0 0.0
    %1870 = vmatpush.msra.mxu0 0.0
    %1871 = vmatpush.msra.mxu0 0.0
    %1872 = vmatpush.msra.mxu0 0.0
    %1873 = vmatpush.msra.mxu0 %v159
    %1874 = vmatpush.msra.mxu0 %v158
    %1875 = vmatpush.msra.mxu0 %v157
    %1876 = vmatpush.msra.mxu0 %v156
    %1877 = vmatmul.f32.gmra.mxu0 %v1819
    %v1878 = vpop.f32.mrf.mxu0
    %v1879 = vadd.f32 %v1859, %v1878
    %1880 = vdwg.mxu0
    %v1881 = vadd.f32 %v1879, %v179
    %v1882 = vxor.u32 %v1881, 2147483648
    %v1883 = vmul.f32 %v1882, 1.442695
    %v1884 = vpow.pop %v1883
    %v1885 = vadd.f32 %v1884, 1.0
    %v1886 = vrcp.pop %v1885
    %v1887 = vmul.f32 %v1885, %v1886
    %v1888 = vsub.f32 1.0, %v1887
    %v1889 = vmul.f32 %v1886, %v1888
    %v1890 = vadd.f32 %v1886, %v1889
    %vm1891 = vweird.f32 %v1885
    %vm1892 = vweird.f32 %v1886
    %vm1893 = vmor %vm1891, %vm1892
    %v1894 = vsel %vm1893, %v1886, %v1890
    %v1895 = vand.u32 2147483647, %v1885
    %vm1896 = vcmp.eq.f32.partialorder %v1895, 8.507059e+37
    %v1897 = vand.u32 %v1885, 2147483648
    %v1898 = vor.u32 1.1754944e-38, %v1897
    %v1899 = vsel %vm1896, %v1898, %v1894
    %v1900 = vmul.f32 1.0, %v1899
    %v1901 = vmul.f32 %v1900, 2.0
    %v1902 = vsub.f32 %v1901, 1.0
    %v1903 = vmul.f32 %v1900, %v1725
    %1905 = vrot.lane.b32.xlu0 %v1902, 64
    %v1906 = vpop.permute.xlu0 %1905
    %v1908 = vmul.f32 %v1900, %v1906
    %1910 = vrot.lane.b32.xlu0 %v1908, 32
    %v1911 = vpop.permute.xlu0 %1910
    %v1913 = vadd.f32 %v1903, %v1911
    %v1914 = vtanh.pop %v1913
    %1916 = vrot.lane.b32.xlu0 %v1914, 64
    %v1917 = vpop.permute.xlu0 %1916
    %v1919 = vmul.f32 %v1900, %v1917
    %1920 = vmatpush.msra.mxu0 0.0
    %1921 = vmatpush.msra.mxu0 0.0
    %1922 = vmatpush.msra.mxu0 0.0
    %1923 = vmatpush.msra.mxu0 0.0
    %1924 = vmatpush.msra.mxu0 0.0
    %1925 = vmatpush.msra.mxu0 0.0
    %1926 = vmatpush.msra.mxu0 0.0
    %1927 = vmatpush.msra.mxu0 0.0
    %1928 = vmatpush.msra.mxu0 0.0
    %1929 = vmatpush.msra.mxu0 0.0
    %1930 = vmatpush.msra.mxu0 0.0
    %1931 = vmatpush.msra.mxu0 0.0
    %1932 = vmatpush.msra.mxu0 %v171
    %1933 = vmatpush.msra.mxu0 %v170
    %1934 = vmatpush.msra.mxu0 %v169
    %1935 = vmatpush.msra.mxu0 %v168
    %1936 = vmatmul.f32.gmra.mxu0 %v1819
    %v1937 = vpop.f32.mrf.mxu0
    %v1938 = vadd.f32 0.0, %v1937
    %1939 = vdwg.mxu0
    %1941 = vrot.lane.b32.xlu0 %v1919, 32
    %v1942 = vpop.permute.xlu0 %1941
    %v1943 = vsel %vm249, %v1942, 0
    %1945 = vmatpush.msra.mxu0 0.0
    %1946 = vmatpush.msra.mxu0 0.0
    %1947 = vmatpush.msra.mxu0 0.0
    %1948 = vmatpush.msra.mxu0 0.0
    %1949 = vmatpush.msra.mxu0 0.0
    %1950 = vmatpush.msra.mxu0 0.0
    %1951 = vmatpush.msra.mxu0 0.0
    %1952 = vmatpush.msra.mxu0 0.0
    %1953 = vmatpush.msra.mxu0 0.0
    %1954 = vmatpush.msra.mxu0 0.0
    %1955 = vmatpush.msra.mxu0 0.0
    %1956 = vmatpush.msra.mxu0 0.0
    %1957 = vmatpush.msra.mxu0 %v167
    %1958 = vmatpush.msra.mxu0 %v166
    %1959 = vmatpush.msra.mxu0 %v165
    %1960 = vmatpush.msra.mxu0 %v164
    %1961 = vmatmul.f32.gmra.mxu0 %v1943
    %v1962 = vpop.f32.mrf.mxu0
    %v1963 = vadd.f32 %v1938, %v1962
    %1964 = vdwg.mxu0
    %v1965 = vadd.f32 %v1963, %v181
    %v1966 = vxor.u32 %v1965, 2147483648
    %v1967 = vmul.f32 %v1966, 1.442695
    %v1968 = vpow.pop %v1967
    %v1969 = vadd.f32 %v1968, 1.0
    %v1970 = vrcp.pop %v1969
    %v1971 = vmul.f32 %v1969, %v1970
    %v1972 = vsub.f32 1.0, %v1971
    %v1973 = vmul.f32 %v1970, %v1972
    %v1974 = vadd.f32 %v1970, %v1973
    %vm1975 = vweird.f32 %v1969
    %vm1976 = vweird.f32 %v1970
    %vm1977 = vmor %vm1975, %vm1976
    %v1978 = vsel %vm1977, %v1970, %v1974
    %v1979 = vand.u32 2147483647, %v1969
    %vm1980 = vcmp.eq.f32.partialorder %v1979, 8.507059e+37
    %v1981 = vand.u32 %v1969, 2147483648
    %v1982 = vor.u32 1.1754944e-38, %v1981
    %v1983 = vsel %vm1980, %v1982, %v1978
    %v1984 = vmul.f32 1.0, %v1983
    %v1985 = vmul.f32 %v1984, 2.0
    %v1986 = vsub.f32 %v1985, 1.0
    %v1987 = vmul.f32 %v1984, %v1809
    %1989 = vrot.lane.b32.xlu0 %v1986, 64
    %v1990 = vpop.permute.xlu0 %1989
    %v1992 = vmul.f32 %v1984, %v1990
    %1994 = vrot.lane.b32.xlu0 %v1992, 32
    %v1995 = vpop.permute.xlu0 %1994
    %v1997 = vadd.f32 %v1987, %v1995
    %v1998 = vtanh.pop %v1997
    %2000 = vrot.lane.b32.xlu0 %v1998, 64
    %v2001 = vpop.permute.xlu0 %2000
    %v2003 = vmul.f32 %v1984, %v2001
    %2005 = vrot.lane.b32.xlu0 %v2003, 32
    %v2006 = vpop.permute.xlu0 %2005
    %v2007 = vsel %vm249, %v2006, 0
    %2009 = vmatpush.msra.mxu0 0.0
    %2010 = vmatpush.msra.mxu0 0.0
    %2011 = vmatpush.msra.mxu0 0.0
    %2012 = vmatpush.msra.mxu0 0.0
    %2013 = vmatpush.msra.mxu0 0.0
    %2014 = vmatpush.msra.mxu0 0.0
    %2015 = vmatpush.msra.mxu0 0.0
    %2016 = vmatpush.msra.mxu0 0.0
    %2017 = vmatpush.msra.mxu0 0.0
    %2018 = vmatpush.msra.mxu0 0.0
    %2019 = vmatpush.msra.mxu0 0.0
    %2020 = vmatpush.msra.mxu0 0.0
    %2021 = vmatpush.msra.mxu0 %v175
    %2022 = vmatpush.msra.mxu0 %v174
    %2023 = vmatpush.msra.mxu0 %v173
    %2024 = vmatpush.msra.mxu0 %v172
    %2025 = vmatmul.f32.gmra.mxu0 %v2007
    %v2026 = vpop.f32.mrf.mxu0
    %v2027 = vadd.f32 %v184, %v2026
    %2028 = vdwg.mxu0
    %2029 = vmatpush.msra.mxu0 0.0
    %2030 = vmatpush.msra.mxu0 0.0
    %2031 = vmatpush.msra.mxu0 0.0
    %2032 = vmatpush.msra.mxu0 0.0
    %2033 = vmatpush.msra.mxu0 0.0
    %2034 = vmatpush.msra.mxu0 0.0
    %2035 = vmatpush.msra.mxu0 0.0
    %2036 = vmatpush.msra.mxu0 0.0
    %2037 = vmatpush.msra.mxu0 0.0
    %2038 = vmatpush.msra.mxu0 0.0
    %2039 = vmatpush.msra.mxu0 0.0
    %2040 = vmatpush.msra.mxu0 0.0
    %2041 = vmatpush.msra.mxu0 %v163
    %2042 = vmatpush.msra.mxu0 %v162
    %2043 = vmatpush.msra.mxu0 %v161
    %2044 = vmatpush.msra.mxu0 %v160
    %2045 = vmatmul.f32.gmra.mxu0 %v1943
    %v2046 = vpop.f32.mrf.mxu0
    %v2047 = vadd.f32 0.0, %v2046
    %2048 = vdwg.mxu0
    %2049 = vmatpush.msra.mxu0 0.0
    %2050 = vmatpush.msra.mxu0 0.0
    %2051 = vmatpush.msra.mxu0 0.0
    %2052 = vmatpush.msra.mxu0 0.0
    %2053 = vmatpush.msra.mxu0 0.0
    %2054 = vmatpush.msra.mxu0 0.0
    %2055 = vmatpush.msra.mxu0 0.0
    %2056 = vmatpush.msra.mxu0 0.0
    %2057 = vmatpush.msra.mxu0 0.0
    %2058 = vmatpush.msra.mxu0 0.0
    %2059 = vmatpush.msra.mxu0 0.0
    %2060 = vmatpush.msra.mxu0 0.0
    %2061 = vmatpush.msra.mxu0 %v159
    %2062 = vmatpush.msra.mxu0 %v158
    %2063 = vmatpush.msra.mxu0 %v157
    %2064 = vmatpush.msra.mxu0 %v156
    %2065 = vmatmul.f32.gmra.mxu0 %v2007
    %v2066 = vpop.f32.mrf.mxu0
    %v2067 = vadd.f32 %v2047, %v2066
    %2068 = vdwg.mxu0
    %v2069 = vadd.f32 %v2067, %v179
    %v2070 = vxor.u32 %v2069, 2147483648
    %v2071 = vmul.f32 %v2070, 1.442695
    %v2072 = vpow.pop %v2071
    %v2073 = vadd.f32 %v2072, 1.0
    %v2074 = vrcp.pop %v2073
    %v2075 = vmul.f32 %v2073, %v2074
    %v2076 = vsub.f32 1.0, %v2075
    %v2077 = vmul.f32 %v2074, %v2076
    %v2078 = vadd.f32 %v2074, %v2077
    %vm2079 = vweird.f32 %v2073
    %vm2080 = vweird.f32 %v2074
    %vm2081 = vmor %vm2079, %vm2080
    %v2082 = vsel %vm2081, %v2074, %v2078
    %v2083 = vand.u32 2147483647, %v2073
    %vm2084 = vcmp.eq.f32.partialorder %v2083, 8.507059e+37
    %v2085 = vand.u32 %v2073, 2147483648
    %v2086 = vor.u32 1.1754944e-38, %v2085
    %v2087 = vsel %vm2084, %v2086, %v2082
    %v2088 = vmul.f32 1.0, %v2087
    %v2089 = vmul.f32 %v2088, 2.0
    %v2090 = vsub.f32 %v2089, 1.0
    %v2091 = vmul.f32 %v2088, %v1913
    %2093 = vrot.lane.b32.xlu0 %v2090, 64
    %v2094 = vpop.permute.xlu0 %2093
    %v2096 = vmul.f32 %v2088, %v2094
    %2098 = vrot.lane.b32.xlu0 %v2096, 32
    %v2099 = vpop.permute.xlu0 %2098
    %v2101 = vadd.f32 %v2091, %v2099
    %v2102 = vtanh.pop %v2101
    %2104 = vrot.lane.b32.xlu0 %v2102, 64
    %v2105 = vpop.permute.xlu0 %2104
    %v2107 = vmul.f32 %v2088, %v2105
    %2108 = vmatpush.msra.mxu0 0.0
    %2109 = vmatpush.msra.mxu0 0.0
    %2110 = vmatpush.msra.mxu0 0.0
    %2111 = vmatpush.msra.mxu0 0.0
    %2112 = vmatpush.msra.mxu0 0.0
    %2113 = vmatpush.msra.mxu0 0.0
    %2114 = vmatpush.msra.mxu0 0.0
    %2115 = vmatpush.msra.mxu0 0.0
    %2116 = vmatpush.msra.mxu0 0.0
    %2117 = vmatpush.msra.mxu0 0.0
    %2118 = vmatpush.msra.mxu0 0.0
    %2119 = vmatpush.msra.mxu0 0.0
    %2120 = vmatpush.msra.mxu0 %v171
    %2121 = vmatpush.msra.mxu0 %v170
    %2122 = vmatpush.msra.mxu0 %v169
    %2123 = vmatpush.msra.mxu0 %v168
    %2124 = vmatmul.f32.gmra.mxu0 %v2007
    %v2125 = vpop.f32.mrf.mxu0
    %v2126 = vadd.f32 0.0, %v2125
    %2127 = vdwg.mxu0
    %2129 = vrot.lane.b32.xlu0 %v2107, 32
    %v2130 = vpop.permute.xlu0 %2129
    %v2131 = vsel %vm249, %v2130, 0
    %2133 = vmatpush.msra.mxu0 0.0
    %2134 = vmatpush.msra.mxu0 0.0
    %2135 = vmatpush.msra.mxu0 0.0
    %2136 = vmatpush.msra.mxu0 0.0
    %2137 = vmatpush.msra.mxu0 0.0
    %2138 = vmatpush.msra.mxu0 0.0
    %2139 = vmatpush.msra.mxu0 0.0
    %2140 = vmatpush.msra.mxu0 0.0
    %2141 = vmatpush.msra.mxu0 0.0
    %2142 = vmatpush.msra.mxu0 0.0
    %2143 = vmatpush.msra.mxu0 0.0
    %2144 = vmatpush.msra.mxu0 0.0
    %2145 = vmatpush.msra.mxu0 %v167
    %2146 = vmatpush.msra.mxu0 %v166
    %2147 = vmatpush.msra.mxu0 %v165
    %2148 = vmatpush.msra.mxu0 %v164
    %2149 = vmatmul.f32.gmra.mxu0 %v2131
    %v2150 = vpop.f32.mrf.mxu0
    %v2151 = vadd.f32 %v2126, %v2150
    %2152 = vdwg.mxu0
    %v2153 = vadd.f32 %v2151, %v181
    %v2154 = vxor.u32 %v2153, 2147483648
    %v2155 = vmul.f32 %v2154, 1.442695
    %v2156 = vpow.pop %v2155
    %v2157 = vadd.f32 %v2156, 1.0
    %v2158 = vrcp.pop %v2157
    %v2159 = vmul.f32 %v2157, %v2158
    %v2160 = vsub.f32 1.0, %v2159
    %v2161 = vmul.f32 %v2158, %v2160
    %v2162 = vadd.f32 %v2158, %v2161
    %vm2163 = vweird.f32 %v2157
    %vm2164 = vweird.f32 %v2158
    %vm2165 = vmor %vm2163, %vm2164
    %v2166 = vsel %vm2165, %v2158, %v2162
    %v2167 = vand.u32 2147483647, %v2157
    %vm2168 = vcmp.eq.f32.partialorder %v2167, 8.507059e+37
    %v2169 = vand.u32 %v2157, 2147483648
    %v2170 = vor.u32 1.1754944e-38, %v2169
    %v2171 = vsel %vm2168, %v2170, %v2166
    %v2172 = vmul.f32 1.0, %v2171
    %v2173 = vmul.f32 %v2172, 2.0
    %v2174 = vsub.f32 %v2173, 1.0
    %v2175 = vmul.f32 %v2172, %v1997
    %2177 = vrot.lane.b32.xlu0 %v2174, 64
    %v2178 = vpop.permute.xlu0 %2177
    %v2180 = vmul.f32 %v2172, %v2178
    %2182 = vrot.lane.b32.xlu0 %v2180, 32
    %v2183 = vpop.permute.xlu0 %2182
    %v2185 = vadd.f32 %v2175, %v2183
    %v2186 = vtanh.pop %v2185
    %2188 = vrot.lane.b32.xlu0 %v2186, 64
    %v2189 = vpop.permute.xlu0 %2188
    %v2191 = vmul.f32 %v2172, %v2189
    %2193 = vrot.lane.b32.xlu0 %v2191, 32
    %v2194 = vpop.permute.xlu0 %2193
    %v2195 = vsel %vm249, %v2194, 0
    %2197 = vmatpush.msra.mxu0 0.0
    %2198 = vmatpush.msra.mxu0 0.0
    %2199 = vmatpush.msra.mxu0 0.0
    %2200 = vmatpush.msra.mxu0 0.0
    %2201 = vmatpush.msra.mxu0 0.0
    %2202 = vmatpush.msra.mxu0 0.0
    %2203 = vmatpush.msra.mxu0 0.0
    %2204 = vmatpush.msra.mxu0 0.0
    %2205 = vmatpush.msra.mxu0 0.0
    %2206 = vmatpush.msra.mxu0 0.0
    %2207 = vmatpush.msra.mxu0 0.0
    %2208 = vmatpush.msra.mxu0 0.0
    %2209 = vmatpush.msra.mxu0 %v175
    %2210 = vmatpush.msra.mxu0 %v174
    %2211 = vmatpush.msra.mxu0 %v173
    %2212 = vmatpush.msra.mxu0 %v172
    %2213 = vmatmul.f32.gmra.mxu0 %v2195
    %v2214 = vpop.f32.mrf.mxu0
    %v2215 = vadd.f32 %v184, %v2214
    %2216 = vdwg.mxu0
    %2217 = vmatpush.msra.mxu0 0.0
    %2218 = vmatpush.msra.mxu0 0.0
    %2219 = vmatpush.msra.mxu0 0.0
    %2220 = vmatpush.msra.mxu0 0.0
    %2221 = vmatpush.msra.mxu0 0.0
    %2222 = vmatpush.msra.mxu0 0.0
    %2223 = vmatpush.msra.mxu0 0.0
    %2224 = vmatpush.msra.mxu0 0.0
    %2225 = vmatpush.msra.mxu0 0.0
    %2226 = vmatpush.msra.mxu0 0.0
    %2227 = vmatpush.msra.mxu0 0.0
    %2228 = vmatpush.msra.mxu0 0.0
    %2229 = vmatpush.msra.mxu0 %v163
    %2230 = vmatpush.msra.mxu0 %v162
    %2231 = vmatpush.msra.mxu0 %v161
    %2232 = vmatpush.msra.mxu0 %v160
    %2233 = vmatmul.f32.gmra.mxu0 %v2131
    %v2234 = vpop.f32.mrf.mxu0
    %v2235 = vadd.f32 0.0, %v2234
    %2236 = vdwg.mxu0
    %2237 = vmatpush.msra.mxu0 0.0
    %2238 = vmatpush.msra.mxu0 0.0
    %2239 = vmatpush.msra.mxu0 0.0
    %2240 = vmatpush.msra.mxu0 0.0
    %2241 = vmatpush.msra.mxu0 0.0
    %2242 = vmatpush.msra.mxu0 0.0
    %2243 = vmatpush.msra.mxu0 0.0
    %2244 = vmatpush.msra.mxu0 0.0
    %2245 = vmatpush.msra.mxu0 0.0
    %2246 = vmatpush.msra.mxu0 0.0
    %2247 = vmatpush.msra.mxu0 0.0
    %2248 = vmatpush.msra.mxu0 0.0
    %2249 = vmatpush.msra.mxu0 %v159
    %2250 = vmatpush.msra.mxu0 %v158
    %2251 = vmatpush.msra.mxu0 %v157
    %2252 = vmatpush.msra.mxu0 %v156
    %2253 = vmatmul.f32.gmra.mxu0 %v2195
    %v2254 = vpop.f32.mrf.mxu0
    %v2255 = vadd.f32 %v2235, %v2254
    %2256 = vdwg.mxu0
    %v2257 = vadd.f32 %v2255, %v179
    %v2258 = vxor.u32 %v2257, 2147483648
    %v2259 = vmul.f32 %v2258, 1.442695
    %v2260 = vpow.pop %v2259
    %v2261 = vadd.f32 %v2260, 1.0
    %v2262 = vrcp.pop %v2261
    %v2263 = vmul.f32 %v2261, %v2262
    %v2264 = vsub.f32 1.0, %v2263
    %v2265 = vmul.f32 %v2262, %v2264
    %v2266 = vadd.f32 %v2262, %v2265
    %vm2267 = vweird.f32 %v2261
    %vm2268 = vweird.f32 %v2262
    %vm2269 = vmor %vm2267, %vm2268
    %v2270 = vsel %vm2269, %v2262, %v2266
    %v2271 = vand.u32 2147483647, %v2261
    %vm2272 = vcmp.eq.f32.partialorder %v2271, 8.507059e+37
    %v2273 = vand.u32 %v2261, 2147483648
    %v2274 = vor.u32 1.1754944e-38, %v2273
    %v2275 = vsel %vm2272, %v2274, %v2270
    %v2276 = vmul.f32 1.0, %v2275
    %v2277 = vmul.f32 %v2276, 2.0
    %v2278 = vsub.f32 %v2277, 1.0
    %v2279 = vmul.f32 %v2276, %v2101
    %2281 = vrot.lane.b32.xlu0 %v2278, 64
    %v2282 = vpop.permute.xlu0 %2281
    %v2284 = vmul.f32 %v2276, %v2282
    %2286 = vrot.lane.b32.xlu0 %v2284, 32
    %v2287 = vpop.permute.xlu0 %2286
    %v2289 = vadd.f32 %v2279, %v2287
    %v2290 = vtanh.pop %v2289
    %2292 = vrot.lane.b32.xlu0 %v2290, 64
    %v2293 = vpop.permute.xlu0 %2292
    %v2295 = vmul.f32 %v2276, %v2293
    %2296 = vmatpush.msra.mxu0 0.0
    %2297 = vmatpush.msra.mxu0 0.0
    %2298 = vmatpush.msra.mxu0 0.0
    %2299 = vmatpush.msra.mxu0 0.0
    %2300 = vmatpush.msra.mxu0 0.0
    %2301 = vmatpush.msra.mxu0 0.0
    %2302 = vmatpush.msra.mxu0 0.0
    %2303 = vmatpush.msra.mxu0 0.0
    %2304 = vmatpush.msra.mxu0 0.0
    %2305 = vmatpush.msra.mxu0 0.0
    %2306 = vmatpush.msra.mxu0 0.0
    %2307 = vmatpush.msra.mxu0 0.0
    %2308 = vmatpush.msra.mxu0 %v171
    %2309 = vmatpush.msra.mxu0 %v170
    %2310 = vmatpush.msra.mxu0 %v169
    %2311 = vmatpush.msra.mxu0 %v168
    %2312 = vmatmul.f32.gmra.mxu0 %v2195
    %v2313 = vpop.f32.mrf.mxu0
    %v2314 = vadd.f32 0.0, %v2313
    %2315 = vdwg.mxu0
    %2317 = vrot.lane.b32.xlu0 %v2295, 32
    %v2318 = vpop.permute.xlu0 %2317
    %v2319 = vsel %vm249, %v2318, 0
    %2321 = vmatpush.msra.mxu0 0.0
    %2322 = vmatpush.msra.mxu0 0.0
    %2323 = vmatpush.msra.mxu0 0.0
    %2324 = vmatpush.msra.mxu0 0.0
    %2325 = vmatpush.msra.mxu0 0.0
    %2326 = vmatpush.msra.mxu0 0.0
    %2327 = vmatpush.msra.mxu0 0.0
    %2328 = vmatpush.msra.mxu0 0.0
    %2329 = vmatpush.msra.mxu0 0.0
    %2330 = vmatpush.msra.mxu0 0.0
    %2331 = vmatpush.msra.mxu0 0.0
    %2332 = vmatpush.msra.mxu0 0.0
    %2333 = vmatpush.msra.mxu0 %v167
    %2334 = vmatpush.msra.mxu0 %v166
    %2335 = vmatpush.msra.mxu0 %v165
    %2336 = vmatpush.msra.mxu0 %v164
    %2337 = vmatmul.f32.gmra.mxu0 %v2319
    %v2338 = vpop.f32.mrf.mxu0
    %v2339 = vadd.f32 %v2314, %v2338
    %2340 = vdwg.mxu0
    %v2341 = vadd.f32 %v2339, %v181
    %v2342 = vxor.u32 %v2341, 2147483648
    %v2343 = vmul.f32 %v2342, 1.442695
    %v2344 = vpow.pop %v2343
    %v2345 = vadd.f32 %v2344, 1.0
    %v2346 = vrcp.pop %v2345
    %v2347 = vmul.f32 %v2345, %v2346
    %v2348 = vsub.f32 1.0, %v2347
    %v2349 = vmul.f32 %v2346, %v2348
    %v2350 = vadd.f32 %v2346, %v2349
    %vm2351 = vweird.f32 %v2345
    %vm2352 = vweird.f32 %v2346
    %vm2353 = vmor %vm2351, %vm2352
    %v2354 = vsel %vm2353, %v2346, %v2350
    %v2355 = vand.u32 2147483647, %v2345
    %vm2356 = vcmp.eq.f32.partialorder %v2355, 8.507059e+37
    %v2357 = vand.u32 %v2345, 2147483648
    %v2358 = vor.u32 1.1754944e-38, %v2357
    %v2359 = vsel %vm2356, %v2358, %v2354
    %v2360 = vmul.f32 1.0, %v2359
    %v2361 = vmul.f32 %v2360, 2.0
    %v2362 = vsub.f32 %v2361, 1.0
    %v2363 = vmul.f32 %v2360, %v2185
    %2365 = vrot.lane.b32.xlu0 %v2362, 64
    %v2366 = vpop.permute.xlu0 %2365
    %v2368 = vmul.f32 %v2360, %v2366
    %2370 = vrot.lane.b32.xlu0 %v2368, 32
    %v2371 = vpop.permute.xlu0 %2370
    %v2373 = vadd.f32 %v2363, %v2371
    %v2374 = vtanh.pop %v2373
    %2376 = vrot.lane.b32.xlu0 %v2374, 64
    %v2377 = vpop.permute.xlu0 %2376
    %v2379 = vmul.f32 %v2360, %v2377
    %2381 = vrot.lane.b32.xlu0 %v2379, 32
    %v2382 = vpop.permute.xlu0 %2381
    %v2383 = vsel %vm249, %v2382, 0
    %2385 = vmatpush.msra.mxu0 0.0
    %2386 = vmatpush.msra.mxu0 0.0
    %2387 = vmatpush.msra.mxu0 0.0
    %2388 = vmatpush.msra.mxu0 0.0
    %2389 = vmatpush.msra.mxu0 0.0
    %2390 = vmatpush.msra.mxu0 0.0
    %2391 = vmatpush.msra.mxu0 0.0
    %2392 = vmatpush.msra.mxu0 0.0
    %2393 = vmatpush.msra.mxu0 0.0
    %2394 = vmatpush.msra.mxu0 0.0
    %2395 = vmatpush.msra.mxu0 0.0
    %2396 = vmatpush.msra.mxu0 0.0
    %2397 = vmatpush.msra.mxu0 %v175
    %2398 = vmatpush.msra.mxu0 %v174
    %2399 = vmatpush.msra.mxu0 %v173
    %2400 = vmatpush.msra.mxu0 %v172
    %2401 = vmatmul.f32.gmra.mxu0 %v2383
    %v2402 = vpop.f32.mrf.mxu0
    %v2403 = vadd.f32 %v184, %v2402
    %2404 = vdwg.mxu0
    %2405 = vmatpush.msra.mxu0 0.0
    %2406 = vmatpush.msra.mxu0 0.0
    %2407 = vmatpush.msra.mxu0 0.0
    %2408 = vmatpush.msra.mxu0 0.0
    %2409 = vmatpush.msra.mxu0 0.0
    %2410 = vmatpush.msra.mxu0 0.0
    %2411 = vmatpush.msra.mxu0 0.0
    %2412 = vmatpush.msra.mxu0 0.0
    %2413 = vmatpush.msra.mxu0 0.0
    %2414 = vmatpush.msra.mxu0 0.0
    %2415 = vmatpush.msra.mxu0 0.0
    %2416 = vmatpush.msra.mxu0 0.0
    %2417 = vmatpush.msra.mxu0 %v163
    %2418 = vmatpush.msra.mxu0 %v162
    %2419 = vmatpush.msra.mxu0 %v161
    %2420 = vmatpush.msra.mxu0 %v160
    %2421 = vmatmul.f32.gmra.mxu0 %v2319
    %v2422 = vpop.f32.mrf.mxu0
    %v2423 = vadd.f32 0.0, %v2422
    %2424 = vdwg.mxu0
    %2425 = vmatpush.msra.mxu0 0.0
    %2426 = vmatpush.msra.mxu0 0.0
    %2427 = vmatpush.msra.mxu0 0.0
    %2428 = vmatpush.msra.mxu0 0.0
    %2429 = vmatpush.msra.mxu0 0.0
    %2430 = vmatpush.msra.mxu0 0.0
    %2431 = vmatpush.msra.mxu0 0.0
    %2432 = vmatpush.msra.mxu0 0.0
    %2433 = vmatpush.msra.mxu0 0.0
    %2434 = vmatpush.msra.mxu0 0.0
    %2435 = vmatpush.msra.mxu0 0.0
    %2436 = vmatpush.msra.mxu0 0.0
    %2437 = vmatpush.msra.mxu0 %v159
    %2438 = vmatpush.msra.mxu0 %v158
    %2439 = vmatpush.msra.mxu0 %v157
    %2440 = vmatpush.msra.mxu0 %v156
    %2441 = vmatmul.f32.gmra.mxu0 %v2383
    %v2442 = vpop.f32.mrf.mxu0
    %v2443 = vadd.f32 %v2423, %v2442
    %2444 = vdwg.mxu0
    %v2445 = vadd.f32 %v2443, %v179
    %v2446 = vxor.u32 %v2445, 2147483648
    %v2447 = vmul.f32 %v2446, 1.442695
    %v2448 = vpow.pop %v2447
    %v2449 = vadd.f32 %v2448, 1.0
    %v2450 = vrcp.pop %v2449
    %v2451 = vmul.f32 %v2449, %v2450
    %v2452 = vsub.f32 1.0, %v2451
    %v2453 = vmul.f32 %v2450, %v2452
    %v2454 = vadd.f32 %v2450, %v2453
    %vm2455 = vweird.f32 %v2449
    %vm2456 = vweird.f32 %v2450
    %vm2457 = vmor %vm2455, %vm2456
    %v2458 = vsel %vm2457, %v2450, %v2454
    %v2459 = vand.u32 2147483647, %v2449
    %vm2460 = vcmp.eq.f32.partialorder %v2459, 8.507059e+37
    %v2461 = vand.u32 %v2449, 2147483648
    %v2462 = vor.u32 1.1754944e-38, %v2461
    %v2463 = vsel %vm2460, %v2462, %v2458
    %v2464 = vmul.f32 1.0, %v2463
    %v2465 = vmul.f32 %v2464, 2.0
    %v2466 = vsub.f32 %v2465, 1.0
    %v2467 = vmul.f32 %v2464, %v2289
    %2469 = vrot.lane.b32.xlu0 %v2466, 64
    %v2470 = vpop.permute.xlu0 %2469
    %v2472 = vmul.f32 %v2464, %v2470
    %2474 = vrot.lane.b32.xlu0 %v2472, 32
    %v2475 = vpop.permute.xlu0 %2474
    %v2477 = vadd.f32 %v2467, %v2475
    %v2478 = vtanh.pop %v2477
    %2480 = vrot.lane.b32.xlu0 %v2478, 64
    %v2481 = vpop.permute.xlu0 %2480
    %v2483 = vmul.f32 %v2464, %v2481
    %2484 = vmatpush.msra.mxu0 0.0
    %2485 = vmatpush.msra.mxu0 0.0
    %2486 = vmatpush.msra.mxu0 0.0
    %2487 = vmatpush.msra.mxu0 0.0
    %2488 = vmatpush.msra.mxu0 0.0
    %2489 = vmatpush.msra.mxu0 0.0
    %2490 = vmatpush.msra.mxu0 0.0
    %2491 = vmatpush.msra.mxu0 0.0
    %2492 = vmatpush.msra.mxu0 0.0
    %2493 = vmatpush.msra.mxu0 0.0
    %2494 = vmatpush.msra.mxu0 0.0
    %2495 = vmatpush.msra.mxu0 0.0
    %2496 = vmatpush.msra.mxu0 %v171
    %2497 = vmatpush.msra.mxu0 %v170
    %2498 = vmatpush.msra.mxu0 %v169
    %2499 = vmatpush.msra.mxu0 %v168
    %2500 = vmatmul.f32.gmra.mxu0 %v2383
    %v2501 = vpop.f32.mrf.mxu0
    %v2502 = vadd.f32 0.0, %v2501
    %2503 = vdwg.mxu0
    %2505 = vrot.lane.b32.xlu0 %v2483, 32
    %v2506 = vpop.permute.xlu0 %2505
    %v2507 = vsel %vm249, %v2506, 0
    %2509 = vmatpush.msra.mxu0 0.0
    %2510 = vmatpush.msra.mxu0 0.0
    %2511 = vmatpush.msra.mxu0 0.0
    %2512 = vmatpush.msra.mxu0 0.0
    %2513 = vmatpush.msra.mxu0 0.0
    %2514 = vmatpush.msra.mxu0 0.0
    %2515 = vmatpush.msra.mxu0 0.0
    %2516 = vmatpush.msra.mxu0 0.0
    %2517 = vmatpush.msra.mxu0 0.0
    %2518 = vmatpush.msra.mxu0 0.0
    %2519 = vmatpush.msra.mxu0 0.0
    %2520 = vmatpush.msra.mxu0 0.0
    %2521 = vmatpush.msra.mxu0 %v167
    %2522 = vmatpush.msra.mxu0 %v166
    %2523 = vmatpush.msra.mxu0 %v165
    %2524 = vmatpush.msra.mxu0 %v164
    %2525 = vmatmul.f32.gmra.mxu0 %v2507
    %v2526 = vpop.f32.mrf.mxu0
    %v2527 = vadd.f32 %v2502, %v2526
    %2528 = vdwg.mxu0
    %v2529 = vadd.f32 %v2527, %v181
    %v2530 = vxor.u32 %v2529, 2147483648
    %v2531 = vmul.f32 %v2530, 1.442695
    %v2532 = vpow.pop %v2531
    %v2533 = vadd.f32 %v2532, 1.0
    %v2534 = vrcp.pop %v2533
    %v2535 = vmul.f32 %v2533, %v2534
    %v2536 = vsub.f32 1.0, %v2535
    %v2537 = vmul.f32 %v2534, %v2536
    %v2538 = vadd.f32 %v2534, %v2537
    %vm2539 = vweird.f32 %v2533
    %vm2540 = vweird.f32 %v2534
    %vm2541 = vmor %vm2539, %vm2540
    %v2542 = vsel %vm2541, %v2534, %v2538
    %v2543 = vand.u32 2147483647, %v2533
    %vm2544 = vcmp.eq.f32.partialorder %v2543, 8.507059e+37
    %v2545 = vand.u32 %v2533, 2147483648
    %v2546 = vor.u32 1.1754944e-38, %v2545
    %v2547 = vsel %vm2544, %v2546, %v2542
    %v2548 = vmul.f32 1.0, %v2547
    %v2549 = vmul.f32 %v2548, 2.0
    %v2550 = vsub.f32 %v2549, 1.0
    %v2551 = vmul.f32 %v2548, %v2373
    %2553 = vrot.lane.b32.xlu0 %v2550, 64
    %v2554 = vpop.permute.xlu0 %2553
    %v2556 = vmul.f32 %v2548, %v2554
    %2558 = vrot.lane.b32.xlu0 %v2556, 32
    %v2559 = vpop.permute.xlu0 %2558
    %v2561 = vadd.f32 %v2551, %v2559
    %v2562 = vtanh.pop %v2561
    %2564 = vrot.lane.b32.xlu0 %v2562, 64
    %v2565 = vpop.permute.xlu0 %2564
    %v2567 = vmul.f32 %v2548, %v2565
    %2569 = vrot.lane.b32.xlu0 %v2567, 32
    %v2570 = vpop.permute.xlu0 %2569
    %v2571 = vsel %vm249, %v2570, 0
    %2573 = vmatpush.msra.mxu0 0.0
    %2574 = vmatpush.msra.mxu0 0.0
    %2575 = vmatpush.msra.mxu0 0.0
    %2576 = vmatpush.msra.mxu0 0.0
    %2577 = vmatpush.msra.mxu0 0.0
    %2578 = vmatpush.msra.mxu0 0.0
    %2579 = vmatpush.msra.mxu0 0.0
    %2580 = vmatpush.msra.mxu0 0.0
    %2581 = vmatpush.msra.mxu0 0.0
    %2582 = vmatpush.msra.mxu0 0.0
    %2583 = vmatpush.msra.mxu0 0.0
    %2584 = vmatpush.msra.mxu0 0.0
    %2585 = vmatpush.msra.mxu0 %v175
    %2586 = vmatpush.msra.mxu0 %v174
    %2587 = vmatpush.msra.mxu0 %v173
    %2588 = vmatpush.msra.mxu0 %v172
    %2589 = vmatmul.f32.gmra.mxu0 %v2571
    %v2590 = vpop.f32.mrf.mxu0
    %v2591 = vadd.f32 %v184, %v2590
    %2592 = vdwg.mxu0
    %2593 = vmatpush.msra.mxu0 0.0
    %2594 = vmatpush.msra.mxu0 0.0
    %2595 = vmatpush.msra.mxu0 0.0
    %2596 = vmatpush.msra.mxu0 0.0
    %2597 = vmatpush.msra.mxu0 0.0
    %2598 = vmatpush.msra.mxu0 0.0
    %2599 = vmatpush.msra.mxu0 0.0
    %2600 = vmatpush.msra.mxu0 0.0
    %2601 = vmatpush.msra.mxu0 0.0
    %2602 = vmatpush.msra.mxu0 0.0
    %2603 = vmatpush.msra.mxu0 0.0
    %2604 = vmatpush.msra.mxu0 0.0
    %2605 = vmatpush.msra.mxu0 %v163
    %2606 = vmatpush.msra.mxu0 %v162
    %2607 = vmatpush.msra.mxu0 %v161
    %2608 = vmatpush.msra.mxu0 %v160
    %2609 = vmatmul.f32.gmra.mxu0 %v2507
    %v2610 = vpop.f32.mrf.mxu0
    %v2611 = vadd.f32 0.0, %v2610
    %2612 = vdwg.mxu0
    %2613 = vmatpush.msra.mxu0 0.0
    %2614 = vmatpush.msra.mxu0 0.0
    %2615 = vmatpush.msra.mxu0 0.0
    %2616 = vmatpush.msra.mxu0 0.0
    %2617 = vmatpush.msra.mxu0 0.0
    %2618 = vmatpush.msra.mxu0 0.0
    %2619 = vmatpush.msra.mxu0 0.0
    %2620 = vmatpush.msra.mxu0 0.0
    %2621 = vmatpush.msra.mxu0 0.0
    %2622 = vmatpush.msra.mxu0 0.0
    %2623 = vmatpush.msra.mxu0 0.0
    %2624 = vmatpush.msra.mxu0 0.0
    %2625 = vmatpush.msra.mxu0 %v159
    %2626 = vmatpush.msra.mxu0 %v158
    %2627 = vmatpush.msra.mxu0 %v157
    %2628 = vmatpush.msra.mxu0 %v156
    %2629 = vmatmul.f32.gmra.mxu0 %v2571
    %v2630 = vpop.f32.mrf.mxu0
    %v2631 = vadd.f32 %v2611, %v2630
    %2632 = vdwg.mxu0
    %v2633 = vadd.f32 %v2631, %v179
    %v2634 = vxor.u32 %v2633, 2147483648
    %v2635 = vmul.f32 %v2634, 1.442695
    %v2636 = vpow.pop %v2635
    %v2637 = vadd.f32 %v2636, 1.0
    %v2638 = vrcp.pop %v2637
    %v2639 = vmul.f32 %v2637, %v2638
    %v2640 = vsub.f32 1.0, %v2639
    %v2641 = vmul.f32 %v2638, %v2640
    %v2642 = vadd.f32 %v2638, %v2641
    %vm2643 = vweird.f32 %v2637
    %vm2644 = vweird.f32 %v2638
    %vm2645 = vmor %vm2643, %vm2644
    %v2646 = vsel %vm2645, %v2638, %v2642
    %v2647 = vand.u32 2147483647, %v2637
    %vm2648 = vcmp.eq.f32.partialorder %v2647, 8.507059e+37
    %v2649 = vand.u32 %v2637, 2147483648
    %v2650 = vor.u32 1.1754944e-38, %v2649
    %v2651 = vsel %vm2648, %v2650, %v2646
    %v2652 = vmul.f32 1.0, %v2651
    %v2653 = vmul.f32 %v2652, 2.0
    %v2654 = vsub.f32 %v2653, 1.0
    %v2655 = vmul.f32 %v2652, %v2477
    %2657 = vrot.lane.b32.xlu0 %v2654, 64
    %v2658 = vpop.permute.xlu0 %2657
    %v2660 = vmul.f32 %v2652, %v2658
    %2662 = vrot.lane.b32.xlu0 %v2660, 32
    %v2663 = vpop.permute.xlu0 %2662
    %v2665 = vadd.f32 %v2655, %v2663
    %v2666 = vtanh.pop %v2665
    %2668 = vrot.lane.b32.xlu0 %v2666, 64
    %v2669 = vpop.permute.xlu0 %2668
    %v2671 = vmul.f32 %v2652, %v2669
    %2672 = vmatpush.msra.mxu0 0.0
    %2673 = vmatpush.msra.mxu0 0.0
    %2674 = vmatpush.msra.mxu0 0.0
    %2675 = vmatpush.msra.mxu0 0.0
    %2676 = vmatpush.msra.mxu0 0.0
    %2677 = vmatpush.msra.mxu0 0.0
    %2678 = vmatpush.msra.mxu0 0.0
    %2679 = vmatpush.msra.mxu0 0.0
    %2680 = vmatpush.msra.mxu0 0.0
    %2681 = vmatpush.msra.mxu0 0.0
    %2682 = vmatpush.msra.mxu0 0.0
    %2683 = vmatpush.msra.mxu0 0.0
    %2684 = vmatpush.msra.mxu0 %v171
    %2685 = vmatpush.msra.mxu0 %v170
    %2686 = vmatpush.msra.mxu0 %v169
    %2687 = vmatpush.msra.mxu0 %v168
    %2688 = vmatmul.f32.gmra.mxu0 %v2571
    %v2689 = vpop.f32.mrf.mxu0
    %v2690 = vadd.f32 0.0, %v2689
    %2691 = vdwg.mxu0
    %2693 = vrot.lane.b32.xlu0 %v2671, 32
    %v2694 = vpop.permute.xlu0 %2693
    %v2695 = vsel %vm249, %v2694, 0
    %2697 = vmatpush.msra.mxu0 0.0
    %2698 = vmatpush.msra.mxu0 0.0
    %2699 = vmatpush.msra.mxu0 0.0
    %2700 = vmatpush.msra.mxu0 0.0
    %2701 = vmatpush.msra.mxu0 0.0
    %2702 = vmatpush.msra.mxu0 0.0
    %2703 = vmatpush.msra.mxu0 0.0
    %2704 = vmatpush.msra.mxu0 0.0
    %2705 = vmatpush.msra.mxu0 0.0
    %2706 = vmatpush.msra.mxu0 0.0
    %2707 = vmatpush.msra.mxu0 0.0
    %2708 = vmatpush.msra.mxu0 0.0
    %2709 = vmatpush.msra.mxu0 %v167
    %2710 = vmatpush.msra.mxu0 %v166
    %2711 = vmatpush.msra.mxu0 %v165
    %2712 = vmatpush.msra.mxu0 %v164
    %2713 = vmatmul.f32.gmra.mxu0 %v2695
    %v2714 = vpop.f32.mrf.mxu0
    %v2715 = vadd.f32 %v2690, %v2714
    %2716 = vdwg.mxu0
    %v2717 = vadd.f32 %v2715, %v181
    %v2718 = vxor.u32 %v2717, 2147483648
    %v2719 = vmul.f32 %v2718, 1.442695
    %v2720 = vpow.pop %v2719
    %v2721 = vadd.f32 %v2720, 1.0
    %v2722 = vrcp.pop %v2721
    %v2723 = vmul.f32 %v2721, %v2722
    %v2724 = vsub.f32 1.0, %v2723
    %v2725 = vmul.f32 %v2722, %v2724
    %v2726 = vadd.f32 %v2722, %v2725
    %vm2727 = vweird.f32 %v2721
    %vm2728 = vweird.f32 %v2722
    %vm2729 = vmor %vm2727, %vm2728
    %v2730 = vsel %vm2729, %v2722, %v2726
    %v2731 = vand.u32 2147483647, %v2721
    %vm2732 = vcmp.eq.f32.partialorder %v2731, 8.507059e+37
    %v2733 = vand.u32 %v2721, 2147483648
    %v2734 = vor.u32 1.1754944e-38, %v2733
    %v2735 = vsel %vm2732, %v2734, %v2730
    %v2736 = vmul.f32 1.0, %v2735
    %v2737 = vmul.f32 %v2736, 2.0
    %v2738 = vsub.f32 %v2737, 1.0
    %v2739 = vmul.f32 %v2736, %v2561
    %2741 = vrot.lane.b32.xlu0 %v2738, 64
    %v2742 = vpop.permute.xlu0 %2741
    %v2744 = vmul.f32 %v2736, %v2742
    %2746 = vrot.lane.b32.xlu0 %v2744, 32
    %v2747 = vpop.permute.xlu0 %2746
    %v2749 = vadd.f32 %v2739, %v2747
    %v2750 = vtanh.pop %v2749
    %2752 = vrot.lane.b32.xlu0 %v2750, 64
    %v2753 = vpop.permute.xlu0 %2752
    %v2755 = vmul.f32 %v2736, %v2753
    %2757 = vrot.lane.b32.xlu0 %v2755, 32
    %v2758 = vpop.permute.xlu0 %2757
    %v2759 = vsel %vm249, %v2758, 0
    %2761 = vmatpush.msra.mxu0 0.0
    %2762 = vmatpush.msra.mxu0 0.0
    %2763 = vmatpush.msra.mxu0 0.0
    %2764 = vmatpush.msra.mxu0 0.0
    %2765 = vmatpush.msra.mxu0 0.0
    %2766 = vmatpush.msra.mxu0 0.0
    %2767 = vmatpush.msra.mxu0 0.0
    %2768 = vmatpush.msra.mxu0 0.0
    %2769 = vmatpush.msra.mxu0 0.0
    %2770 = vmatpush.msra.mxu0 0.0
    %2771 = vmatpush.msra.mxu0 0.0
    %2772 = vmatpush.msra.mxu0 0.0
    %2773 = vmatpush.msra.mxu0 %v175
    %2774 = vmatpush.msra.mxu0 %v174
    %2775 = vmatpush.msra.mxu0 %v173
    %2776 = vmatpush.msra.mxu0 %v172
    %2777 = vmatmul.f32.gmra.mxu0 %v2759
    %v2778 = vpop.f32.mrf.mxu0
    %v2779 = vadd.f32 %v184, %v2778
    %2780 = vdwg.mxu0
    %2781 = vmatpush.msra.mxu0 0.0
    %2782 = vmatpush.msra.mxu0 0.0
    %2783 = vmatpush.msra.mxu0 0.0
    %2784 = vmatpush.msra.mxu0 0.0
    %2785 = vmatpush.msra.mxu0 0.0
    %2786 = vmatpush.msra.mxu0 0.0
    %2787 = vmatpush.msra.mxu0 0.0
    %2788 = vmatpush.msra.mxu0 0.0
    %2789 = vmatpush.msra.mxu0 0.0
    %2790 = vmatpush.msra.mxu0 0.0
    %2791 = vmatpush.msra.mxu0 0.0
    %2792 = vmatpush.msra.mxu0 0.0
    %2793 = vmatpush.msra.mxu0 %v163
    %2794 = vmatpush.msra.mxu0 %v162
    %2795 = vmatpush.msra.mxu0 %v161
    %2796 = vmatpush.msra.mxu0 %v160
    %2797 = vmatmul.f32.gmra.mxu0 %v2695
    %v2798 = vpop.f32.mrf.mxu0
    %v2799 = vadd.f32 0.0, %v2798
    %2800 = vdwg.mxu0
    %2801 = vmatpush.msra.mxu0 0.0
    %2802 = vmatpush.msra.mxu0 0.0
    %2803 = vmatpush.msra.mxu0 0.0
    %2804 = vmatpush.msra.mxu0 0.0
    %2805 = vmatpush.msra.mxu0 0.0
    %2806 = vmatpush.msra.mxu0 0.0
    %2807 = vmatpush.msra.mxu0 0.0
    %2808 = vmatpush.msra.mxu0 0.0
    %2809 = vmatpush.msra.mxu0 0.0
    %2810 = vmatpush.msra.mxu0 0.0
    %2811 = vmatpush.msra.mxu0 0.0
    %2812 = vmatpush.msra.mxu0 0.0
    %2813 = vmatpush.msra.mxu0 %v159
    %2814 = vmatpush.msra.mxu0 %v158
    %2815 = vmatpush.msra.mxu0 %v157
    %2816 = vmatpush.msra.mxu0 %v156
    %2817 = vmatmul.f32.gmra.mxu0 %v2759
    %v2818 = vpop.f32.mrf.mxu0
    %v2819 = vadd.f32 %v2799, %v2818
    %2820 = vdwg.mxu0
    %v2821 = vadd.f32 %v2819, %v179
    %v2822 = vxor.u32 %v2821, 2147483648
    %v2823 = vmul.f32 %v2822, 1.442695
    %v2824 = vpow.pop %v2823
    %v2825 = vadd.f32 %v2824, 1.0
    %v2826 = vrcp.pop %v2825
    %v2827 = vmul.f32 %v2825, %v2826
    %v2828 = vsub.f32 1.0, %v2827
    %v2829 = vmul.f32 %v2826, %v2828
    %v2830 = vadd.f32 %v2826, %v2829
    %vm2831 = vweird.f32 %v2825
    %vm2832 = vweird.f32 %v2826
    %vm2833 = vmor %vm2831, %vm2832
    %v2834 = vsel %vm2833, %v2826, %v2830
    %v2835 = vand.u32 2147483647, %v2825
    %vm2836 = vcmp.eq.f32.partialorder %v2835, 8.507059e+37
    %v2837 = vand.u32 %v2825, 2147483648
    %v2838 = vor.u32 1.1754944e-38, %v2837
    %v2839 = vsel %vm2836, %v2838, %v2834
    %v2840 = vmul.f32 1.0, %v2839
    %v2841 = vmul.f32 %v2840, 2.0
    %v2842 = vsub.f32 %v2841, 1.0
    %v2843 = vmul.f32 %v2840, %v2665
    %2845 = vrot.lane.b32.xlu0 %v2842, 64
    %v2846 = vpop.permute.xlu0 %2845
    %v2848 = vmul.f32 %v2840, %v2846
    %2850 = vrot.lane.b32.xlu0 %v2848, 32
    %v2851 = vpop.permute.xlu0 %2850
    %v2853 = vadd.f32 %v2843, %v2851
    %v2854 = vtanh.pop %v2853
    %2856 = vrot.lane.b32.xlu0 %v2854, 64
    %v2857 = vpop.permute.xlu0 %2856
    %v2859 = vmul.f32 %v2840, %v2857
    %2860 = vmatpush.msra.mxu0 0.0
    %2861 = vmatpush.msra.mxu0 0.0
    %2862 = vmatpush.msra.mxu0 0.0
    %2863 = vmatpush.msra.mxu0 0.0
    %2864 = vmatpush.msra.mxu0 0.0
    %2865 = vmatpush.msra.mxu0 0.0
    %2866 = vmatpush.msra.mxu0 0.0
    %2867 = vmatpush.msra.mxu0 0.0
    %2868 = vmatpush.msra.mxu0 0.0
    %2869 = vmatpush.msra.mxu0 0.0
    %2870 = vmatpush.msra.mxu0 0.0
    %2871 = vmatpush.msra.mxu0 0.0
    %2872 = vmatpush.msra.mxu0 %v171
    %2873 = vmatpush.msra.mxu0 %v170
    %2874 = vmatpush.msra.mxu0 %v169
    %2875 = vmatpush.msra.mxu0 %v168
    %2876 = vmatmul.f32.gmra.mxu0 %v2759
    %v2877 = vpop.f32.mrf.mxu0
    %v2878 = vadd.f32 0.0, %v2877
    %2879 = vdwg.mxu0
    %2881 = vrot.lane.b32.xlu0 %v2859, 32
    %v2882 = vpop.permute.xlu0 %2881
    %v2883 = vsel %vm249, %v2882, 0
    %2885 = vmatpush.msra.mxu0 0.0
    %2886 = vmatpush.msra.mxu0 0.0
    %2887 = vmatpush.msra.mxu0 0.0
    %2888 = vmatpush.msra.mxu0 0.0
    %2889 = vmatpush.msra.mxu0 0.0
    %2890 = vmatpush.msra.mxu0 0.0
    %2891 = vmatpush.msra.mxu0 0.0
    %2892 = vmatpush.msra.mxu0 0.0
    %2893 = vmatpush.msra.mxu0 0.0
    %2894 = vmatpush.msra.mxu0 0.0
    %2895 = vmatpush.msra.mxu0 0.0
    %2896 = vmatpush.msra.mxu0 0.0
    %2897 = vmatpush.msra.mxu0 %v167
    %2898 = vmatpush.msra.mxu0 %v166
    %2899 = vmatpush.msra.mxu0 %v165
    %2900 = vmatpush.msra.mxu0 %v164
    %2901 = vmatmul.f32.gmra.mxu0 %v2883
    %v2902 = vpop.f32.mrf.mxu0
    %v2903 = vadd.f32 %v2878, %v2902
    %2904 = vdwg.mxu0
    %v2905 = vadd.f32 %v2903, %v181
    %v2906 = vxor.u32 %v2905, 2147483648
    %v2907 = vmul.f32 %v2906, 1.442695
    %v2908 = vpow.pop %v2907
    %v2909 = vadd.f32 %v2908, 1.0
    %v2910 = vrcp.pop %v2909
    %v2911 = vmul.f32 %v2909, %v2910
    %v2912 = vsub.f32 1.0, %v2911
    %v2913 = vmul.f32 %v2910, %v2912
    %v2914 = vadd.f32 %v2910, %v2913
    %vm2915 = vweird.f32 %v2909
    %vm2916 = vweird.f32 %v2910
    %vm2917 = vmor %vm2915, %vm2916
    %v2918 = vsel %vm2917, %v2910, %v2914
    %v2919 = vand.u32 2147483647, %v2909
    %vm2920 = vcmp.eq.f32.partialorder %v2919, 8.507059e+37
    %v2921 = vand.u32 %v2909, 2147483648
    %v2922 = vor.u32 1.1754944e-38, %v2921
    %v2923 = vsel %vm2920, %v2922, %v2918
    %v2924 = vmul.f32 1.0, %v2923
    %v2925 = vmul.f32 %v2924, 2.0
    %v2926 = vsub.f32 %v2925, 1.0
    %v2927 = vmul.f32 %v2924, %v2749
    %2929 = vrot.lane.b32.xlu0 %v2926, 64
    %v2930 = vpop.permute.xlu0 %2929
    %v2932 = vmul.f32 %v2924, %v2930
    %2934 = vrot.lane.b32.xlu0 %v2932, 32
    %v2935 = vpop.permute.xlu0 %2934
    %v2937 = vadd.f32 %v2927, %v2935
    %v2938 = vtanh.pop %v2937
    %2940 = vrot.lane.b32.xlu0 %v2938, 64
    %v2941 = vpop.permute.xlu0 %2940
    %v2943 = vmul.f32 %v2924, %v2941
    %2945 = vrot.lane.b32.xlu0 %v2943, 32
    %v2946 = vpop.permute.xlu0 %2945
    %v2947 = vsel %vm249, %v2946, 0
    %2949 = vmatpush.msra.mxu0 0.0
    %2950 = vmatpush.msra.mxu0 0.0
    %2951 = vmatpush.msra.mxu0 0.0
    %2952 = vmatpush.msra.mxu0 0.0
    %2953 = vmatpush.msra.mxu0 0.0
    %2954 = vmatpush.msra.mxu0 0.0
    %2955 = vmatpush.msra.mxu0 0.0
    %2956 = vmatpush.msra.mxu0 0.0
    %2957 = vmatpush.msra.mxu0 0.0
    %2958 = vmatpush.msra.mxu0 0.0
    %2959 = vmatpush.msra.mxu0 0.0
    %2960 = vmatpush.msra.mxu0 0.0
    %2961 = vmatpush.msra.mxu0 %v175
    %2962 = vmatpush.msra.mxu0 %v174
    %2963 = vmatpush.msra.mxu0 %v173
    %2964 = vmatpush.msra.mxu0 %v172
    %2965 = vmatmul.f32.gmra.mxu0 %v2947
    %v2966 = vpop.f32.mrf.mxu0
    %v2967 = vadd.f32 %v184, %v2966
    %2968 = vdwg.mxu0
    %2970 = vrot.lane.b32.xlu0 %v1839, 4
    %v2971 = vpop.permute.xlu0 %2970
    %2974 = vrot.lane.b32.xlu0 %v2027, 8
    %v2975 = vpop.permute.xlu0 %2974
    %2978 = vrot.lane.b32.xlu0 %v2215, 12
    %v2979 = vpop.permute.xlu0 %2978
    %2982 = vrot.lane.b32.xlu0 %v2403, 16
    %v2983 = vpop.permute.xlu0 %2982
    %2986 = vrot.lane.b32.xlu0 %v2591, 20
    %v2987 = vpop.permute.xlu0 %2986
    %2990 = vrot.lane.b32.xlu0 %v2779, 24
    %v2991 = vpop.permute.xlu0 %2990
    %2994 = vrot.lane.b32.xlu0 %v2967, 28
    %v2995 = vpop.permute.xlu0 %2994
    %v2997 = vsel %vm189, %v1651, %v2971
    %vm2998 = vcmask 64512
    %v2999 = vsel %vm2998, %v2997, %v2975
    %vm3000 = vcmask 97280
    %v3001 = vsel %vm3000, %v2999, %v2979
    %vm3002 = vcmask 130048
    %v3003 = vsel %vm3002, %v3001, %v2983
    %vm3004 = vcmask 162816
    %v3005 = vsel %vm3004, %v3003, %v2987
    %vm3006 = vcmask 195584
    %v3007 = vsel %vm3006, %v3005, %v2991
    %vm3008 = vcmask 228352
    %v3009 = vsel %vm3008, %v3007, %v2995
    %vm3010 = vcmask 254976
    %3011 = vst.msk [vmem:[#allocation13] sm:$0x3] %vm3010, %v3009
    // Predicated region
    $region82: #{tpu_custom_call.1} parent=1 // pred_check
      _
    $region83: #{tpu_custom_call.1} parent=1 // pred_check_branch
      %3013 = sbr.rel (0) target = $region85
    $region84: #{tpu_custom_call.1} parent=1 // pred_region
      %3015 = vsyncadd [#allocation4], 0
      %s3017 = sshll.u32 [#allocation13], 4
      %s3018 = int_to_ptr.vmem [resolvable:$true] %s3017
      %s3019 = sshll.u32 %s14, 4
      %s3020 = int_to_ptr.hbm [resolvable:$true] %s3019
      %3022 = dma.vmem_to_hbm [thread:$0]  %s3018, 32, %s3020, [#allocation4]
    $region85: #{tpu_custom_call.1} parent=1 // pred_fallthru
      _
    // Predicated region
    $region86: #{tpu_custom_call.1} parent=1 // pred_check
      _
    $region87: #{tpu_custom_call.1} parent=1 // pred_check_branch
      %3024 = sbr.rel (0) target = $region89
    $region88: #{tpu_custom_call.1} parent=1 // pred_region
      %3026 = dma.done [#allocation4], 32
    $region89: #{tpu_custom_call.1} parent=1 // pred_fallthru
      _
    %3027 = vsyncpa [#allocation3], 1
    %3028 = vsyncpa [#allocation6], 1
    %3029 = vsyncpa [#allocation9], 1
    %3030 = vsyncpa [#allocation12], 1
    %3031 = vsyncpa [#allocation4], 1

</llo_original>
